<compile_context>
chip_gen: v7x
topology: tpu7x:2x2x1
jax: 0.10.0
libtpu: 0.0.40
codegen_flags: <defaults>
</compile_context>

<pallas_src>
import numpy as np
import jax
import jax.numpy as jnp
from jax.experimental import pallas as pl
from jax.experimental.pallas import tpu as pltpu

K = 5          # temporal kernel width of conv1 / conv2 / conv3
LANES = 128    # every channel dimension is zero-padded to 128 lanes


def _round_up(n, m):
    return -(-n // m) * m


# ----------------------------- in-kernel helpers -----------------------------

def _elu(v):
    return jnp.where(v > 0, v, jnp.exp(v) - 1.0)


# --------------------------------- kernel ------------------------------------

def deepconvnet_kernel(x_ref, wc_ref, bc_ref, w2_ref, b2_ref, w3_ref, b3_ref,
                       wfc_ref, bfc_ref, out_ref,
                       z1_ref, y1_ref, z2_ref, y2_ref, z3_ref, fcf_ref):
    NB, T, _C = x_ref.shape
    L1 = T - (K - 1); P1 = L1 // 2
    L2 = P1 - (K - 1); P2 = L2 // 2
    L3 = P2 - (K - 1); P3 = L3 // 2

    bc = bc_ref[...]                                   # (1, 128)
    b2 = b2_ref[...]
    b3 = b3_ref[...]

    def pool_elu(z_ref, P):
        # MaxPool2d((1,2),(1,2)) as two stride-2 sublane reads + max, then ELU.
        # Exact: ELU is monotone, so elu(max(a,b)) == max(elu(a), elu(b)).
        ev = z_ref[pl.ds(0, P, stride=2), :]
        od = z_ref[pl.ds(1, P, stride=2), :]
        return _elu(jnp.maximum(ev, od))

    # Static loop over the NB samples of this grid step (fully unrolled); the per-step
    # pipeline overhead is amortized over all NB samples.
    for n in range(NB):
        # ---- block 1: composed conv1∘conv1_2 (+BN1 folded) as 5 shifted MXU
        #      matmul-accumulates straight from the raw (T, C) window (no im2col slab).
        z1 = bc
        for k in range(K):
            z1 = z1 + jnp.dot(x_ref[n, k:k + L1, :], wc_ref[k],
                              preferred_element_type=jnp.float32)
        z1_ref[...] = z1
        y1_ref[...] = pool_elu(z1_ref, P1)             # (P1, 128), padded lanes stay 0
        # TODO(synk): F.dropout(p=0.2) is stochastic (training=True default); applied as identity.

        # ---- block 2: conv2 (25->50, kernel (1,5)) + BN2 folded: 5 shifted-tap matmuls.
        z2 = b2
        for k in range(K):
            z2 = z2 + jnp.dot(y1_ref[k:k + L2, :], w2_ref[k],
                              preferred_element_type=jnp.float32)
        z2_ref[...] = z2
        y2_ref[...] = pool_elu(z2_ref, P2)             # (P2, 128)

        # ---- block 3: conv3 (50->100, kernel (1,5)) + BN3 folded.
        z3 = b3
        for k in range(K):
            z3 = z3 + jnp.dot(y2_ref[k:k + L3, :], w3_ref[k],
                              preferred_element_type=jnp.float32)
        z3_ref[...] = z3
        y3 = pool_elu(z3_ref, P3)                      # (P3, 128)

        # ---- fc flatten: lane-aligned, full-128-wide stores at lane offset t*128.
        for t in range(P3):
            fcf_ref[n:n + 1, t * LANES:(t + 1) * LANES] = y3[t:t + 1, :]

    # ---- fc1: ONE matmul over all NB samples (M = NB), lane-dense output store.
    out = jnp.dot(fcf_ref[...], wfc_ref[...],
                  preferred_element_type=jnp.float32) + bfc_ref[...]
    out_ref[:, 0, :] = out.astype(out_ref.dtype)


# ------------------------------- host wrapper ---------------------------------

def _pick_nb(B):
    # Batch several samples per grid step (amortize step overhead / fill MXU M) while
    # keeping >= 2 grid steps so both v7x TensorCores get work via "parallel" semantics.
    for nb in (8, 4, 2):
        if B % nb == 0 and B // nb >= 2:
            return nb
    return 1


def deepconvnet_forward(x_bct, kp, nb_class):
    B, C, T = x_bct.shape
    L1 = T - (K - 1); P1 = L1 // 2
    L2 = P1 - (K - 1); P2 = L2 // 2
    L3 = P2 - (K - 1); P3 = L3 // 2
    NB = _pick_nb(B)
    Cp = _round_up(C, 8)

    # Raw time-major input (NO host im2col -> 5x less HBM->VMEM traffic).  Channels are
    # padded to a multiple of 8 only, matching the zero-padded rows of kp["wc"].
    x_btc = jnp.transpose(x_bct, (0, 2, 1)).astype(jnp.float32)       # (B, T, C)
    if Cp != C:
        x_btc = jnp.pad(x_btc, ((0, 0), (0, 0), (0, Cp - C)))

    def full_spec(a):
        nd = a.ndim
        return pl.BlockSpec(a.shape, lambda i, _nd=nd: (0,) * _nd)

    weights = [kp["wc"], kp["bc"], kp["w2"], kp["b2"],
               kp["w3"], kp["b3"], kp["wfc"], kp["bfc"]]

    out_pad = pl.pallas_call(
        deepconvnet_kernel,
        out_shape=jax.ShapeDtypeStruct((B, 1, LANES), jnp.float32),
        grid_spec=pltpu.PrefetchScalarGridSpec(
            num_scalar_prefetch=0,
            grid=(B // NB,),
            in_specs=[pl.BlockSpec((NB, T, Cp), lambda i: (i, 0, 0))]
                     + [full_spec(w) for w in weights],
            out_specs=pl.BlockSpec((NB, 1, LANES), lambda i: (i, 0, 0)),
            scratch_shapes=[
                pltpu.VMEM((L1, LANES), jnp.float32),        # z1 (pre-pool block-1 out)
                pltpu.VMEM((P1, LANES), jnp.float32),        # y1 (pooled+ELU, conv2 taps)
                pltpu.VMEM((L2, LANES), jnp.float32),        # z2
                pltpu.VMEM((P2, LANES), jnp.float32),        # y2 (conv3 taps)
                pltpu.VMEM((L3, LANES), jnp.float32),        # z3
                pltpu.VMEM((NB, P3 * LANES), jnp.float32),   # lane-aligned FC rows
            ],
        ),
        compiler_params=pltpu.CompilerParams(
            dimension_semantics=("parallel",),
            vmem_limit_bytes=32 * 1024 * 1024),
    )(x_btc, *weights)
    return out_pad[:, 0, :nb_class]


# ------------------------- deterministic parameter setup ----------------------

def make_params(key, C, T, nb_class=4):
    L1 = T - 4; P1 = L1 // 2
    L2 = P1 - 4; P2 = L2 // 2
    L3 = P2 - 4; P3 = L3 // 2
    ks = jax.random.split(key, 22)

    def n(i, shape, s):
        return s * jax.random.normal(ks[i], shape, jnp.float32)

    def bn_stats(i0, c):
        # running var kept >= 0.5: BatchNorm2d(n, False) has eps=0.0, so var~0 would blow up.
        return (n(i0, (c,), 0.1),
                0.5 + jax.random.uniform(ks[i0 + 1], (c,), jnp.float32),
                1.0 + n(i0 + 2, (c,), 0.1),
                n(i0 + 3, (c,), 0.1))

    p = {}
    p["W1"] = n(0, (25, 5), 0.3)                 # conv1.weight (25,1,1,5) squeezed
    p["b1"] = n(1, (25,), 0.1)
    p["W12"] = n(2, (25, 25, C), 0.2)            # conv1_2.weight (25,25,C,1) squeezed
    p["b12"] = n(3, (25,), 0.1)
    p["bn1"] = bn_stats(4, 25)
    p["W2"] = n(8, (50, 25, 5), 0.15)            # conv2.weight (50,25,1,5) squeezed
    p["b2"] = n(9, (50,), 0.1)
    p["bn2"] = bn_stats(10, 50)
    p["W3"] = n(14, (100, 50, 5), 0.1)           # conv3.weight (100,50,1,5) squeezed
    p["b3"] = n(15, (100,), 0.1)
    p["bn3"] = bn_stats(16, 100)
    p["fcW"] = n(20, (nb_class, 100 * P3), 0.1)  # fc1 (nb_class, 100*P3)
    p["fcb"] = n(21, (nb_class,), 0.1)
    p["P3"] = P3
    return p


def to_kernel_params(p, C, nb_class):
    # Host-side weight composition + inference-BN folding (float64 for exactness),
    # with every channel dim zero-padded to 128 lanes (lane-dense kernel stores).
    # TODO(synk): training-mode BN (batch statistics) not reproduced; running stats folded.
    P3 = p["P3"]
    Cp = _round_up(C, 8)
    f64 = lambda a: np.asarray(a, np.float64)

    def fold_bn(w, b, bn):                        # w: (..., Cout), b: (Cout,)
        m, v, g, be = (f64(t) for t in bn)
        s = g / np.sqrt(v)                        # eps = float(False) = 0.0
        return w * s, (b - m) * s + be

    W1, b1 = f64(p["W1"]), f64(p["b1"])
    W12, b12 = f64(p["W12"]), f64(p["b12"])
    # composed conv1∘conv1_2:  wc[k, c, p] = sum_o W1[o,k] * W12[p,o,c]
    wc = np.einsum('ok,poc->kcp', W1, W12)                      # (5, C, 25)
    bc = b12 + np.einsum('poc,o->p', W12, b1)                   # (25,)
    wc, bc = fold_bn(wc, bc, p["bn1"])
    wc_pad = np.zeros((5, Cp, LANES)); wc_pad[:, :C, :25] = wc
    bc_pad = np.zeros((1, LANES));     bc_pad[0, :25] = bc

    w2 = np.transpose(f64(p["W2"]), (2, 1, 0))                  # (5, 25, 50) [k, i, o]
    w2, b2 = fold_bn(w2, f64(p["b2"]), p["bn2"])
    w2_pad = np.zeros((5, LANES, LANES)); w2_pad[:, :25, :50] = w2
    b2_pad = np.zeros((1, LANES));        b2_pad[0, :50] = b2

    w3 = np.transpose(f64(p["W3"]), (2, 1, 0))                  # (5, 50, 100)
    w3, b3 = fold_bn(w3, f64(p["b3"]), p["bn3"])
    w3_pad = np.zeros((5, LANES, LANES)); w3_pad[:, :50, :100] = w3
    b3_pad = np.zeros((1, LANES));        b3_pad[0, :100] = b3

    # fc: kernel flat lane index = t*128 + c ; torch flat index = c*P3 + t
    fcW = f64(p["fcW"]).reshape(nb_class, 100, P3)              # [o, c, t]
    wfc_pad = np.zeros((P3 * LANES, LANES))
    wfc_pad.reshape(P3, LANES, LANES)[:, :100, :nb_class] = np.transpose(fcW, (2, 1, 0))
    bfc_pad = np.zeros((1, LANES)); bfc_pad[0, :nb_class] = f64(p["fcb"])

    j32 = lambda a: jnp.asarray(np.asarray(a, np.float32))
    return {"wc": j32(wc_pad), "bc": j32(bc_pad),
            "w2": j32(w2_pad), "b2": j32(b2_pad),
            "w3": j32(w3_pad), "b3": j32(b3_pad),
            "wfc": j32(wfc_pad), "bfc": j32(bfc_pad)}


# ------------------------------ pure-JAX reference ----------------------------

def ref_forward(x_bct, p):
    B, C, T = x_bct.shape

    def bn(v, stats):
        m, var, g, be = stats
        return ((v - m[None, :, None]) / jnp.sqrt(var[None, :, None])
                * g[None, :, None] + be[None, :, None])

    def elu(v):
        return jnp.where(v > 0, v, jnp.exp(v) - 1.0)

    def pool(v):
        P = v.shape[-1] // 2
        return jnp.maximum(v[..., 0:2 * P:2], v[..., 1:2 * P:2])

    # conv1: (B,1,C,T) -> (B,25,C,L1)
    L1 = T - 4
    x1 = jnp.zeros((B, 25, C, L1), jnp.float32)
    for k in range(5):
        x1 = x1 + p["W1"][None, :, None, None, k] * x_bct[:, None, :, k:k + L1]
    x1 = x1 + p["b1"][None, :, None, None]
    # conv1_2: -> (B,25,L1)
    y = jnp.einsum('oic,bict->bot', p["W12"], x1) + p["b12"][None, :, None]
    y = pool(elu(bn(y, p["bn1"])))
    # conv2
    L2 = y.shape[-1] - 4
    z = jnp.zeros((B, 50, L2), jnp.float32)
    for k in range(5):
        z = z + jnp.einsum('oc,bct->bot', p["W2"][:, :, k], y[:, :, k:k + L2])
    z = z + p["b2"][None, :, None]
    z = pool(elu(bn(z, p["bn2"])))
    # conv3
    L3 = z.shape[-1] - 4
    w = jnp.zeros((B, 100, L3), jnp.float32)
    for k in range(5):
        w = w + jnp.einsum('oc,bct->bot', p["W3"][:, :, k], z[:, :, k:k + L3])
    w = w + p["b3"][None, :, None]
    w = pool(elu(bn(w, p["bn3"])))
    flat = w.reshape(B, -1)                 # torch x.reshape(-1, 100*P3) order
    return flat @ p["fcW"].T + p["fcb"][None, :]


# ----------------------------------- main --------------------------------------

if __name__ == "__main__":
    # small shapes: T: 44 -> 40 -> 20 -> 16 -> 8 -> 4 -> 2 ; batch of 4 => NB=2, grid=(2,)
    B, C, T, nb_class = 4, 4, 44, 4
    key = jax.random.PRNGKey(0)
    kx, kw = jax.random.split(key)
    x = jax.random.normal(kx, (B, C, T), jnp.float32)   # EEG: (batch, electrodes, time)

    p = make_params(kw, C, T, nb_class)
    kp = to_kernel_params(p, C, nb_class)

    out = deepconvnet_forward(x, kp, nb_class)
    out = jax.block_until_ready(out)

    ref = ref_forward(x, p)
    np.testing.assert_allclose(np.asarray(out), np.asarray(ref), rtol=2e-3, atol=2e-3)
    print("KERNEL_OK")
</pallas_src>

<mosaic_0001>
module attributes {stable_mosaic.version = 11 : i64} {
  func.func @deepconvnet_kernel(%arg0: i32, %arg1: memref<2x44x8xf32, #tpu.memory_space<vmem>>, %arg2: memref<5x8x128xf32, #tpu.memory_space<vmem>>, %arg3: memref<1x128xf32, #tpu.memory_space<vmem>>, %arg4: memref<5x128x128xf32, #tpu.memory_space<vmem>>, %arg5: memref<1x128xf32, #tpu.memory_space<vmem>>, %arg6: memref<5x128x128xf32, #tpu.memory_space<vmem>>, %arg7: memref<1x128xf32, #tpu.memory_space<vmem>>, %arg8: memref<256x128xf32, #tpu.memory_space<vmem>>, %arg9: memref<1x128xf32, #tpu.memory_space<vmem>>, %arg10: memref<2x1x128xf32, #tpu.memory_space<vmem>>, %arg11: memref<40x128xf32, #tpu.memory_space<vmem>>, %arg12: memref<20x128xf32, #tpu.memory_space<vmem>>, %arg13: memref<16x128xf32, #tpu.memory_space<vmem>>, %arg14: memref<8x128xf32, #tpu.memory_space<vmem>>, %arg15: memref<4x128xf32, #tpu.memory_space<vmem>>, %arg16: memref<2x256xf32, #tpu.memory_space<vmem>>) attributes {dimension_semantics = [#tpu.dimension_semantics<parallel>], iteration_bounds = array<i64: 2>, scalar_prefetch = 0 : i64, scratch_operands = 6 : i64, tpu.core_type = #tpu.core_type<tc>, window_params = [{transform_indices = @transform_0, window_bounds = array<i64: 2, 44, 8>}, {pipeline_mode = #tpu.pipeline_mode<synchronous>, transform_indices = @transform_1, window_bounds = array<i64: 5, 8, 128>}, {pipeline_mode = #tpu.pipeline_mode<synchronous>, transform_indices = @transform_2, window_bounds = array<i64: 1, 128>}, {pipeline_mode = #tpu.pipeline_mode<synchronous>, transform_indices = @transform_3, window_bounds = array<i64: 5, 128, 128>}, {pipeline_mode = #tpu.pipeline_mode<synchronous>, transform_indices = @transform_4, window_bounds = array<i64: 1, 128>}, {pipeline_mode = #tpu.pipeline_mode<synchronous>, transform_indices = @transform_5, window_bounds = array<i64: 5, 128, 128>}, {pipeline_mode = #tpu.pipeline_mode<synchronous>, transform_indices = @transform_6, window_bounds = array<i64: 1, 128>}, {pipeline_mode = #tpu.pipeline_mode<synchronous>, transform_indices = @transform_7, window_bounds = array<i64: 256, 128>}, {pipeline_mode = #tpu.pipeline_mode<synchronous>, transform_indices = @transform_8, window_bounds = array<i64: 1, 128>}, {transform_indices = @transform_9, window_bounds = array<i64: 2, 1, 128>}]} {
    %c0 = arith.constant 0 : index
    %c0_0 = arith.constant 0 : index
    %0 = vector.load %arg3[%c0, %c0_0] : memref<1x128xf32, #tpu.memory_space<vmem>>, vector<1x128xf32>
    %c0_1 = arith.constant 0 : index
    %c0_2 = arith.constant 0 : index
    %1 = vector.load %arg5[%c0_1, %c0_2] : memref<1x128xf32, #tpu.memory_space<vmem>>, vector<1x128xf32>
    %c0_3 = arith.constant 0 : index
    %c0_4 = arith.constant 0 : index
    %2 = vector.load %arg7[%c0_3, %c0_4] : memref<1x128xf32, #tpu.memory_space<vmem>>, vector<1x128xf32>
    %c0_5 = arith.constant 0 : index
    %c0_6 = arith.constant 0 : index
    %c0_7 = arith.constant 0 : index
    %3 = vector.load %arg1[%c0_5, %c0_6, %c0_7] : memref<2x44x8xf32, #tpu.memory_space<vmem>>, vector<1x40x8xf32>
    %4 = vector.shape_cast %3 : vector<1x40x8xf32> to vector<40x8xf32>
    %c0_8 = arith.constant 0 : index
    %c0_9 = arith.constant 0 : index
    %c0_10 = arith.constant 0 : index
    %5 = vector.load %arg2[%c0_8, %c0_9, %c0_10] : memref<5x8x128xf32, #tpu.memory_space<vmem>>, vector<1x8x128xf32>
    %6 = vector.shape_cast %5 : vector<1x8x128xf32> to vector<8x128xf32>
    %cst = arith.constant dense<0.000000e+00> : vector<40x128xf32>
    %7 = tpu.matmul %4, %6, %cst {dimension_numbers = #tpu.dot_dimension_numbers<[1], [0], [0], [1], [0, 0, 1, 1], [], []>} : vector<40x8xf32>, vector<8x128xf32>, vector<40x128xf32> -> vector<40x128xf32>
    %8 = vector.broadcast %0 : vector<1x128xf32> to vector<40x128xf32>
    %9 = arith.addf %8, %7 : vector<40x128xf32>
    %c0_11 = arith.constant 0 : index
    %c1 = arith.constant 1 : index
    %c0_12 = arith.constant 0 : index
    %10 = vector.load %arg1[%c0_11, %c1, %c0_12] : memref<2x44x8xf32, #tpu.memory_space<vmem>>, vector<1x40x8xf32>
    %11 = vector.shape_cast %10 : vector<1x40x8xf32> to vector<40x8xf32>
    %c1_13 = arith.constant 1 : index
    %c0_14 = arith.constant 0 : index
    %c0_15 = arith.constant 0 : index
    %12 = vector.load %arg2[%c1_13, %c0_14, %c0_15] : memref<5x8x128xf32, #tpu.memory_space<vmem>>, vector<1x8x128xf32>
    %13 = vector.shape_cast %12 : vector<1x8x128xf32> to vector<8x128xf32>
    %cst_16 = arith.constant dense<0.000000e+00> : vector<40x128xf32>
    %14 = tpu.matmul %11, %13, %cst_16 {dimension_numbers = #tpu.dot_dimension_numbers<[1], [0], [0], [1], [0, 0, 1, 1], [], []>} : vector<40x8xf32>, vector<8x128xf32>, vector<40x128xf32> -> vector<40x128xf32>
    %15 = arith.addf %9, %14 : vector<40x128xf32>
    %c0_17 = arith.constant 0 : index
    %c2 = arith.constant 2 : index
    %c0_18 = arith.constant 0 : index
    %16 = vector.load %arg1[%c0_17, %c2, %c0_18] : memref<2x44x8xf32, #tpu.memory_space<vmem>>, vector<1x40x8xf32>
    %17 = vector.shape_cast %16 : vector<1x40x8xf32> to vector<40x8xf32>
    %c2_19 = arith.constant 2 : index
    %c0_20 = arith.constant 0 : index
    %c0_21 = arith.constant 0 : index
    %18 = vector.load %arg2[%c2_19, %c0_20, %c0_21] : memref<5x8x128xf32, #tpu.memory_space<vmem>>, vector<1x8x128xf32>
    %19 = vector.shape_cast %18 : vector<1x8x128xf32> to vector<8x128xf32>
    %cst_22 = arith.constant dense<0.000000e+00> : vector<40x128xf32>
    %20 = tpu.matmul %17, %19, %cst_22 {dimension_numbers = #tpu.dot_dimension_numbers<[1], [0], [0], [1], [0, 0, 1, 1], [], []>} : vector<40x8xf32>, vector<8x128xf32>, vector<40x128xf32> -> vector<40x128xf32>
    %21 = arith.addf %15, %20 : vector<40x128xf32>
    %c0_23 = arith.constant 0 : index
    %c3 = arith.constant 3 : index
    %c0_24 = arith.constant 0 : index
    %22 = vector.load %arg1[%c0_23, %c3, %c0_24] : memref<2x44x8xf32, #tpu.memory_space<vmem>>, vector<1x40x8xf32>
    %23 = vector.shape_cast %22 : vector<1x40x8xf32> to vector<40x8xf32>
    %c3_25 = arith.constant 3 : index
    %c0_26 = arith.constant 0 : index
    %c0_27 = arith.constant 0 : index
    %24 = vector.load %arg2[%c3_25, %c0_26, %c0_27] : memref<5x8x128xf32, #tpu.memory_space<vmem>>, vector<1x8x128xf32>
    %25 = vector.shape_cast %24 : vector<1x8x128xf32> to vector<8x128xf32>
    %cst_28 = arith.constant dense<0.000000e+00> : vector<40x128xf32>
    %26 = tpu.matmul %23, %25, %cst_28 {dimension_numbers = #tpu.dot_dimension_numbers<[1], [0], [0], [1], [0, 0, 1, 1], [], []>} : vector<40x8xf32>, vector<8x128xf32>, vector<40x128xf32> -> vector<40x128xf32>
    %27 = arith.addf %21, %26 : vector<40x128xf32>
    %c0_29 = arith.constant 0 : index
    %c4 = arith.constant 4 : index
    %c0_30 = arith.constant 0 : index
    %28 = vector.load %arg1[%c0_29, %c4, %c0_30] : memref<2x44x8xf32, #tpu.memory_space<vmem>>, vector<1x40x8xf32>
    %29 = vector.shape_cast %28 : vector<1x40x8xf32> to vector<40x8xf32>
    %c4_31 = arith.constant 4 : index
    %c0_32 = arith.constant 0 : index
    %c0_33 = arith.constant 0 : index
    %30 = vector.load %arg2[%c4_31, %c0_32, %c0_33] : memref<5x8x128xf32, #tpu.memory_space<vmem>>, vector<1x8x128xf32>
    %31 = vector.shape_cast %30 : vector<1x8x128xf32> to vector<8x128xf32>
    %cst_34 = arith.constant dense<0.000000e+00> : vector<40x128xf32>
    %32 = tpu.matmul %29, %31, %cst_34 {dimension_numbers = #tpu.dot_dimension_numbers<[1], [0], [0], [1], [0, 0, 1, 1], [], []>} : vector<40x8xf32>, vector<8x128xf32>, vector<40x128xf32> -> vector<40x128xf32>
    %33 = arith.addf %27, %32 : vector<40x128xf32>
    %c0_35 = arith.constant 0 : index
    %c0_36 = arith.constant 0 : index
    %34 = vector.load %arg11[%c0_35, %c0_36] : memref<40x128xf32, #tpu.memory_space<vmem>>, vector<40x128xf32>
    tpu.vector_store %arg11[%c0_35, %c0_36], %33 {strides = array<i32>} : memref<40x128xf32, #tpu.memory_space<vmem>>, vector<40x128xf32>,
    %c0_37 = arith.constant 0 : index
    %c0_38 = arith.constant 0 : index
    %35 = tpu.strided_load %arg11[%c0_37, %c0_38] {strides = array<i32: 2, 1>} : memref<40x128xf32, #tpu.memory_space<vmem>>, vector<20x128xf32>
    %c1_39 = arith.constant 1 : index
    %c0_40 = arith.constant 0 : index
    %36 = tpu.strided_load %arg11[%c1_39, %c0_40] {strides = array<i32: 2, 1>} : memref<40x128xf32, #tpu.memory_space<vmem>>, vector<20x128xf32>
    %37 = arith.maximumf %35, %36 : vector<20x128xf32>
    %cst_41 = arith.constant 0.000000e+00 : f32
    %38 = vector.broadcast %cst_41 : f32 to vector<20x128xf32>
    %39 = arith.cmpf ogt, %37, %38 : vector<20x128xf32>
    %40 = math.exp %37 : vector<20x128xf32>
    %cst_42 = arith.constant 1.000000e+00 : f32
    %41 = vector.broadcast %cst_42 : f32 to vector<20x128xf32>
    %42 = arith.subf %40, %41 : vector<20x128xf32>
    %43 = arith.select %39, %37, %42 : vector<20x128xi1>, vector<20x128xf32>
    %c0_43 = arith.constant 0 : index
    %c0_44 = arith.constant 0 : index
    %44 = vector.load %arg12[%c0_43, %c0_44] : memref<20x128xf32, #tpu.memory_space<vmem>>, vector<20x128xf32>
    tpu.vector_store %arg12[%c0_43, %c0_44], %43 {strides = array<i32>} : memref<20x128xf32, #tpu.memory_space<vmem>>, vector<20x128xf32>,
    %c0_45 = arith.constant 0 : index
    %c0_46 = arith.constant 0 : index
    %45 = vector.load %arg12[%c0_45, %c0_46] : memref<20x128xf32, #tpu.memory_space<vmem>>, vector<16x128xf32>
    %c0_47 = arith.constant 0 : index
    %c0_48 = arith.constant 0 : index
    %c0_49 = arith.constant 0 : index
    %46 = vector.load %arg4[%c0_47, %c0_48, %c0_49] : memref<5x128x128xf32, #tpu.memory_space<vmem>>, vector<1x128x128xf32>
    %47 = vector.shape_cast %46 : vector<1x128x128xf32> to vector<128x128xf32>
    %cst_50 = arith.constant dense<0.000000e+00> : vector<16x128xf32>
    %48 = tpu.matmul %45, %47, %cst_50 {dimension_numbers = #tpu.dot_dimension_numbers<[1], [0], [0], [1], [0, 0, 1, 1], [], []>} : vector<16x128xf32>, vector<128x128xf32>, vector<16x128xf32> -> vector<16x128xf32>
    %49 = vector.broadcast %1 : vector<1x128xf32> to vector<16x128xf32>
    %50 = arith.addf %49, %48 : vector<16x128xf32>
    %c1_51 = arith.constant 1 : index
    %c0_52 = arith.constant 0 : index
    %51 = vector.load %arg12[%c1_51, %c0_52] : memref<20x128xf32, #tpu.memory_space<vmem>>, vector<16x128xf32>
    %c1_53 = arith.constant 1 : index
    %c0_54 = arith.constant 0 : index
    %c0_55 = arith.constant 0 : index
    %52 = vector.load %arg4[%c1_53, %c0_54, %c0_55] : memref<5x128x128xf32, #tpu.memory_space<vmem>>, vector<1x128x128xf32>
    %53 = vector.shape_cast %52 : vector<1x128x128xf32> to vector<128x128xf32>
    %cst_56 = arith.constant dense<0.000000e+00> : vector<16x128xf32>
    %54 = tpu.matmul %51, %53, %cst_56 {dimension_numbers = #tpu.dot_dimension_numbers<[1], [0], [0], [1], [0, 0, 1, 1], [], []>} : vector<16x128xf32>, vector<128x128xf32>, vector<16x128xf32> -> vector<16x128xf32>
    %55 = arith.addf %50, %54 : vector<16x128xf32>
    %c2_57 = arith.constant 2 : index
    %c0_58 = arith.constant 0 : index
    %56 = vector.load %arg12[%c2_57, %c0_58] : memref<20x128xf32, #tpu.memory_space<vmem>>, vector<16x128xf32>
    %c2_59 = arith.constant 2 : index
    %c0_60 = arith.constant 0 : index
    %c0_61 = arith.constant 0 : index
    %57 = vector.load %arg4[%c2_59, %c0_60, %c0_61] : memref<5x128x128xf32, #tpu.memory_space<vmem>>, vector<1x128x128xf32>
    %58 = vector.shape_cast %57 : vector<1x128x128xf32> to vector<128x128xf32>
    %cst_62 = arith.constant dense<0.000000e+00> : vector<16x128xf32>
    %59 = tpu.matmul %56, %58, %cst_62 {dimension_numbers = #tpu.dot_dimension_numbers<[1], [0], [0], [1], [0, 0, 1, 1], [], []>} : vector<16x128xf32>, vector<128x128xf32>, vector<16x128xf32> -> vector<16x128xf32>
    %60 = arith.addf %55, %59 : vector<16x128xf32>
    %c3_63 = arith.constant 3 : index
    %c0_64 = arith.constant 0 : index
    %61 = vector.load %arg12[%c3_63, %c0_64] : memref<20x128xf32, #tpu.memory_space<vmem>>, vector<16x128xf32>
    %c3_65 = arith.constant 3 : index
    %c0_66 = arith.constant 0 : index
    %c0_67 = arith.constant 0 : index
    %62 = vector.load %arg4[%c3_65, %c0_66, %c0_67] : memref<5x128x128xf32, #tpu.memory_space<vmem>>, vector<1x128x128xf32>
    %63 = vector.shape_cast %62 : vector<1x128x128xf32> to vector<128x128xf32>
    %cst_68 = arith.constant dense<0.000000e+00> : vector<16x128xf32>
    %64 = tpu.matmul %61, %63, %cst_68 {dimension_numbers = #tpu.dot_dimension_numbers<[1], [0], [0], [1], [0, 0, 1, 1], [], []>} : vector<16x128xf32>, vector<128x128xf32>, vector<16x128xf32> -> vector<16x128xf32>
    %65 = arith.addf %60, %64 : vector<16x128xf32>
    %c4_69 = arith.constant 4 : index
    %c0_70 = arith.constant 0 : index
    %66 = vector.load %arg12[%c4_69, %c0_70] : memref<20x128xf32, #tpu.memory_space<vmem>>, vector<16x128xf32>
    %c4_71 = arith.constant 4 : index
    %c0_72 = arith.constant 0 : index
    %c0_73 = arith.constant 0 : index
    %67 = vector.load %arg4[%c4_71, %c0_72, %c0_73] : memref<5x128x128xf32, #tpu.memory_space<vmem>>, vector<1x128x128xf32>
    %68 = vector.shape_cast %67 : vector<1x128x128xf32> to vector<128x128xf32>
    %cst_74 = arith.constant dense<0.000000e+00> : vector<16x128xf32>
    %69 = tpu.matmul %66, %68, %cst_74 {dimension_numbers = #tpu.dot_dimension_numbers<[1], [0], [0], [1], [0, 0, 1, 1], [], []>} : vector<16x128xf32>, vector<128x128xf32>, vector<16x128xf32> -> vector<16x128xf32>
    %70 = arith.addf %65, %69 : vector<16x128xf32>
    %c0_75 = arith.constant 0 : index
    %c0_76 = arith.constant 0 : index
    %71 = vector.load %arg13[%c0_75, %c0_76] : memref<16x128xf32, #tpu.memory_space<vmem>>, vector<16x128xf32>
    tpu.vector_store %arg13[%c0_75, %c0_76], %70 {strides = array<i32>} : memref<16x128xf32, #tpu.memory_space<vmem>>, vector<16x128xf32>,
    %c0_77 = arith.constant 0 : index
    %c0_78 = arith.constant 0 : index
    %72 = tpu.strided_load %arg13[%c0_77, %c0_78] {strides = array<i32: 2, 1>} : memref<16x128xf32, #tpu.memory_space<vmem>>, vector<8x128xf32>
    %c1_79 = arith.constant 1 : index
    %c0_80 = arith.constant 0 : index
    %73 = tpu.strided_load %arg13[%c1_79, %c0_80] {strides = array<i32: 2, 1>} : memref<16x128xf32, #tpu.memory_space<vmem>>, vector<8x128xf32>
    %74 = arith.maximumf %72, %73 : vector<8x128xf32>
    %cst_81 = arith.constant 0.000000e+00 : f32
    %75 = vector.broadcast %cst_81 : f32 to vector<8x128xf32>
    %76 = arith.cmpf ogt, %74, %75 : vector<8x128xf32>
    %77 = math.exp %74 : vector<8x128xf32>
    %cst_82 = arith.constant 1.000000e+00 : f32
    %78 = vector.broadcast %cst_82 : f32 to vector<8x128xf32>
    %79 = arith.subf %77, %78 : vector<8x128xf32>
    %80 = arith.select %76, %74, %79 : vector<8x128xi1>, vector<8x128xf32>
    %c0_83 = arith.constant 0 : index
    %c0_84 = arith.constant 0 : index
    %81 = vector.load %arg14[%c0_83, %c0_84] : memref<8x128xf32, #tpu.memory_space<vmem>>, vector<8x128xf32>
    tpu.vector_store %arg14[%c0_83, %c0_84], %80 {strides = array<i32>} : memref<8x128xf32, #tpu.memory_space<vmem>>, vector<8x128xf32>,
    %c0_85 = arith.constant 0 : index
    %c0_86 = arith.constant 0 : index
    %82 = vector.load %arg14[%c0_85, %c0_86] : memref<8x128xf32, #tpu.memory_space<vmem>>, vector<4x128xf32>
    %c0_87 = arith.constant 0 : index
    %c0_88 = arith.constant 0 : index
    %c0_89 = arith.constant 0 : index
    %83 = vector.load %arg6[%c0_87, %c0_88, %c0_89] : memref<5x128x128xf32, #tpu.memory_space<vmem>>, vector<1x128x128xf32>
    %84 = vector.shape_cast %83 : vector<1x128x128xf32> to vector<128x128xf32>
    %cst_90 = arith.constant dense<0.000000e+00> : vector<4x128xf32>
    %85 = tpu.matmul %82, %84, %cst_90 {dimension_numbers = #tpu.dot_dimension_numbers<[1], [0], [0], [1], [0, 0, 1, 1], [], []>} : vector<4x128xf32>, vector<128x128xf32>, vector<4x128xf32> -> vector<4x128xf32>
    %86 = vector.broadcast %2 : vector<1x128xf32> to vector<4x128xf32>
    %87 = arith.addf %86, %85 : vector<4x128xf32>
    %c1_91 = arith.constant 1 : index
    %c0_92 = arith.constant 0 : index
    %88 = vector.load %arg14[%c1_91, %c0_92] : memref<8x128xf32, #tpu.memory_space<vmem>>, vector<4x128xf32>
    %c1_93 = arith.constant 1 : index
    %c0_94 = arith.constant 0 : index
    %c0_95 = arith.constant 0 : index
    %89 = vector.load %arg6[%c1_93, %c0_94, %c0_95] : memref<5x128x128xf32, #tpu.memory_space<vmem>>, vector<1x128x128xf32>
    %90 = vector.shape_cast %89 : vector<1x128x128xf32> to vector<128x128xf32>
    %cst_96 = arith.constant dense<0.000000e+00> : vector<4x128xf32>
    %91 = tpu.matmul %88, %90, %cst_96 {dimension_numbers = #tpu.dot_dimension_numbers<[1], [0], [0], [1], [0, 0, 1, 1], [], []>} : vector<4x128xf32>, vector<128x128xf32>, vector<4x128xf32> -> vector<4x128xf32>
    %92 = arith.addf %87, %91 : vector<4x128xf32>
    %c2_97 = arith.constant 2 : index
    %c0_98 = arith.constant 0 : index
    %93 = vector.load %arg14[%c2_97, %c0_98] : memref<8x128xf32, #tpu.memory_space<vmem>>, vector<4x128xf32>
    %c2_99 = arith.constant 2 : index
    %c0_100 = arith.constant 0 : index
    %c0_101 = arith.constant 0 : index
    %94 = vector.load %arg6[%c2_99, %c0_100, %c0_101] : memref<5x128x128xf32, #tpu.memory_space<vmem>>, vector<1x128x128xf32>
    %95 = vector.shape_cast %94 : vector<1x128x128xf32> to vector<128x128xf32>
    %cst_102 = arith.constant dense<0.000000e+00> : vector<4x128xf32>
    %96 = tpu.matmul %93, %95, %cst_102 {dimension_numbers = #tpu.dot_dimension_numbers<[1], [0], [0], [1], [0, 0, 1, 1], [], []>} : vector<4x128xf32>, vector<128x128xf32>, vector<4x128xf32> -> vector<4x128xf32>
    %97 = arith.addf %92, %96 : vector<4x128xf32>
    %c3_103 = arith.constant 3 : index
    %c0_104 = arith.constant 0 : index
    %98 = vector.load %arg14[%c3_103, %c0_104] : memref<8x128xf32, #tpu.memory_space<vmem>>, vector<4x128xf32>
    %c3_105 = arith.constant 3 : index
    %c0_106 = arith.constant 0 : index
    %c0_107 = arith.constant 0 : index
    %99 = vector.load %arg6[%c3_105, %c0_106, %c0_107] : memref<5x128x128xf32, #tpu.memory_space<vmem>>, vector<1x128x128xf32>
    %100 = vector.shape_cast %99 : vector<1x128x128xf32> to vector<128x128xf32>
    %cst_108 = arith.constant dense<0.000000e+00> : vector<4x128xf32>
    %101 = tpu.matmul %98, %100, %cst_108 {dimension_numbers = #tpu.dot_dimension_numbers<[1], [0], [0], [1], [0, 0, 1, 1], [], []>} : vector<4x128xf32>, vector<128x128xf32>, vector<4x128xf32> -> vector<4x128xf32>
    %102 = arith.addf %97, %101 : vector<4x128xf32>
    %c4_109 = arith.constant 4 : index
    %c0_110 = arith.constant 0 : index
    %103 = vector.load %arg14[%c4_109, %c0_110] : memref<8x128xf32, #tpu.memory_space<vmem>>, vector<4x128xf32>
    %c4_111 = arith.constant 4 : index
    %c0_112 = arith.constant 0 : index
    %c0_113 = arith.constant 0 : index
    %104 = vector.load %arg6[%c4_111, %c0_112, %c0_113] : memref<5x128x128xf32, #tpu.memory_space<vmem>>, vector<1x128x128xf32>
    %105 = vector.shape_cast %104 : vector<1x128x128xf32> to vector<128x128xf32>
    %cst_114 = arith.constant dense<0.000000e+00> : vector<4x128xf32>
    %106 = tpu.matmul %103, %105, %cst_114 {dimension_numbers = #tpu.dot_dimension_numbers<[1], [0], [0], [1], [0, 0, 1, 1], [], []>} : vector<4x128xf32>, vector<128x128xf32>, vector<4x128xf32> -> vector<4x128xf32>
    %107 = arith.addf %102, %106 : vector<4x128xf32>
    %c0_115 = arith.constant 0 : index
    %c0_116 = arith.constant 0 : index
    %108 = vector.load %arg15[%c0_115, %c0_116] : memref<4x128xf32, #tpu.memory_space<vmem>>, vector<4x128xf32>
    tpu.vector_store %arg15[%c0_115, %c0_116], %107 {strides = array<i32>} : memref<4x128xf32, #tpu.memory_space<vmem>>, vector<4x128xf32>,
    %c0_117 = arith.constant 0 : index
    %c0_118 = arith.constant 0 : index
    %109 = tpu.strided_load %arg15[%c0_117, %c0_118] {strides = array<i32: 2, 1>} : memref<4x128xf32, #tpu.memory_space<vmem>>, vector<2x128xf32>
    %c1_119 = arith.constant 1 : index
    %c0_120 = arith.constant 0 : index
    %110 = tpu.strided_load %arg15[%c1_119, %c0_120] {strides = array<i32: 2, 1>} : memref<4x128xf32, #tpu.memory_space<vmem>>, vector<2x128xf32>
    %111 = arith.maximumf %109, %110 : vector<2x128xf32>
    %cst_121 = arith.constant 0.000000e+00 : f32
    %112 = vector.broadcast %cst_121 : f32 to vector<2x128xf32>
    %113 = arith.cmpf ogt, %111, %112 : vector<2x128xf32>
    %114 = math.exp %111 : vector<2x128xf32>
    %cst_122 = arith.constant 1.000000e+00 : f32
    %115 = vector.broadcast %cst_122 : f32 to vector<2x128xf32>
    %116 = arith.subf %114, %115 : vector<2x128xf32>
    %117 = arith.select %113, %111, %116 : vector<2x128xi1>, vector<2x128xf32>
    %118 = vector.extract_strided_slice %117 {offsets = [0, 0], sizes = [1, 128], strides = [1, 1]} : vector<2x128xf32> to vector<1x128xf32>
    %c0_123 = arith.constant 0 : index
    %c0_124 = arith.constant 0 : index
    %119 = vector.load %arg16[%c0_123, %c0_124] : memref<2x256xf32, #tpu.memory_space<vmem>>, vector<1x128xf32>
    tpu.vector_store %arg16[%c0_123, %c0_124], %118 {strides = array<i32>} : memref<2x256xf32, #tpu.memory_space<vmem>>, vector<1x128xf32>,
    %120 = vector.extract_strided_slice %117 {offsets = [1, 0], sizes = [1, 128], strides = [1, 1]} : vector<2x128xf32> to vector<1x128xf32>
    %c0_125 = arith.constant 0 : index
    %c128 = arith.constant 128 : index
    %121 = vector.load %arg16[%c0_125, %c128] : memref<2x256xf32, #tpu.memory_space<vmem>>, vector<1x128xf32>
    tpu.vector_store %arg16[%c0_125, %c128], %120 {strides = array<i32>} : memref<2x256xf32, #tpu.memory_space<vmem>>, vector<1x128xf32>,
    %c1_126 = arith.constant 1 : index
    %c0_127 = arith.constant 0 : index
    %c0_128 = arith.constant 0 : index
    %122 = vector.load %arg1[%c1_126, %c0_127, %c0_128] : memref<2x44x8xf32, #tpu.memory_space<vmem>>, vector<1x40x8xf32>
    %123 = vector.shape_cast %122 : vector<1x40x8xf32> to vector<40x8xf32>
    %c0_129 = arith.constant 0 : index
    %c0_130 = arith.constant 0 : index
    %c0_131 = arith.constant 0 : index
    %124 = vector.load %arg2[%c0_129, %c0_130, %c0_131] : memref<5x8x128xf32, #tpu.memory_space<vmem>>, vector<1x8x128xf32>
    %125 = vector.shape_cast %124 : vector<1x8x128xf32> to vector<8x128xf32>
    %cst_132 = arith.constant dense<0.000000e+00> : vector<40x128xf32>
    %126 = tpu.matmul %123, %125, %cst_132 {dimension_numbers = #tpu.dot_dimension_numbers<[1], [0], [0], [1], [0, 0, 1, 1], [], []>} : vector<40x8xf32>, vector<8x128xf32>, vector<40x128xf32> -> vector<40x128xf32>
    %127 = vector.broadcast %0 : vector<1x128xf32> to vector<40x128xf32>
    %128 = arith.addf %127, %126 : vector<40x128xf32>
    %c1_133 = arith.constant 1 : index
    %c1_134 = arith.constant 1 : index
    %c0_135 = arith.constant 0 : index
    %129 = vector.load %arg1[%c1_133, %c1_134, %c0_135] : memref<2x44x8xf32, #tpu.memory_space<vmem>>, vector<1x40x8xf32>
    %130 = vector.shape_cast %129 : vector<1x40x8xf32> to vector<40x8xf32>
    %c1_136 = arith.constant 1 : index
    %c0_137 = arith.constant 0 : index
    %c0_138 = arith.constant 0 : index
    %131 = vector.load %arg2[%c1_136, %c0_137, %c0_138] : memref<5x8x128xf32, #tpu.memory_space<vmem>>, vector<1x8x128xf32>
    %132 = vector.shape_cast %131 : vector<1x8x128xf32> to vector<8x128xf32>
    %cst_139 = arith.constant dense<0.000000e+00> : vector<40x128xf32>
    %133 = tpu.matmul %130, %132, %cst_139 {dimension_numbers = #tpu.dot_dimension_numbers<[1], [0], [0], [1], [0, 0, 1, 1], [], []>} : vector<40x8xf32>, vector<8x128xf32>, vector<40x128xf32> -> vector<40x128xf32>
    %134 = arith.addf %128, %133 : vector<40x128xf32>
    %c1_140 = arith.constant 1 : index
    %c2_141 = arith.constant 2 : index
    %c0_142 = arith.constant 0 : index
    %135 = vector.load %arg1[%c1_140, %c2_141, %c0_142] : memref<2x44x8xf32, #tpu.memory_space<vmem>>, vector<1x40x8xf32>
    %136 = vector.shape_cast %135 : vector<1x40x8xf32> to vector<40x8xf32>
    %c2_143 = arith.constant 2 : index
    %c0_144 = arith.constant 0 : index
    %c0_145 = arith.constant 0 : index
    %137 = vector.load %arg2[%c2_143, %c0_144, %c0_145] : memref<5x8x128xf32, #tpu.memory_space<vmem>>, vector<1x8x128xf32>
    %138 = vector.shape_cast %137 : vector<1x8x128xf32> to vector<8x128xf32>
    %cst_146 = arith.constant dense<0.000000e+00> : vector<40x128xf32>
    %139 = tpu.matmul %136, %138, %cst_146 {dimension_numbers = #tpu.dot_dimension_numbers<[1], [0], [0], [1], [0, 0, 1, 1], [], []>} : vector<40x8xf32>, vector<8x128xf32>, vector<40x128xf32> -> vector<40x128xf32>
    %140 = arith.addf %134, %139 : vector<40x128xf32>
    %c1_147 = arith.constant 1 : index
    %c3_148 = arith.constant 3 : index
    %c0_149 = arith.constant 0 : index
    %141 = vector.load %arg1[%c1_147, %c3_148, %c0_149] : memref<2x44x8xf32, #tpu.memory_space<vmem>>, vector<1x40x8xf32>
    %142 = vector.shape_cast %141 : vector<1x40x8xf32> to vector<40x8xf32>
    %c3_150 = arith.constant 3 : index
    %c0_151 = arith.constant 0 : index
    %c0_152 = arith.constant 0 : index
    %143 = vector.load %arg2[%c3_150, %c0_151, %c0_152] : memref<5x8x128xf32, #tpu.memory_space<vmem>>, vector<1x8x128xf32>
    %144 = vector.shape_cast %143 : vector<1x8x128xf32> to vector<8x128xf32>
    %cst_153 = arith.constant dense<0.000000e+00> : vector<40x128xf32>
    %145 = tpu.matmul %142, %144, %cst_153 {dimension_numbers = #tpu.dot_dimension_numbers<[1], [0], [0], [1], [0, 0, 1, 1], [], []>} : vector<40x8xf32>, vector<8x128xf32>, vector<40x128xf32> -> vector<40x128xf32>
    %146 = arith.addf %140, %145 : vector<40x128xf32>
    %c1_154 = arith.constant 1 : index
    %c4_155 = arith.constant 4 : index
    %c0_156 = arith.constant 0 : index
    %147 = vector.load %arg1[%c1_154, %c4_155, %c0_156] : memref<2x44x8xf32, #tpu.memory_space<vmem>>, vector<1x40x8xf32>
    %148 = vector.shape_cast %147 : vector<1x40x8xf32> to vector<40x8xf32>
    %c4_157 = arith.constant 4 : index
    %c0_158 = arith.constant 0 : index
    %c0_159 = arith.constant 0 : index
    %149 = vector.load %arg2[%c4_157, %c0_158, %c0_159] : memref<5x8x128xf32, #tpu.memory_space<vmem>>, vector<1x8x128xf32>
    %150 = vector.shape_cast %149 : vector<1x8x128xf32> to vector<8x128xf32>
    %cst_160 = arith.constant dense<0.000000e+00> : vector<40x128xf32>
    %151 = tpu.matmul %148, %150, %cst_160 {dimension_numbers = #tpu.dot_dimension_numbers<[1], [0], [0], [1], [0, 0, 1, 1], [], []>} : vector<40x8xf32>, vector<8x128xf32>, vector<40x128xf32> -> vector<40x128xf32>
    %152 = arith.addf %146, %151 : vector<40x128xf32>
    %c0_161 = arith.constant 0 : index
    %c0_162 = arith.constant 0 : index
    %153 = vector.load %arg11[%c0_161, %c0_162] : memref<40x128xf32, #tpu.memory_space<vmem>>, vector<40x128xf32>
    tpu.vector_store %arg11[%c0_161, %c0_162], %152 {strides = array<i32>} : memref<40x128xf32, #tpu.memory_space<vmem>>, vector<40x128xf32>,
    %c0_163 = arith.constant 0 : index
    %c0_164 = arith.constant 0 : index
    %154 = tpu.strided_load %arg11[%c0_163, %c0_164] {strides = array<i32: 2, 1>} : memref<40x128xf32, #tpu.memory_space<vmem>>, vector<20x128xf32>
    %c1_165 = arith.constant 1 : index
    %c0_166 = arith.constant 0 : index
    %155 = tpu.strided_load %arg11[%c1_165, %c0_166] {strides = array<i32: 2, 1>} : memref<40x128xf32, #tpu.memory_space<vmem>>, vector<20x128xf32>
    %156 = arith.maximumf %154, %155 : vector<20x128xf32>
    %cst_167 = arith.constant 0.000000e+00 : f32
    %157 = vector.broadcast %cst_167 : f32 to vector<20x128xf32>
    %158 = arith.cmpf ogt, %156, %157 : vector<20x128xf32>
    %159 = math.exp %156 : vector<20x128xf32>
    %cst_168 = arith.constant 1.000000e+00 : f32
    %160 = vector.broadcast %cst_168 : f32 to vector<20x128xf32>
    %161 = arith.subf %159, %160 : vector<20x128xf32>
    %162 = arith.select %158, %156, %161 : vector<20x128xi1>, vector<20x128xf32>
    %c0_169 = arith.constant 0 : index
    %c0_170 = arith.constant 0 : index
    %163 = vector.load %arg12[%c0_169, %c0_170] : memref<20x128xf32, #tpu.memory_space<vmem>>, vector<20x128xf32>
    tpu.vector_store %arg12[%c0_169, %c0_170], %162 {strides = array<i32>} : memref<20x128xf32, #tpu.memory_space<vmem>>, vector<20x128xf32>,
    %c0_171 = arith.constant 0 : index
    %c0_172 = arith.constant 0 : index
    %164 = vector.load %arg12[%c0_171, %c0_172] : memref<20x128xf32, #tpu.memory_space<vmem>>, vector<16x128xf32>
    %c0_173 = arith.constant 0 : index
    %c0_174 = arith.constant 0 : index
    %c0_175 = arith.constant 0 : index
    %165 = vector.load %arg4[%c0_173, %c0_174, %c0_175] : memref<5x128x128xf32, #tpu.memory_space<vmem>>, vector<1x128x128xf32>
    %166 = vector.shape_cast %165 : vector<1x128x128xf32> to vector<128x128xf32>
    %cst_176 = arith.constant dense<0.000000e+00> : vector<16x128xf32>
    %167 = tpu.matmul %164, %166, %cst_176 {dimension_numbers = #tpu.dot_dimension_numbers<[1], [0], [0], [1], [0, 0, 1, 1], [], []>} : vector<16x128xf32>, vector<128x128xf32>, vector<16x128xf32> -> vector<16x128xf32>
    %168 = vector.broadcast %1 : vector<1x128xf32> to vector<16x128xf32>
    %169 = arith.addf %168, %167 : vector<16x128xf32>
    %c1_177 = arith.constant 1 : index
    %c0_178 = arith.constant 0 : index
    %170 = vector.load %arg12[%c1_177, %c0_178] : memref<20x128xf32, #tpu.memory_space<vmem>>, vector<16x128xf32>
    %c1_179 = arith.constant 1 : index
    %c0_180 = arith.constant 0 : index
    %c0_181 = arith.constant 0 : index
    %171 = vector.load %arg4[%c1_179, %c0_180, %c0_181] : memref<5x128x128xf32, #tpu.memory_space<vmem>>, vector<1x128x128xf32>
    %172 = vector.shape_cast %171 : vector<1x128x128xf32> to vector<128x128xf32>
    %cst_182 = arith.constant dense<0.000000e+00> : vector<16x128xf32>
    %173 = tpu.matmul %170, %172, %cst_182 {dimension_numbers = #tpu.dot_dimension_numbers<[1], [0], [0], [1], [0, 0, 1, 1], [], []>} : vector<16x128xf32>, vector<128x128xf32>, vector<16x128xf32> -> vector<16x128xf32>
    %174 = arith.addf %169, %173 : vector<16x128xf32>
    %c2_183 = arith.constant 2 : index
    %c0_184 = arith.constant 0 : index
    %175 = vector.load %arg12[%c2_183, %c0_184] : memref<20x128xf32, #tpu.memory_space<vmem>>, vector<16x128xf32>
    %c2_185 = arith.constant 2 : index
    %c0_186 = arith.constant 0 : index
    %c0_187 = arith.constant 0 : index
    %176 = vector.load %arg4[%c2_185, %c0_186, %c0_187] : memref<5x128x128xf32, #tpu.memory_space<vmem>>, vector<1x128x128xf32>
    %177 = vector.shape_cast %176 : vector<1x128x128xf32> to vector<128x128xf32>
    %cst_188 = arith.constant dense<0.000000e+00> : vector<16x128xf32>
    %178 = tpu.matmul %175, %177, %cst_188 {dimension_numbers = #tpu.dot_dimension_numbers<[1], [0], [0], [1], [0, 0, 1, 1], [], []>} : vector<16x128xf32>, vector<128x128xf32>, vector<16x128xf32> -> vector<16x128xf32>
    %179 = arith.addf %174, %178 : vector<16x128xf32>
    %c3_189 = arith.constant 3 : index
    %c0_190 = arith.constant 0 : index
    %180 = vector.load %arg12[%c3_189, %c0_190] : memref<20x128xf32, #tpu.memory_space<vmem>>, vector<16x128xf32>
    %c3_191 = arith.constant 3 : index
    %c0_192 = arith.constant 0 : index
    %c0_193 = arith.constant 0 : index
    %181 = vector.load %arg4[%c3_191, %c0_192, %c0_193] : memref<5x128x128xf32, #tpu.memory_space<vmem>>, vector<1x128x128xf32>
    %182 = vector.shape_cast %181 : vector<1x128x128xf32> to vector<128x128xf32>
    %cst_194 = arith.constant dense<0.000000e+00> : vector<16x128xf32>
    %183 = tpu.matmul %180, %182, %cst_194 {dimension_numbers = #tpu.dot_dimension_numbers<[1], [0], [0], [1], [0, 0, 1, 1], [], []>} : vector<16x128xf32>, vector<128x128xf32>, vector<16x128xf32> -> vector<16x128xf32>
    %184 = arith.addf %179, %183 : vector<16x128xf32>
    %c4_195 = arith.constant 4 : index
    %c0_196 = arith.constant 0 : index
    %185 = vector.load %arg12[%c4_195, %c0_196] : memref<20x128xf32, #tpu.memory_space<vmem>>, vector<16x128xf32>
    %c4_197 = arith.constant 4 : index
    %c0_198 = arith.constant 0 : index
    %c0_199 = arith.constant 0 : index
    %186 = vector.load %arg4[%c4_197, %c0_198, %c0_199] : memref<5x128x128xf32, #tpu.memory_space<vmem>>, vector<1x128x128xf32>
    %187 = vector.shape_cast %186 : vector<1x128x128xf32> to vector<128x128xf32>
    %cst_200 = arith.constant dense<0.000000e+00> : vector<16x128xf32>
    %188 = tpu.matmul %185, %187, %cst_200 {dimension_numbers = #tpu.dot_dimension_numbers<[1], [0], [0], [1], [0, 0, 1, 1], [], []>} : vector<16x128xf32>, vector<128x128xf32>, vector<16x128xf32> -> vector<16x128xf32>
    %189 = arith.addf %184, %188 : vector<16x128xf32>
    %c0_201 = arith.constant 0 : index
    %c0_202 = arith.constant 0 : index
    %190 = vector.load %arg13[%c0_201, %c0_202] : memref<16x128xf32, #tpu.memory_space<vmem>>, vector<16x128xf32>
    tpu.vector_store %arg13[%c0_201, %c0_202], %189 {strides = array<i32>} : memref<16x128xf32, #tpu.memory_space<vmem>>, vector<16x128xf32>,
    %c0_203 = arith.constant 0 : index
    %c0_204 = arith.constant 0 : index
    %191 = tpu.strided_load %arg13[%c0_203, %c0_204] {strides = array<i32: 2, 1>} : memref<16x128xf32, #tpu.memory_space<vmem>>, vector<8x128xf32>
    %c1_205 = arith.constant 1 : index
    %c0_206 = arith.constant 0 : index
    %192 = tpu.strided_load %arg13[%c1_205, %c0_206] {strides = array<i32: 2, 1>} : memref<16x128xf32, #tpu.memory_space<vmem>>, vector<8x128xf32>
    %193 = arith.maximumf %191, %192 : vector<8x128xf32>
    %cst_207 = arith.constant 0.000000e+00 : f32
    %194 = vector.broadcast %cst_207 : f32 to vector<8x128xf32>
    %195 = arith.cmpf ogt, %193, %194 : vector<8x128xf32>
    %196 = math.exp %193 : vector<8x128xf32>
    %cst_208 = arith.constant 1.000000e+00 : f32
    %197 = vector.broadcast %cst_208 : f32 to vector<8x128xf32>
    %198 = arith.subf %196, %197 : vector<8x128xf32>
    %199 = arith.select %195, %193, %198 : vector<8x128xi1>, vector<8x128xf32>
    %c0_209 = arith.constant 0 : index
    %c0_210 = arith.constant 0 : index
    %200 = vector.load %arg14[%c0_209, %c0_210] : memref<8x128xf32, #tpu.memory_space<vmem>>, vector<8x128xf32>
    tpu.vector_store %arg14[%c0_209, %c0_210], %199 {strides = array<i32>} : memref<8x128xf32, #tpu.memory_space<vmem>>, vector<8x128xf32>,
    %c0_211 = arith.constant 0 : index
    %c0_212 = arith.constant 0 : index
    %201 = vector.load %arg14[%c0_211, %c0_212] : memref<8x128xf32, #tpu.memory_space<vmem>>, vector<4x128xf32>
    %c0_213 = arith.constant 0 : index
    %c0_214 = arith.constant 0 : index
    %c0_215 = arith.constant 0 : index
    %202 = vector.load %arg6[%c0_213, %c0_214, %c0_215] : memref<5x128x128xf32, #tpu.memory_space<vmem>>, vector<1x128x128xf32>
    %203 = vector.shape_cast %202 : vector<1x128x128xf32> to vector<128x128xf32>
    %cst_216 = arith.constant dense<0.000000e+00> : vector<4x128xf32>
    %204 = tpu.matmul %201, %203, %cst_216 {dimension_numbers = #tpu.dot_dimension_numbers<[1], [0], [0], [1], [0, 0, 1, 1], [], []>} : vector<4x128xf32>, vector<128x128xf32>, vector<4x128xf32> -> vector<4x128xf32>
    %205 = vector.broadcast %2 : vector<1x128xf32> to vector<4x128xf32>
    %206 = arith.addf %205, %204 : vector<4x128xf32>
    %c1_217 = arith.constant 1 : index
    %c0_218 = arith.constant 0 : index
    %207 = vector.load %arg14[%c1_217, %c0_218] : memref<8x128xf32, #tpu.memory_space<vmem>>, vector<4x128xf32>
    %c1_219 = arith.constant 1 : index
    %c0_220 = arith.constant 0 : index
    %c0_221 = arith.constant 0 : index
    %208 = vector.load %arg6[%c1_219, %c0_220, %c0_221] : memref<5x128x128xf32, #tpu.memory_space<vmem>>, vector<1x128x128xf32>
    %209 = vector.shape_cast %208 : vector<1x128x128xf32> to vector<128x128xf32>
    %cst_222 = arith.constant dense<0.000000e+00> : vector<4x128xf32>
    %210 = tpu.matmul %207, %209, %cst_222 {dimension_numbers = #tpu.dot_dimension_numbers<[1], [0], [0], [1], [0, 0, 1, 1], [], []>} : vector<4x128xf32>, vector<128x128xf32>, vector<4x128xf32> -> vector<4x128xf32>
    %211 = arith.addf %206, %210 : vector<4x128xf32>
    %c2_223 = arith.constant 2 : index
    %c0_224 = arith.constant 0 : index
    %212 = vector.load %arg14[%c2_223, %c0_224] : memref<8x128xf32, #tpu.memory_space<vmem>>, vector<4x128xf32>
    %c2_225 = arith.constant 2 : index
    %c0_226 = arith.constant 0 : index
    %c0_227 = arith.constant 0 : index
    %213 = vector.load %arg6[%c2_225, %c0_226, %c0_227] : memref<5x128x128xf32, #tpu.memory_space<vmem>>, vector<1x128x128xf32>
    %214 = vector.shape_cast %213 : vector<1x128x128xf32> to vector<128x128xf32>
    %cst_228 = arith.constant dense<0.000000e+00> : vector<4x128xf32>
    %215 = tpu.matmul %212, %214, %cst_228 {dimension_numbers = #tpu.dot_dimension_numbers<[1], [0], [0], [1], [0, 0, 1, 1], [], []>} : vector<4x128xf32>, vector<128x128xf32>, vector<4x128xf32> -> vector<4x128xf32>
    %216 = arith.addf %211, %215 : vector<4x128xf32>
    %c3_229 = arith.constant 3 : index
    %c0_230 = arith.constant 0 : index
    %217 = vector.load %arg14[%c3_229, %c0_230] : memref<8x128xf32, #tpu.memory_space<vmem>>, vector<4x128xf32>
    %c3_231 = arith.constant 3 : index
    %c0_232 = arith.constant 0 : index
    %c0_233 = arith.constant 0 : index
    %218 = vector.load %arg6[%c3_231, %c0_232, %c0_233] : memref<5x128x128xf32, #tpu.memory_space<vmem>>, vector<1x128x128xf32>
    %219 = vector.shape_cast %218 : vector<1x128x128xf32> to vector<128x128xf32>
    %cst_234 = arith.constant dense<0.000000e+00> : vector<4x128xf32>
    %220 = tpu.matmul %217, %219, %cst_234 {dimension_numbers = #tpu.dot_dimension_numbers<[1], [0], [0], [1], [0, 0, 1, 1], [], []>} : vector<4x128xf32>, vector<128x128xf32>, vector<4x128xf32> -> vector<4x128xf32>
    %221 = arith.addf %216, %220 : vector<4x128xf32>
    %c4_235 = arith.constant 4 : index
    %c0_236 = arith.constant 0 : index
    %222 = vector.load %arg14[%c4_235, %c0_236] : memref<8x128xf32, #tpu.memory_space<vmem>>, vector<4x128xf32>
    %c4_237 = arith.constant 4 : index
    %c0_238 = arith.constant 0 : index
    %c0_239 = arith.constant 0 : index
    %223 = vector.load %arg6[%c4_237, %c0_238, %c0_239] : memref<5x128x128xf32, #tpu.memory_space<vmem>>, vector<1x128x128xf32>
    %224 = vector.shape_cast %223 : vector<1x128x128xf32> to vector<128x128xf32>
    %cst_240 = arith.constant dense<0.000000e+00> : vector<4x128xf32>
    %225 = tpu.matmul %222, %224, %cst_240 {dimension_numbers = #tpu.dot_dimension_numbers<[1], [0], [0], [1], [0, 0, 1, 1], [], []>} : vector<4x128xf32>, vector<128x128xf32>, vector<4x128xf32> -> vector<4x128xf32>
    %226 = arith.addf %221, %225 : vector<4x128xf32>
    %c0_241 = arith.constant 0 : index
    %c0_242 = arith.constant 0 : index
    %227 = vector.load %arg15[%c0_241, %c0_242] : memref<4x128xf32, #tpu.memory_space<vmem>>, vector<4x128xf32>
    tpu.vector_store %arg15[%c0_241, %c0_242], %226 {strides = array<i32>} : memref<4x128xf32, #tpu.memory_space<vmem>>, vector<4x128xf32>,
    %c0_243 = arith.constant 0 : index
    %c0_244 = arith.constant 0 : index
    %228 = tpu.strided_load %arg15[%c0_243, %c0_244] {strides = array<i32: 2, 1>} : memref<4x128xf32, #tpu.memory_space<vmem>>, vector<2x128xf32>
    %c1_245 = arith.constant 1 : index
    %c0_246 = arith.constant 0 : index
    %229 = tpu.strided_load %arg15[%c1_245, %c0_246] {strides = array<i32: 2, 1>} : memref<4x128xf32, #tpu.memory_space<vmem>>, vector<2x128xf32>
    %230 = arith.maximumf %228, %229 : vector<2x128xf32>
    %cst_247 = arith.constant 0.000000e+00 : f32
    %231 = vector.broadcast %cst_247 : f32 to vector<2x128xf32>
    %232 = arith.cmpf ogt, %230, %231 : vector<2x128xf32>
    %233 = math.exp %230 : vector<2x128xf32>
    %cst_248 = arith.constant 1.000000e+00 : f32
    %234 = vector.broadcast %cst_248 : f32 to vector<2x128xf32>
    %235 = arith.subf %233, %234 : vector<2x128xf32>
    %236 = arith.select %232, %230, %235 : vector<2x128xi1>, vector<2x128xf32>
    %237 = vector.extract_strided_slice %236 {offsets = [0, 0], sizes = [1, 128], strides = [1, 1]} : vector<2x128xf32> to vector<1x128xf32>
    %c1_249 = arith.constant 1 : index
    %c0_250 = arith.constant 0 : index
    %238 = vector.load %arg16[%c1_249, %c0_250] : memref<2x256xf32, #tpu.memory_space<vmem>>, vector<1x128xf32>
    tpu.vector_store %arg16[%c1_249, %c0_250], %237 {strides = array<i32>} : memref<2x256xf32, #tpu.memory_space<vmem>>, vector<1x128xf32>,
    %239 = vector.extract_strided_slice %236 {offsets = [1, 0], sizes = [1, 128], strides = [1, 1]} : vector<2x128xf32> to vector<1x128xf32>
    %c1_251 = arith.constant 1 : index
    %c128_252 = arith.constant 128 : index
    %240 = vector.load %arg16[%c1_251, %c128_252] : memref<2x256xf32, #tpu.memory_space<vmem>>, vector<1x128xf32>
    tpu.vector_store %arg16[%c1_251, %c128_252], %239 {strides = array<i32>} : memref<2x256xf32, #tpu.memory_space<vmem>>, vector<1x128xf32>,
    %c0_253 = arith.constant 0 : index
    %c0_254 = arith.constant 0 : index
    %241 = vector.load %arg16[%c0_253, %c0_254] : memref<2x256xf32, #tpu.memory_space<vmem>>, vector<2x256xf32>
    %c0_255 = arith.constant 0 : index
    %c0_256 = arith.constant 0 : index
    %242 = vector.load %arg8[%c0_255, %c0_256] : memref<256x128xf32, #tpu.memory_space<vmem>>, vector<256x128xf32>
    %cst_257 = arith.constant dense<0.000000e+00> : vector<2x128xf32>
    %243 = tpu.matmul %241, %242, %cst_257 {dimension_numbers = #tpu.dot_dimension_numbers<[1], [0], [0], [1], [0, 0, 1, 1], [], []>} : vector<2x256xf32>, vector<256x128xf32>, vector<2x128xf32> -> vector<2x128xf32>
    %c0_258 = arith.constant 0 : index
    %c0_259 = arith.constant 0 : index
    %244 = vector.load %arg9[%c0_258, %c0_259] : memref<1x128xf32, #tpu.memory_space<vmem>>, vector<1x128xf32>
    %245 = vector.broadcast %244 : vector<1x128xf32> to vector<2x128xf32>
    %246 = arith.addf %243, %245 : vector<2x128xf32>
    %c0_260 = arith.constant 0 : index
    %c0_261 = arith.constant 0 : index
    %c0_262 = arith.constant 0 : index
    %247 = vector.load %arg10[%c0_260, %c0_261, %c0_262] : memref<2x1x128xf32, #tpu.memory_space<vmem>>, vector<2x1x128xf32>
    %248 = vector.shape_cast %247 : vector<2x1x128xf32> to vector<2x128xf32>
    %249 = vector.shape_cast %246 : vector<2x128xf32> to vector<2x1x128xf32>
    tpu.vector_store %arg10[%c0_260, %c0_261, %c0_262], %249 {strides = array<i32>} : memref<2x1x128xf32, #tpu.memory_space<vmem>>, vector<2x1x128xf32>,
    return
  }
  func.func @transform_0(%arg0: i32) -> (i32, i32, i32) {
    %c0_i32 = arith.constant 0 : i32
    %c0_i32_0 = arith.constant 0 : i32
    %c0_i32_1 = arith.constant 0 : i32
    return %arg0, %c0_i32, %c0_i32_0 : i32, i32, i32
  }
  func.func @transform_1(%arg0: i32) -> (i32, i32, i32) {
    %c0_i32 = arith.constant 0 : i32
    %c0_i32_0 = arith.constant 0 : i32
    %c0_i32_1 = arith.constant 0 : i32
    %c0_i32_2 = arith.constant 0 : i32
    return %c0_i32, %c0_i32_0, %c0_i32_1 : i32, i32, i32
  }
  func.func @transform_2(%arg0: i32) -> (i32, i32) {
    %c0_i32 = arith.constant 0 : i32
    %c0_i32_0 = arith.constant 0 : i32
    %c0_i32_1 = arith.constant 0 : i32
    return %c0_i32, %c0_i32_0 : i32, i32
  }
  func.func @transform_3(%arg0: i32) -> (i32, i32, i32) {
    %c0_i32 = arith.constant 0 : i32
    %c0_i32_0 = arith.constant 0 : i32
    %c0_i32_1 = arith.constant 0 : i32
    %c0_i32_2 = arith.constant 0 : i32
    return %c0_i32, %c0_i32_0, %c0_i32_1 : i32, i32, i32
  }
  func.func @transform_4(%arg0: i32) -> (i32, i32) {
    %c0_i32 = arith.constant 0 : i32
    %c0_i32_0 = arith.constant 0 : i32
    %c0_i32_1 = arith.constant 0 : i32
    return %c0_i32, %c0_i32_0 : i32, i32
  }
  func.func @transform_5(%arg0: i32) -> (i32, i32, i32) {
    %c0_i32 = arith.constant 0 : i32
    %c0_i32_0 = arith.constant 0 : i32
    %c0_i32_1 = arith.constant 0 : i32
    %c0_i32_2 = arith.constant 0 : i32
    return %c0_i32, %c0_i32_0, %c0_i32_1 : i32, i32, i32
  }
  func.func @transform_6(%arg0: i32) -> (i32, i32) {
    %c0_i32 = arith.constant 0 : i32
    %c0_i32_0 = arith.constant 0 : i32
    %c0_i32_1 = arith.constant 0 : i32
    return %c0_i32, %c0_i32_0 : i32, i32
  }
  func.func @transform_7(%arg0: i32) -> (i32, i32) {
    %c0_i32 = arith.constant 0 : i32
    %c0_i32_0 = arith.constant 0 : i32
    %c0_i32_1 = arith.constant 0 : i32
    return %c0_i32, %c0_i32_0 : i32, i32
  }
  func.func @transform_8(%arg0: i32) -> (i32, i32) {
    %c0_i32 = arith.constant 0 : i32
    %c0_i32_0 = arith.constant 0 : i32
    %c0_i32_1 = arith.constant 0 : i32
    return %c0_i32, %c0_i32_0 : i32, i32
  }
  func.func @transform_9(%arg0: i32) -> (i32, i32, i32) {
    %c0_i32 = arith.constant 0 : i32
    %c0_i32_0 = arith.constant 0 : i32
    %c0_i32_1 = arith.constant 0 : i32
    return %arg0, %c0_i32, %c0_i32_0 : i32, i32, i32
  }
}

</mosaic_0001>

<llo_original>
// kernel: tpu_custom_call.1
$region0: #{tpu_custom_call.1}
  #allocation0 [shape = 'u32[]', space=smem, size = 0x4, offset = 0x4, fixed_abs, tag = 'smem constant byte address 0x4 - core index']
  #allocation1 [shape = 'u32[144,128]{1,0:T(1,128)}', space=vmem, size = 0x12000, scoped, tag = 'internal scratch']
  #allocation2 [shape = 'f32[40,128]{1,0:T(8,128)}', space=vmem, size = 0x5000, scoped, tag = 'scratch operand']
  #allocation3 [shape = 'f32[20,128]{1,0:T(8,128)}', space=vmem, size = 0x3000, scoped, tag = 'scratch operand']
  #allocation4 [shape = 'f32[16,128]{1,0:T(8,128)}', space=vmem, size = 0x2000, scoped, tag = 'scratch operand']
  #allocation5 [shape = 'f32[8,128]{1,0:T(8,128)}', space=vmem, size = 0x1000, scoped, tag = 'scratch operand']
  #allocation6 [shape = 'f32[4,128]{1,0:T(4,128)}', space=vmem, size = 0x800, scoped, tag = 'scratch operand']
  #allocation7 [shape = 'f32[2,256]{1,0:T(2,128)}', space=vmem, size = 0x800, scoped, tag = 'scratch operand']
  %s0 = inlined_call_operand.vmem [shape: f32[4,44,8], index: 0, kind: input, shape index: {}]
  %s1 = inlined_call_operand.vmem [shape: f32[5,8,128], index: 1, kind: input, shape index: {}]
  %s2 = inlined_call_operand.vmem [shape: f32[1,128], index: 2, kind: input, shape index: {}]
  %s3 = inlined_call_operand.hbm [shape: f32[5,128,128], index: 3, kind: input, shape index: {}]
  %s4 = inlined_call_operand.vmem [shape: f32[1,128], index: 4, kind: input, shape index: {}]
  %s5 = inlined_call_operand.hbm [shape: f32[5,128,128], index: 5, kind: input, shape index: {}]
  %s6 = inlined_call_operand.vmem [shape: f32[1,128], index: 6, kind: input, shape index: {}]
  %s7 = inlined_call_operand.hbm [shape: f32[256,128], index: 7, kind: input, shape index: {}]
  %s8 = inlined_call_operand.vmem [shape: f32[1,128], index: 8, kind: input, shape index: {}]
  %s9 = inlined_call_operand.hbm [shape: f32[4,1,128], index: 9, kind: output, shape index: {}]
  %s10 = sld [smem:[#allocation0]]
  $region81: #{tpu_custom_call.1} parent=0
    _
  %s12 = ssub.s32 1, %s10
  %s13 = scalar_select 0, %s12, %s10
  $region1: #{tpu_custom_call.1} parent=0
    #allocation8 [shape = 'u8[327680]{0}', space=vmem, size = 0x50000, scoped, tag = 'input window, operand 3, single buffered']
    #allocation9 [shape = 's32[2]{0}', space=sflag, size = 0x8, scoped, tag = 'scoped memory for tpu_custom_call.1']
    #allocation10 [shape = 's32[2]{0}', space=sflag, size = 0x8, scoped, tag = 'scoped memory for tpu_custom_call.1']
    #allocation11 [shape = 'u8[327680]{0}', space=vmem, size = 0x50000, scoped, tag = 'input window, operand 5, single buffered']
    #allocation12 [shape = 's32[1]{0}', space=sflag, size = 0x4, scoped, tag = 'scoped memory for tpu_custom_call.1']
    #allocation13 [shape = 'u8[131072]{0}', space=vmem, size = 0x20000, scoped, tag = 'input window, operand 7, single buffered']
    #allocation14 [shape = 'u8[2048]{0}', space=vmem, size = 0x800, scoped, tag = 'output window, operand 0']
    %14 = vsyncpa [#allocation9], 0
    %15 = vsyncpa [#allocation12], 0
    %16 = vsyncpa [#allocation10], 0
    %s17 = scalar_lea.sflag [#allocation10], 1
    %18 = vsyncpa %s17, 0
    loop: start=0, step=1, limit=4
    $region2: #{tpu_custom_call.1} parent=1 // loop_pre_header
      _
    $region3: #{tpu_custom_call.1} parent=1 // loop_header
      %s20 = sphi 0, %s24
      %p21 = scmp.ge.s32.totalorder %s20, 4
      %s30 = sphi 0, %s32
      %s33 = sphi 0, %s30
      %s34 = sphi 0, %s33
      %s50 = sphi 0, %s34
      %s54 = sphi 0, %s54
      %s56 = sphi 0, %s54
      %s57 = sphi 0, %s56
      %s71 = sphi 0, %s57
      %s75 = sphi 0, %s75
      %s77 = sphi 0, %s75
      %s78 = sphi 0, %s77
      %s92 = sphi 0, %s78
      %s96 = sphi 0, %s96
      %s98 = sphi 0, %s96
      %s99 = sphi 0, %s98
      %s113 = sphi 0, %s99
      %s117 = sphi 0, %s117
      %s119 = sphi 0, %s117
      %s120 = sphi 0, %s119
      %s134 = sphi 0, %s120
      %s138 = sphi 0, %s138
      %s140 = sphi 0, %s138
      %s141 = sphi 0, %s140
      %s155 = sphi 0, %s141
      %s159 = sphi 0, %s159
      %s161 = sphi 0, %s159
      %s162 = sphi 0, %s161
      %s176 = sphi 0, %s162
      %s180 = sphi 0, %s180
      %s182 = sphi 0, %s180
      %s183 = sphi 0, %s182
      %s197 = sphi 0, %s183
      %s201 = sphi 0, %s201
      %s203 = sphi 0, %s201
      %s204 = sphi 0, %s203
      %s218 = sphi 0, %s204
      %s224 = sphi 0, %s226
      %s227 = sphi 0, %s224
      %s228 = sphi 0, %s227
      %s244 = sphi 0, %s228
    $region4: #{tpu_custom_call.1} parent=1 // loop_header_branch
      %23 = sbr.rel (%p21) target = $region8
    $region5: #{tpu_custom_call.1} parent=1 // loop_body
      %s25 = ssub.s32 %s20, 1
      %s26 = ssub.s32 %s20, 2
      %s27 = sadd.s32 %s20, 1
      %s28 = ssub.s32 %s20, %s27
      %p29 = scmp.eq.s32.totalorder %s28, 0
      %s31 = sadd.s32 %s30, 1
      %s32 = scalar_select %p29, %s30, %s31
      %p35 = pneg %p29
      %p36 = scmp.eq.s32.totalorder %s20, 1
      %p37 = por %p35, %p36
      %p38 = scmp.ne.s32.totalorder %s30, %s33
      %p39 = scmp.eq.s32.totalorder %s20, 0
      %p40 = por %p38, %p39
      %p41 = scmp.ne.s32.totalorder %s30, %s33
      %p42 = scmp.eq.s32.totalorder %s25, 1
      %p43 = por %p41, %p42
      %p44 = scmp.ne.s32.totalorder %s33, %s34
      %p45 = scmp.eq.s32.totalorder %s25, 0
      %p46 = por %p44, %p45
      %p47 = scmp.ne.s32.totalorder %s33, %s34
      %p48 = scmp.eq.s32.totalorder %s26, 1
      %p49 = por %p47, %p48
      %p51 = scmp.ne.s32.totalorder %s34, %s50
      %p52 = scmp.eq.s32.totalorder %s26, 0
      %p53 = por %p51, %p52
      %s55 = sadd.s32 %s54, 1
      %p58 = scmp.eq.s32.totalorder %s20, 1
      %p59 = scmp.ne.s32.totalorder %s54, %s56
      %p60 = scmp.eq.s32.totalorder %s20, 0
      %p61 = por %p59, %p60
      %p62 = scmp.ne.s32.totalorder %s54, %s56
      %p63 = scmp.eq.s32.totalorder %s25, 1
      %p64 = por %p62, %p63
      %p65 = scmp.ne.s32.totalorder %s56, %s57
      %p66 = scmp.eq.s32.totalorder %s25, 0
      %p67 = por %p65, %p66
      %p68 = scmp.ne.s32.totalorder %s56, %s57
      %p69 = scmp.eq.s32.totalorder %s26, 1
      %p70 = por %p68, %p69
      %p72 = scmp.ne.s32.totalorder %s57, %s71
      %p73 = scmp.eq.s32.totalorder %s26, 0
      %p74 = por %p72, %p73
      %s76 = sadd.s32 %s75, 1
      %p79 = scmp.eq.s32.totalorder %s20, 1
      %p80 = scmp.ne.s32.totalorder %s75, %s77
      %p81 = scmp.eq.s32.totalorder %s20, 0
      %p82 = por %p80, %p81
      %p83 = scmp.ne.s32.totalorder %s75, %s77
      %p84 = scmp.eq.s32.totalorder %s25, 1
      %p85 = por %p83, %p84
      %p86 = scmp.ne.s32.totalorder %s77, %s78
      %p87 = scmp.eq.s32.totalorder %s25, 0
      %p88 = por %p86, %p87
      %p89 = scmp.ne.s32.totalorder %s77, %s78
      %p90 = scmp.eq.s32.totalorder %s26, 1
      %p91 = por %p89, %p90
      %p93 = scmp.ne.s32.totalorder %s78, %s92
      %p94 = scmp.eq.s32.totalorder %s26, 0
      %p95 = por %p93, %p94
      %s97 = sadd.s32 %s96, 1
      %p100 = scmp.eq.s32.totalorder %s20, 1
      %p101 = scmp.ne.s32.totalorder %s96, %s98
      %p102 = scmp.eq.s32.totalorder %s20, 0
      %p103 = por %p101, %p102
      %p104 = scmp.ne.s32.totalorder %s96, %s98
      %p105 = scmp.eq.s32.totalorder %s25, 1
      %p106 = por %p104, %p105
      %p107 = scmp.ne.s32.totalorder %s98, %s99
      %p108 = scmp.eq.s32.totalorder %s25, 0
      %p109 = por %p107, %p108
      %p110 = scmp.ne.s32.totalorder %s98, %s99
      %p111 = scmp.eq.s32.totalorder %s26, 1
      %p112 = por %p110, %p111
      %p114 = scmp.ne.s32.totalorder %s99, %s113
      %p115 = scmp.eq.s32.totalorder %s26, 0
      %p116 = por %p114, %p115
      %s118 = sadd.s32 %s117, 1
      %p121 = scmp.eq.s32.totalorder %s20, 1
      %p122 = scmp.ne.s32.totalorder %s117, %s119
      %p123 = scmp.eq.s32.totalorder %s20, 0
      %p124 = por %p122, %p123
      %p125 = scmp.ne.s32.totalorder %s117, %s119
      %p126 = scmp.eq.s32.totalorder %s25, 1
      %p127 = por %p125, %p126
      %p128 = scmp.ne.s32.totalorder %s119, %s120
      %p129 = scmp.eq.s32.totalorder %s25, 0
      %p130 = por %p128, %p129
      %p131 = scmp.ne.s32.totalorder %s119, %s120
      %p132 = scmp.eq.s32.totalorder %s26, 1
      %p133 = por %p131, %p132
      %p135 = scmp.ne.s32.totalorder %s120, %s134
      %p136 = scmp.eq.s32.totalorder %s26, 0
      %p137 = por %p135, %p136
      %s139 = sadd.s32 %s138, 1
      %p142 = scmp.eq.s32.totalorder %s20, 1
      %p143 = scmp.ne.s32.totalorder %s138, %s140
      %p144 = scmp.eq.s32.totalorder %s20, 0
      %p145 = por %p143, %p144
      %p146 = scmp.ne.s32.totalorder %s138, %s140
      %p147 = scmp.eq.s32.totalorder %s25, 1
      %p148 = por %p146, %p147
      %p149 = scmp.ne.s32.totalorder %s140, %s141
      %p150 = scmp.eq.s32.totalorder %s25, 0
      %p151 = por %p149, %p150
      %p152 = scmp.ne.s32.totalorder %s140, %s141
      %p153 = scmp.eq.s32.totalorder %s26, 1
      %p154 = por %p152, %p153
      %p156 = scmp.ne.s32.totalorder %s141, %s155
      %p157 = scmp.eq.s32.totalorder %s26, 0
      %p158 = por %p156, %p157
      %s160 = sadd.s32 %s159, 1
      %p163 = scmp.eq.s32.totalorder %s20, 1
      %p164 = scmp.ne.s32.totalorder %s159, %s161
      %p165 = scmp.eq.s32.totalorder %s20, 0
      %p166 = por %p164, %p165
      %p167 = scmp.ne.s32.totalorder %s159, %s161
      %p168 = scmp.eq.s32.totalorder %s25, 1
      %p169 = por %p167, %p168
      %p170 = scmp.ne.s32.totalorder %s161, %s162
      %p171 = scmp.eq.s32.totalorder %s25, 0
      %p172 = por %p170, %p171
      %p173 = scmp.ne.s32.totalorder %s161, %s162
      %p174 = scmp.eq.s32.totalorder %s26, 1
      %p175 = por %p173, %p174
      %p177 = scmp.ne.s32.totalorder %s162, %s176
      %p178 = scmp.eq.s32.totalorder %s26, 0
      %p179 = por %p177, %p178
      %s181 = sadd.s32 %s180, 1
      %p184 = scmp.eq.s32.totalorder %s20, 1
      %p185 = scmp.ne.s32.totalorder %s180, %s182
      %p186 = scmp.eq.s32.totalorder %s20, 0
      %p187 = por %p185, %p186
      %p188 = scmp.ne.s32.totalorder %s180, %s182
      %p189 = scmp.eq.s32.totalorder %s25, 1
      %p190 = por %p188, %p189
      %p191 = scmp.ne.s32.totalorder %s182, %s183
      %p192 = scmp.eq.s32.totalorder %s25, 0
      %p193 = por %p191, %p192
      %p194 = scmp.ne.s32.totalorder %s182, %s183
      %p195 = scmp.eq.s32.totalorder %s26, 1
      %p196 = por %p194, %p195
      %p198 = scmp.ne.s32.totalorder %s183, %s197
      %p199 = scmp.eq.s32.totalorder %s26, 0
      %p200 = por %p198, %p199
      %s202 = sadd.s32 %s201, 1
      %p205 = scmp.eq.s32.totalorder %s20, 1
      %p206 = scmp.ne.s32.totalorder %s201, %s203
      %p207 = scmp.eq.s32.totalorder %s20, 0
      %p208 = por %p206, %p207
      %p209 = scmp.ne.s32.totalorder %s201, %s203
      %p210 = scmp.eq.s32.totalorder %s25, 1
      %p211 = por %p209, %p210
      %p212 = scmp.ne.s32.totalorder %s203, %s204
      %p213 = scmp.eq.s32.totalorder %s25, 0
      %p214 = por %p212, %p213
      %p215 = scmp.ne.s32.totalorder %s203, %s204
      %p216 = scmp.eq.s32.totalorder %s26, 1
      %p217 = por %p215, %p216
      %p219 = scmp.ne.s32.totalorder %s204, %s218
      %p220 = scmp.eq.s32.totalorder %s26, 0
      %p221 = por %p219, %p220
      %s222 = ssub.s32 %s20, %s27
      %p223 = scmp.eq.s32.totalorder %s222, 0
      %s225 = sadd.s32 %s224, 1
      %s226 = scalar_select %p223, %s224, %s225
      %p229 = pneg %p223
      %p230 = scmp.eq.s32.totalorder %s20, 1
      %p231 = por %p229, %p230
      %p232 = scmp.ne.s32.totalorder %s224, %s227
      %p233 = scmp.eq.s32.totalorder %s20, 0
      %p234 = por %p232, %p233
      %p235 = scmp.ne.s32.totalorder %s224, %s227
      %p236 = scmp.eq.s32.totalorder %s25, 1
      %p237 = por %p235, %p236
      %p238 = scmp.ne.s32.totalorder %s227, %s228
      %p239 = scmp.eq.s32.totalorder %s25, 0
      %p240 = por %p238, %p239
      %p241 = scmp.ne.s32.totalorder %s227, %s228
      %p242 = scmp.eq.s32.totalorder %s26, 1
      %p243 = por %p241, %p242
      %p245 = scmp.ne.s32.totalorder %s228, %s244
      %p246 = scmp.eq.s32.totalorder %s26, 0
      %p247 = por %p245, %p246
      %p248 = scmp.le.s32.totalorder 1, %s20
      %p249 = scmp.lt.s32.totalorder %s20, 3
      %p250 = pnand %p248, %p249
      %p251 = pneg %p250
      // Predicated region
      $region9: #{tpu_custom_call.1} parent=5 // pred_check
        _
      $region10: #{tpu_custom_call.1} parent=5 // pred_check_branch
        %253 = sbr.rel (%p250) target = $region12
      $region11: #{tpu_custom_call.1} parent=5 // pred_region
        %s254 = ssub.s32 %s20, 1
        // Predicated region
        $region13: #{tpu_custom_call.1} parent=11 // pred_check
          %p255 = pneg %p67
        $region14: #{tpu_custom_call.1} parent=11 // pred_check_branch
          %257 = sbr.rel (%p255) target = $region16
        $region15: #{tpu_custom_call.1} parent=11 // pred_region
          _
        $region16: #{tpu_custom_call.1} parent=11 // pred_fallthru
          _
        // Predicated region
        $region17: #{tpu_custom_call.1} parent=11 // pred_check
          %p258 = pneg %p88
        $region18: #{tpu_custom_call.1} parent=11 // pred_check_branch
          %260 = sbr.rel (%p258) target = $region20
        $region19: #{tpu_custom_call.1} parent=11 // pred_region
          _
        $region20: #{tpu_custom_call.1} parent=11 // pred_fallthru
          _
        // Predicated region
        $region21: #{tpu_custom_call.1} parent=11 // pred_check
          %p261 = pneg %p109
        $region22: #{tpu_custom_call.1} parent=11 // pred_check_branch
          %263 = sbr.rel (%p261) target = $region24
        $region23: #{tpu_custom_call.1} parent=11 // pred_region
          %s265 = ssub.s32 10240, 10240
          %266 = vsyncadd [#allocation9], %s265
          %s267 = sshll.u32 [#allocation8], 4
          %s268 = int_to_ptr.vmem [resolvable:$true] %s267
          %273 = dma.hbm_to_vmem [thread:$0]  %s3, 10240, %s268, [#allocation9], 128, 128, 8
        $region24: #{tpu_custom_call.1} parent=11 // pred_fallthru
          _
        // Predicated region
        $region25: #{tpu_custom_call.1} parent=11 // pred_check
          %p274 = pneg %p130
        $region26: #{tpu_custom_call.1} parent=11 // pred_check_branch
          %276 = sbr.rel (%p274) target = $region28
        $region27: #{tpu_custom_call.1} parent=11 // pred_region
          _
        $region28: #{tpu_custom_call.1} parent=11 // pred_fallthru
          _
        // Predicated region
        $region29: #{tpu_custom_call.1} parent=11 // pred_check
          %p277 = pneg %p151
        $region30: #{tpu_custom_call.1} parent=11 // pred_check_branch
          %279 = sbr.rel (%p277) target = $region32
        $region31: #{tpu_custom_call.1} parent=11 // pred_region
          %s281 = ssub.s32 10240, 10240
          %282 = vsyncadd [#allocation12], %s281
          %s283 = sshll.u32 [#allocation11], 4
          %s284 = int_to_ptr.vmem [resolvable:$true] %s283
          %289 = dma.hbm_to_vmem [thread:$0]  %s5, 10240, %s284, [#allocation12], 128, 128, 8
        $region32: #{tpu_custom_call.1} parent=11 // pred_fallthru
          _
        // Predicated region
        $region33: #{tpu_custom_call.1} parent=11 // pred_check
          %p290 = pneg %p172
        $region34: #{tpu_custom_call.1} parent=11 // pred_check_branch
          %292 = sbr.rel (%p290) target = $region36
        $region35: #{tpu_custom_call.1} parent=11 // pred_region
          _
        $region36: #{tpu_custom_call.1} parent=11 // pred_fallthru
          _
        // Predicated region
        $region37: #{tpu_custom_call.1} parent=11 // pred_check
          %p293 = pneg %p193
        $region38: #{tpu_custom_call.1} parent=11 // pred_check_branch
          %295 = sbr.rel (%p293) target = $region40
        $region39: #{tpu_custom_call.1} parent=11 // pred_region
          %s297 = ssub.s32 4096, 4096
          %298 = vsyncadd [#allocation12], %s297
          %s299 = sshll.u32 [#allocation13], 4
          %s300 = int_to_ptr.vmem [resolvable:$true] %s299
          %305 = dma.hbm_to_vmem [thread:$0]  %s7, 4096, %s300, [#allocation12], 128, 128, 8
        $region40: #{tpu_custom_call.1} parent=11 // pred_fallthru
          _
        // Predicated region
        $region41: #{tpu_custom_call.1} parent=11 // pred_check
          %p306 = pneg %p214
        $region42: #{tpu_custom_call.1} parent=11 // pred_check_branch
          %308 = sbr.rel (%p306) target = $region44
        $region43: #{tpu_custom_call.1} parent=11 // pred_region
          _
        $region44: #{tpu_custom_call.1} parent=11 // pred_fallthru
          _
      $region12: #{tpu_custom_call.1} parent=5 // pred_fallthru
        _
      %p309 = scmp.lt.s32.totalorder %s20, 2
      // Predicated region
      $region45: #{tpu_custom_call.1} parent=5 // pred_check
        %p310 = pneg %p309
      $region46: #{tpu_custom_call.1} parent=5 // pred_check_branch
        %312 = sbr.rel (%p310) target = $region48
      $region47: #{tpu_custom_call.1} parent=5 // pred_region
        // Predicated region
        $region49: #{tpu_custom_call.1} parent=47 // pred_check
          %p313 = pneg %p40
        $region50: #{tpu_custom_call.1} parent=47 // pred_check_branch
          %315 = sbr.rel (%p313) target = $region52
        $region51: #{tpu_custom_call.1} parent=47 // pred_region
          %s316 = smul.u32 2, %s20
          %p317 = scmp.lt.s32.totalorder %s316, 3
          %s318 = scalar_select %p317, %s316, 3
          %s319 = smul.addr %s318, 6
          %s320 = smul.addr %s319, 8
          %s321 = scalar_lea.vmem %s0, %s320
          %s322 = smul.u32 2, %s20
        $region52: #{tpu_custom_call.1} parent=47 // pred_fallthru
          _
      $region48: #{tpu_custom_call.1} parent=5 // pred_fallthru
        _
      %p323 = scmp.le.s32.totalorder 1, %s20
      %p324 = scmp.lt.s32.totalorder %s20, 3
      %p325 = pnand %p323, %p324
      %p326 = pneg %p325
      // Predicated region
      $region53: #{tpu_custom_call.1} parent=5 // pred_check
        _
      $region54: #{tpu_custom_call.1} parent=5 // pred_check_branch
        %328 = sbr.rel (%p325) target = $region56
      $region55: #{tpu_custom_call.1} parent=5 // pred_region
        %s329 = ssub.s32 %s20, 1
        // Predicated region
        $region57: #{tpu_custom_call.1} parent=55 // pred_check
          %p330 = pneg %p109
        $region58: #{tpu_custom_call.1} parent=55 // pred_check_branch
          %332 = sbr.rel (%p330) target = $region60
        $region59: #{tpu_custom_call.1} parent=55 // pred_region
          %333 = dma.done [#allocation9], 10240
        $region60: #{tpu_custom_call.1} parent=55 // pred_fallthru
          _
        // Predicated region
        $region61: #{tpu_custom_call.1} parent=55 // pred_check
          %p334 = pneg %p151
        $region62: #{tpu_custom_call.1} parent=55 // pred_check_branch
          %336 = sbr.rel (%p334) target = $region64
        $region63: #{tpu_custom_call.1} parent=55 // pred_region
          %337 = dma.done [#allocation12], 10240
        $region64: #{tpu_custom_call.1} parent=55 // pred_fallthru
          _
        // Predicated region
        $region65: #{tpu_custom_call.1} parent=55 // pred_check
          %p338 = pneg %p193
        $region66: #{tpu_custom_call.1} parent=55 // pred_check_branch
          %340 = sbr.rel (%p338) target = $region68
        $region67: #{tpu_custom_call.1} parent=55 // pred_region
          %341 = dma.done [#allocation12], 4096
        $region68: #{tpu_custom_call.1} parent=55 // pred_fallthru
          _
        %s342 = smul.u32 2, %s25
        %p343 = scmp.lt.s32.totalorder %s342, 3
        %s344 = scalar_select %p343, %s342, 3
        %s345 = smul.addr %s344, 6
        %s346 = smul.addr %s345, 8
        %s347 = scalar_lea.vmem %s0, %s346
        %p348 = pneg %p46
        %p349 = pneg %p43
        %p350 = pneg %p67
        %p351 = pneg %p64
        %p352 = pneg %p88
        %p353 = pneg %p85
        %p354 = pneg %p109
        %p355 = pneg %p106
        %p356 = pneg %p130
        %p357 = pneg %p127
        %p358 = pneg %p151
        %p359 = pneg %p148
        %p360 = pneg %p172
        %p361 = pneg %p169
        %p362 = pneg %p193
        %p363 = pneg %p190
        %p364 = pneg %p214
        %p365 = pneg %p211
        %p366 = pneg %p240
        %p367 = pneg %p237
        %s368 = sand.u32 %s227, 1
        %s369 = scalar_lea.sflag [#allocation10], %s368
        %s370 = sand.u32 %s227, 1
        %s371 = smul.addr %s370, 2
        %s372 = scalar_lea.vmem [#allocation14], %s371
        %s373 = smul.u32 2, %s25
        %p374 = scmp.lt.s32.totalorder %s373, 3
        %s375 = scalar_select %p374, %s373, 3
        %s376 = smul.addr %s375, 6
        %s377 = smul.addr %s376, 8
        %s378 = scalar_lea.vmem %s0, %s377
        %s379 = smul.u32 2, %s25
        %s380 = smul.u32 2, %s25
        %v381 = vld [vmem:[%s2] sm:$0x1]
        %v382 = vld [vmem:[%s4] sm:$0x1]
        %v383 = vld [vmem:[%s6] sm:$0x1]
        %v384 = vld [vmem:[%s378] sm:$0xff]
        %v385 = vld [vmem:[%s378 + $0x8] sm:$0xff]
        %v386 = vld [vmem:[%s378 + $0x10] sm:$0xff]
        %v387 = vld [vmem:[%s378 + $0x18] sm:$0xff]
        %v388 = vld [vmem:[%s378 + $0x20] sm:$0xff]
        %v389 = vld [vmem:[%s1] sm:$0xff]
        %vm390 = vcmask 64512
        %v392 = vsel %vm390, %v384, 0
        %v395 = vsel %vm390, %v385, 0
        %v398 = vsel %vm390, %v386, 0
        %v401 = vsel %vm390, %v387, 0
        %v404 = vsel %vm390, %v388, 0
        %406 = vmatprep.subr.mxu0 0.0
        %407 = vmatpush1.msra.mxu0 %v389
        %408 = vmatprep.subr.mxu0 0.0
        %409 = vmatpush1.msra.mxu0 0.0
        %410 = vmatprep.subr.mxu0 0.0
        %411 = vmatpush1.msra.mxu0 0.0
        %412 = vmatprep.subr.mxu0 0.0
        %413 = vmatpush1.msra.mxu0 0.0
        %414 = vmatprep.subr.mxu0 0.0
        %415 = vmatpush1.msra.mxu0 0.0
        %416 = vmatprep.subr.mxu0 0.0
        %417 = vmatpush1.msra.mxu0 0.0
        %418 = vmatprep.subr.mxu0 0.0
        %419 = vmatpush1.msra.mxu0 0.0
        %420 = vmatprep.subr.mxu0 0.0
        %421 = vmatpush1.msra.mxu0 0.0
        %422 = vmatprep.subr.mxu0 0.0
        %423 = vmatpush1.msra.mxu0 0.0
        %424 = vmatprep.subr.mxu0 0.0
        %425 = vmatpush1.msra.mxu0 0.0
        %426 = vmatprep.subr.mxu0 0.0
        %427 = vmatpush1.msra.mxu0 0.0
        %428 = vmatprep.subr.mxu0 0.0
        %429 = vmatpush1.msra.mxu0 0.0
        %430 = vmatprep.subr.mxu0 0.0
        %431 = vmatpush1.msra.mxu0 0.0
        %432 = vmatprep.subr.mxu0 0.0
        %433 = vmatpush1.msra.mxu0 0.0
        %434 = vmatprep.subr.mxu0 0.0
        %435 = vmatpush1.msra.mxu0 0.0
        %436 = vmatprep.subr.mxu0 0.0
        %437 = vmatpush1.msra.mxu0 0.0
        %438 = vmatprep.subr.mxu0 0.0
        %439 = vmatpush1.msra.mxu0 0.0
        %440 = vmatprep.subr.mxu0 0.0
        %441 = vmatpush1.msra.mxu0 0.0
        %442 = vmatprep.subr.mxu0 0.0
        %443 = vmatpush1.msra.mxu0 0.0
        %444 = vmatprep.subr.mxu0 0.0
        %445 = vmatpush1.msra.mxu0 0.0
        %446 = vmatprep.subr.mxu0 0.0
        %447 = vmatpush1.msra.mxu0 0.0
        %448 = vmatprep.subr.mxu0 0.0
        %449 = vmatpush1.msra.mxu0 0.0
        %450 = vmatprep.subr.mxu0 0.0
        %451 = vmatpush1.msra.mxu0 0.0
        %452 = vmatprep.subr.mxu0 0.0
        %453 = vmatpush1.msra.mxu0 0.0
        %454 = vmatprep.subr.mxu0 0.0
        %455 = vmatpush1.msra.mxu0 0.0
        %456 = vmatprep.subr.mxu0 0.0
        %457 = vmatpush1.msra.mxu0 0.0
        %458 = vmatprep.subr.mxu0 0.0
        %459 = vmatpush1.msra.mxu0 0.0
        %460 = vmatprep.subr.mxu0 0.0
        %461 = vmatpush1.msra.mxu0 0.0
        %462 = vmatprep.subr.mxu0 0.0
        %463 = vmatpush1.msra.mxu0 0.0
        %464 = vmatprep.subr.mxu0 0.0
        %465 = vmatpush1.msra.mxu0 0.0
        %466 = vmatprep.subr.mxu0 0.0
        %467 = vmatpush1.msra.mxu0 0.0
        %468 = vmatprep.subr.mxu0 0.0
        %469 = vmatpush1.msra.mxu0 0.0
        %470 = vmatprep.mubr.f32.mxu0 0.0
        %471 = vmatmul.mubr.f32.gmra.mrb[0].mxu0 %v392
        %v472 = vpop.f32.mrb[0].mxu0
        %v473 = vadd.f32 0.0, %v472
        %v474 = vpop.f32.mrb[0].mxu0
        %475 = vmatprep.mubr.f32.mxu0 0.0
        %476 = vmatmul.mubr.f32.gmra.mrb[0].mxu0 %v395
        %v477 = vpop.f32.mrb[0].mxu0
        %v478 = vadd.f32 0.0, %v477
        %v479 = vpop.f32.mrb[0].mxu0
        %480 = vmatprep.mubr.f32.mxu0 0.0
        %481 = vmatmul.mubr.f32.gmra.mrb[0].mxu0 %v398
        %v482 = vpop.f32.mrb[0].mxu0
        %v483 = vadd.f32 0.0, %v482
        %v484 = vpop.f32.mrb[0].mxu0
        %485 = vmatprep.mubr.f32.mxu0 0.0
        %486 = vmatmul.mubr.f32.gmra.mrb[0].mxu0 %v401
        %v487 = vpop.f32.mrb[0].mxu0
        %v488 = vadd.f32 0.0, %v487
        %v489 = vpop.f32.mrb[0].mxu0
        %490 = vmatprep.mubr.f32.mxu0 0.0
        %491 = vmatmul.mubr.f32.gmra.mrb[0].mxu0 %v404
        %v492 = vpop.f32.mrb[0].mxu0
        %v493 = vadd.f32 0.0, %v492
        %v494 = vpop.f32.mrb[0].mxu0
        %495 = vdwg.mxu0
        %v497 = vlaneseq
        %v498 = vshrl.u32 %v497, 7
        %v499 = vsub.s32 0, %v498
        %v500 = vrot.slane %v381, %v499
        %v502 = vadd.f32 %v500, %v473
        %v503 = vadd.f32 %v500, %v478
        %v504 = vadd.f32 %v500, %v483
        %v505 = vadd.f32 %v500, %v488
        %v506 = vadd.f32 %v500, %v493
        %v507 = vld [vmem:[%s378 + $0x1] sm:$0xff]
        %v508 = vld [vmem:[%s378 + $0x9] sm:$0xff]
        %v509 = vld [vmem:[%s378 + $0x11] sm:$0xff]
        %v510 = vld [vmem:[%s378 + $0x19] sm:$0xff]
        %v511 = vld [vmem:[%s378 + $0x21] sm:$0xff]
        %s512 = scalar_lea.vmem %s1, 8
        %v513 = vld [vmem:[%s512] sm:$0xff]
        %v515 = vsel %vm390, %v507, 0
        %v518 = vsel %vm390, %v508, 0
        %v521 = vsel %vm390, %v509, 0
        %v524 = vsel %vm390, %v510, 0
        %v527 = vsel %vm390, %v511, 0
        %529 = vmatprep.subr.mxu0 0.0
        %530 = vmatpush1.msra.mxu0 %v513
        %531 = vmatprep.subr.mxu0 0.0
        %532 = vmatpush1.msra.mxu0 0.0
        %533 = vmatprep.subr.mxu0 0.0
        %534 = vmatpush1.msra.mxu0 0.0
        %535 = vmatprep.subr.mxu0 0.0
        %536 = vmatpush1.msra.mxu0 0.0
        %537 = vmatprep.subr.mxu0 0.0
        %538 = vmatpush1.msra.mxu0 0.0
        %539 = vmatprep.subr.mxu0 0.0
        %540 = vmatpush1.msra.mxu0 0.0
        %541 = vmatprep.subr.mxu0 0.0
        %542 = vmatpush1.msra.mxu0 0.0
        %543 = vmatprep.subr.mxu0 0.0
        %544 = vmatpush1.msra.mxu0 0.0
        %545 = vmatprep.subr.mxu0 0.0
        %546 = vmatpush1.msra.mxu0 0.0
        %547 = vmatprep.subr.mxu0 0.0
        %548 = vmatpush1.msra.mxu0 0.0
        %549 = vmatprep.subr.mxu0 0.0
        %550 = vmatpush1.msra.mxu0 0.0
        %551 = vmatprep.subr.mxu0 0.0
        %552 = vmatpush1.msra.mxu0 0.0
        %553 = vmatprep.subr.mxu0 0.0
        %554 = vmatpush1.msra.mxu0 0.0
        %555 = vmatprep.subr.mxu0 0.0
        %556 = vmatpush1.msra.mxu0 0.0
        %557 = vmatprep.subr.mxu0 0.0
        %558 = vmatpush1.msra.mxu0 0.0
        %559 = vmatprep.subr.mxu0 0.0
        %560 = vmatpush1.msra.mxu0 0.0
        %561 = vmatprep.subr.mxu0 0.0
        %562 = vmatpush1.msra.mxu0 0.0
        %563 = vmatprep.subr.mxu0 0.0
        %564 = vmatpush1.msra.mxu0 0.0
        %565 = vmatprep.subr.mxu0 0.0
        %566 = vmatpush1.msra.mxu0 0.0
        %567 = vmatprep.subr.mxu0 0.0
        %568 = vmatpush1.msra.mxu0 0.0
        %569 = vmatprep.subr.mxu0 0.0
        %570 = vmatpush1.msra.mxu0 0.0
        %571 = vmatprep.subr.mxu0 0.0
        %572 = vmatpush1.msra.mxu0 0.0
        %573 = vmatprep.subr.mxu0 0.0
        %574 = vmatpush1.msra.mxu0 0.0
        %575 = vmatprep.subr.mxu0 0.0
        %576 = vmatpush1.msra.mxu0 0.0
        %577 = vmatprep.subr.mxu0 0.0
        %578 = vmatpush1.msra.mxu0 0.0
        %579 = vmatprep.subr.mxu0 0.0
        %580 = vmatpush1.msra.mxu0 0.0
        %581 = vmatprep.subr.mxu0 0.0
        %582 = vmatpush1.msra.mxu0 0.0
        %583 = vmatprep.subr.mxu0 0.0
        %584 = vmatpush1.msra.mxu0 0.0
        %585 = vmatprep.subr.mxu0 0.0
        %586 = vmatpush1.msra.mxu0 0.0
        %587 = vmatprep.subr.mxu0 0.0
        %588 = vmatpush1.msra.mxu0 0.0
        %589 = vmatprep.subr.mxu0 0.0
        %590 = vmatpush1.msra.mxu0 0.0
        %591 = vmatprep.subr.mxu0 0.0
        %592 = vmatpush1.msra.mxu0 0.0
        %593 = vmatprep.mubr.f32.mxu0 0.0
        %594 = vmatmul.mubr.f32.gmra.mrb[0].mxu0 %v515
        %v595 = vpop.f32.mrb[0].mxu0
        %v596 = vadd.f32 0.0, %v595
        %v597 = vpop.f32.mrb[0].mxu0
        %598 = vmatprep.mubr.f32.mxu0 0.0
        %599 = vmatmul.mubr.f32.gmra.mrb[0].mxu0 %v518
        %v600 = vpop.f32.mrb[0].mxu0
        %v601 = vadd.f32 0.0, %v600
        %v602 = vpop.f32.mrb[0].mxu0
        %603 = vmatprep.mubr.f32.mxu0 0.0
        %604 = vmatmul.mubr.f32.gmra.mrb[0].mxu0 %v521
        %v605 = vpop.f32.mrb[0].mxu0
        %v606 = vadd.f32 0.0, %v605
        %v607 = vpop.f32.mrb[0].mxu0
        %608 = vmatprep.mubr.f32.mxu0 0.0
        %609 = vmatmul.mubr.f32.gmra.mrb[0].mxu0 %v524
        %v610 = vpop.f32.mrb[0].mxu0
        %v611 = vadd.f32 0.0, %v610
        %v612 = vpop.f32.mrb[0].mxu0
        %613 = vmatprep.mubr.f32.mxu0 0.0
        %614 = vmatmul.mubr.f32.gmra.mrb[0].mxu0 %v527
        %v615 = vpop.f32.mrb[0].mxu0
        %v616 = vadd.f32 0.0, %v615
        %v617 = vpop.f32.mrb[0].mxu0
        %618 = vdwg.mxu0
        %v619 = vadd.f32 %v502, %v596
        %v620 = vadd.f32 %v503, %v601
        %v621 = vadd.f32 %v504, %v606
        %v622 = vadd.f32 %v505, %v611
        %v623 = vadd.f32 %v506, %v616
        %v624 = vld [vmem:[%s378 + $0x2] sm:$0xff]
        %v625 = vld [vmem:[%s378 + $0xa] sm:$0xff]
        %v626 = vld [vmem:[%s378 + $0x12] sm:$0xff]
        %v627 = vld [vmem:[%s378 + $0x1a] sm:$0xff]
        %v628 = vld [vmem:[%s378 + $0x22] sm:$0xff]
        %s629 = scalar_lea.vmem %s1, 16
        %v630 = vld [vmem:[%s629] sm:$0xff]
        %v632 = vsel %vm390, %v624, 0
        %v635 = vsel %vm390, %v625, 0
        %v638 = vsel %vm390, %v626, 0
        %v641 = vsel %vm390, %v627, 0
        %v644 = vsel %vm390, %v628, 0
        %646 = vmatprep.subr.mxu0 0.0
        %647 = vmatpush1.msra.mxu0 %v630
        %648 = vmatprep.subr.mxu0 0.0
        %649 = vmatpush1.msra.mxu0 0.0
        %650 = vmatprep.subr.mxu0 0.0
        %651 = vmatpush1.msra.mxu0 0.0
        %652 = vmatprep.subr.mxu0 0.0
        %653 = vmatpush1.msra.mxu0 0.0
        %654 = vmatprep.subr.mxu0 0.0
        %655 = vmatpush1.msra.mxu0 0.0
        %656 = vmatprep.subr.mxu0 0.0
        %657 = vmatpush1.msra.mxu0 0.0
        %658 = vmatprep.subr.mxu0 0.0
        %659 = vmatpush1.msra.mxu0 0.0
        %660 = vmatprep.subr.mxu0 0.0
        %661 = vmatpush1.msra.mxu0 0.0
        %662 = vmatprep.subr.mxu0 0.0
        %663 = vmatpush1.msra.mxu0 0.0
        %664 = vmatprep.subr.mxu0 0.0
        %665 = vmatpush1.msra.mxu0 0.0
        %666 = vmatprep.subr.mxu0 0.0
        %667 = vmatpush1.msra.mxu0 0.0
        %668 = vmatprep.subr.mxu0 0.0
        %669 = vmatpush1.msra.mxu0 0.0
        %670 = vmatprep.subr.mxu0 0.0
        %671 = vmatpush1.msra.mxu0 0.0
        %672 = vmatprep.subr.mxu0 0.0
        %673 = vmatpush1.msra.mxu0 0.0
        %674 = vmatprep.subr.mxu0 0.0
        %675 = vmatpush1.msra.mxu0 0.0
        %676 = vmatprep.subr.mxu0 0.0
        %677 = vmatpush1.msra.mxu0 0.0
        %678 = vmatprep.subr.mxu0 0.0
        %679 = vmatpush1.msra.mxu0 0.0
        %680 = vmatprep.subr.mxu0 0.0
        %681 = vmatpush1.msra.mxu0 0.0
        %682 = vmatprep.subr.mxu0 0.0
        %683 = vmatpush1.msra.mxu0 0.0
        %684 = vmatprep.subr.mxu0 0.0
        %685 = vmatpush1.msra.mxu0 0.0
        %686 = vmatprep.subr.mxu0 0.0
        %687 = vmatpush1.msra.mxu0 0.0
        %688 = vmatprep.subr.mxu0 0.0
        %689 = vmatpush1.msra.mxu0 0.0
        %690 = vmatprep.subr.mxu0 0.0
        %691 = vmatpush1.msra.mxu0 0.0
        %692 = vmatprep.subr.mxu0 0.0
        %693 = vmatpush1.msra.mxu0 0.0
        %694 = vmatprep.subr.mxu0 0.0
        %695 = vmatpush1.msra.mxu0 0.0
        %696 = vmatprep.subr.mxu0 0.0
        %697 = vmatpush1.msra.mxu0 0.0
        %698 = vmatprep.subr.mxu0 0.0
        %699 = vmatpush1.msra.mxu0 0.0
        %700 = vmatprep.subr.mxu0 0.0
        %701 = vmatpush1.msra.mxu0 0.0
        %702 = vmatprep.subr.mxu0 0.0
        %703 = vmatpush1.msra.mxu0 0.0
        %704 = vmatprep.subr.mxu0 0.0
        %705 = vmatpush1.msra.mxu0 0.0
        %706 = vmatprep.subr.mxu0 0.0
        %707 = vmatpush1.msra.mxu0 0.0
        %708 = vmatprep.subr.mxu0 0.0
        %709 = vmatpush1.msra.mxu0 0.0
        %710 = vmatprep.mubr.f32.mxu0 0.0
        %711 = vmatmul.mubr.f32.gmra.mrb[0].mxu0 %v632
        %v712 = vpop.f32.mrb[0].mxu0
        %v713 = vadd.f32 0.0, %v712
        %v714 = vpop.f32.mrb[0].mxu0
        %715 = vmatprep.mubr.f32.mxu0 0.0
        %716 = vmatmul.mubr.f32.gmra.mrb[0].mxu0 %v635
        %v717 = vpop.f32.mrb[0].mxu0
        %v718 = vadd.f32 0.0, %v717
        %v719 = vpop.f32.mrb[0].mxu0
        %720 = vmatprep.mubr.f32.mxu0 0.0
        %721 = vmatmul.mubr.f32.gmra.mrb[0].mxu0 %v638
        %v722 = vpop.f32.mrb[0].mxu0
        %v723 = vadd.f32 0.0, %v722
        %v724 = vpop.f32.mrb[0].mxu0
        %725 = vmatprep.mubr.f32.mxu0 0.0
        %726 = vmatmul.mubr.f32.gmra.mrb[0].mxu0 %v641
        %v727 = vpop.f32.mrb[0].mxu0
        %v728 = vadd.f32 0.0, %v727
        %v729 = vpop.f32.mrb[0].mxu0
        %730 = vmatprep.mubr.f32.mxu0 0.0
        %731 = vmatmul.mubr.f32.gmra.mrb[0].mxu0 %v644
        %v732 = vpop.f32.mrb[0].mxu0
        %v733 = vadd.f32 0.0, %v732
        %v734 = vpop.f32.mrb[0].mxu0
        %735 = vdwg.mxu0
        %v736 = vadd.f32 %v619, %v713
        %v737 = vadd.f32 %v620, %v718
        %v738 = vadd.f32 %v621, %v723
        %v739 = vadd.f32 %v622, %v728
        %v740 = vadd.f32 %v623, %v733
        %v741 = vld [vmem:[%s378 + $0x3] sm:$0xff]
        %v742 = vld [vmem:[%s378 + $0xb] sm:$0xff]
        %v743 = vld [vmem:[%s378 + $0x13] sm:$0xff]
        %v744 = vld [vmem:[%s378 + $0x1b] sm:$0xff]
        %v745 = vld [vmem:[%s378 + $0x23] sm:$0xff]
        %s746 = scalar_lea.vmem %s1, 24
        %v747 = vld [vmem:[%s746] sm:$0xff]
        %v749 = vsel %vm390, %v741, 0
        %v752 = vsel %vm390, %v742, 0
        %v755 = vsel %vm390, %v743, 0
        %v758 = vsel %vm390, %v744, 0
        %v761 = vsel %vm390, %v745, 0
        %763 = vmatprep.subr.mxu0 0.0
        %764 = vmatpush1.msra.mxu0 %v747
        %765 = vmatprep.subr.mxu0 0.0
        %766 = vmatpush1.msra.mxu0 0.0
        %767 = vmatprep.subr.mxu0 0.0
        %768 = vmatpush1.msra.mxu0 0.0
        %769 = vmatprep.subr.mxu0 0.0
        %770 = vmatpush1.msra.mxu0 0.0
        %771 = vmatprep.subr.mxu0 0.0
        %772 = vmatpush1.msra.mxu0 0.0
        %773 = vmatprep.subr.mxu0 0.0
        %774 = vmatpush1.msra.mxu0 0.0
        %775 = vmatprep.subr.mxu0 0.0
        %776 = vmatpush1.msra.mxu0 0.0
        %777 = vmatprep.subr.mxu0 0.0
        %778 = vmatpush1.msra.mxu0 0.0
        %779 = vmatprep.subr.mxu0 0.0
        %780 = vmatpush1.msra.mxu0 0.0
        %781 = vmatprep.subr.mxu0 0.0
        %782 = vmatpush1.msra.mxu0 0.0
        %783 = vmatprep.subr.mxu0 0.0
        %784 = vmatpush1.msra.mxu0 0.0
        %785 = vmatprep.subr.mxu0 0.0
        %786 = vmatpush1.msra.mxu0 0.0
        %787 = vmatprep.subr.mxu0 0.0
        %788 = vmatpush1.msra.mxu0 0.0
        %789 = vmatprep.subr.mxu0 0.0
        %790 = vmatpush1.msra.mxu0 0.0
        %791 = vmatprep.subr.mxu0 0.0
        %792 = vmatpush1.msra.mxu0 0.0
        %793 = vmatprep.subr.mxu0 0.0
        %794 = vmatpush1.msra.mxu0 0.0
        %795 = vmatprep.subr.mxu0 0.0
        %796 = vmatpush1.msra.mxu0 0.0
        %797 = vmatprep.subr.mxu0 0.0
        %798 = vmatpush1.msra.mxu0 0.0
        %799 = vmatprep.subr.mxu0 0.0
        %800 = vmatpush1.msra.mxu0 0.0
        %801 = vmatprep.subr.mxu0 0.0
        %802 = vmatpush1.msra.mxu0 0.0
        %803 = vmatprep.subr.mxu0 0.0
        %804 = vmatpush1.msra.mxu0 0.0
        %805 = vmatprep.subr.mxu0 0.0
        %806 = vmatpush1.msra.mxu0 0.0
        %807 = vmatprep.subr.mxu0 0.0
        %808 = vmatpush1.msra.mxu0 0.0
        %809 = vmatprep.subr.mxu0 0.0
        %810 = vmatpush1.msra.mxu0 0.0
        %811 = vmatprep.subr.mxu0 0.0
        %812 = vmatpush1.msra.mxu0 0.0
        %813 = vmatprep.subr.mxu0 0.0
        %814 = vmatpush1.msra.mxu0 0.0
        %815 = vmatprep.subr.mxu0 0.0
        %816 = vmatpush1.msra.mxu0 0.0
        %817 = vmatprep.subr.mxu0 0.0
        %818 = vmatpush1.msra.mxu0 0.0
        %819 = vmatprep.subr.mxu0 0.0
        %820 = vmatpush1.msra.mxu0 0.0
        %821 = vmatprep.subr.mxu0 0.0
        %822 = vmatpush1.msra.mxu0 0.0
        %823 = vmatprep.subr.mxu0 0.0
        %824 = vmatpush1.msra.mxu0 0.0
        %825 = vmatprep.subr.mxu0 0.0
        %826 = vmatpush1.msra.mxu0 0.0
        %827 = vmatprep.mubr.f32.mxu0 0.0
        %828 = vmatmul.mubr.f32.gmra.mrb[0].mxu0 %v749
        %v829 = vpop.f32.mrb[0].mxu0
        %v830 = vadd.f32 0.0, %v829
        %v831 = vpop.f32.mrb[0].mxu0
        %832 = vmatprep.mubr.f32.mxu0 0.0
        %833 = vmatmul.mubr.f32.gmra.mrb[0].mxu0 %v752
        %v834 = vpop.f32.mrb[0].mxu0
        %v835 = vadd.f32 0.0, %v834
        %v836 = vpop.f32.mrb[0].mxu0
        %837 = vmatprep.mubr.f32.mxu0 0.0
        %838 = vmatmul.mubr.f32.gmra.mrb[0].mxu0 %v755
        %v839 = vpop.f32.mrb[0].mxu0
        %v840 = vadd.f32 0.0, %v839
        %v841 = vpop.f32.mrb[0].mxu0
        %842 = vmatprep.mubr.f32.mxu0 0.0
        %843 = vmatmul.mubr.f32.gmra.mrb[0].mxu0 %v758
        %v844 = vpop.f32.mrb[0].mxu0
        %v845 = vadd.f32 0.0, %v844
        %v846 = vpop.f32.mrb[0].mxu0
        %847 = vmatprep.mubr.f32.mxu0 0.0
        %848 = vmatmul.mubr.f32.gmra.mrb[0].mxu0 %v761
        %v849 = vpop.f32.mrb[0].mxu0
        %v850 = vadd.f32 0.0, %v849
        %v851 = vpop.f32.mrb[0].mxu0
        %852 = vdwg.mxu0
        %v853 = vadd.f32 %v736, %v830
        %v854 = vadd.f32 %v737, %v835
        %v855 = vadd.f32 %v738, %v840
        %v856 = vadd.f32 %v739, %v845
        %v857 = vadd.f32 %v740, %v850
        %v858 = vld [vmem:[%s378 + $0x4] sm:$0xff]
        %v859 = vld [vmem:[%s378 + $0xc] sm:$0xff]
        %v860 = vld [vmem:[%s378 + $0x14] sm:$0xff]
        %v861 = vld [vmem:[%s378 + $0x1c] sm:$0xff]
        %v862 = vld [vmem:[%s378 + $0x24] sm:$0xff]
        %s863 = scalar_lea.vmem %s1, 32
        %v864 = vld [vmem:[%s863] sm:$0xff]
        %v866 = vsel %vm390, %v858, 0
        %v869 = vsel %vm390, %v859, 0
        %v872 = vsel %vm390, %v860, 0
        %v875 = vsel %vm390, %v861, 0
        %v878 = vsel %vm390, %v862, 0
        %880 = vmatprep.subr.mxu0 0.0
        %881 = vmatpush1.msra.mxu0 %v864
        %882 = vmatprep.subr.mxu0 0.0
        %883 = vmatpush1.msra.mxu0 0.0
        %884 = vmatprep.subr.mxu0 0.0
        %885 = vmatpush1.msra.mxu0 0.0
        %886 = vmatprep.subr.mxu0 0.0
        %887 = vmatpush1.msra.mxu0 0.0
        %888 = vmatprep.subr.mxu0 0.0
        %889 = vmatpush1.msra.mxu0 0.0
        %890 = vmatprep.subr.mxu0 0.0
        %891 = vmatpush1.msra.mxu0 0.0
        %892 = vmatprep.subr.mxu0 0.0
        %893 = vmatpush1.msra.mxu0 0.0
        %894 = vmatprep.subr.mxu0 0.0
        %895 = vmatpush1.msra.mxu0 0.0
        %896 = vmatprep.subr.mxu0 0.0
        %897 = vmatpush1.msra.mxu0 0.0
        %898 = vmatprep.subr.mxu0 0.0
        %899 = vmatpush1.msra.mxu0 0.0
        %900 = vmatprep.subr.mxu0 0.0
        %901 = vmatpush1.msra.mxu0 0.0
        %902 = vmatprep.subr.mxu0 0.0
        %903 = vmatpush1.msra.mxu0 0.0
        %904 = vmatprep.subr.mxu0 0.0
        %905 = vmatpush1.msra.mxu0 0.0
        %906 = vmatprep.subr.mxu0 0.0
        %907 = vmatpush1.msra.mxu0 0.0
        %908 = vmatprep.subr.mxu0 0.0
        %909 = vmatpush1.msra.mxu0 0.0
        %910 = vmatprep.subr.mxu0 0.0
        %911 = vmatpush1.msra.mxu0 0.0
        %912 = vmatprep.subr.mxu0 0.0
        %913 = vmatpush1.msra.mxu0 0.0
        %914 = vmatprep.subr.mxu0 0.0
        %915 = vmatpush1.msra.mxu0 0.0
        %916 = vmatprep.subr.mxu0 0.0
        %917 = vmatpush1.msra.mxu0 0.0
        %918 = vmatprep.subr.mxu0 0.0
        %919 = vmatpush1.msra.mxu0 0.0
        %920 = vmatprep.subr.mxu0 0.0
        %921 = vmatpush1.msra.mxu0 0.0
        %922 = vmatprep.subr.mxu0 0.0
        %923 = vmatpush1.msra.mxu0 0.0
        %924 = vmatprep.subr.mxu0 0.0
        %925 = vmatpush1.msra.mxu0 0.0
        %926 = vmatprep.subr.mxu0 0.0
        %927 = vmatpush1.msra.mxu0 0.0
        %928 = vmatprep.subr.mxu0 0.0
        %929 = vmatpush1.msra.mxu0 0.0
        %930 = vmatprep.subr.mxu0 0.0
        %931 = vmatpush1.msra.mxu0 0.0
        %932 = vmatprep.subr.mxu0 0.0
        %933 = vmatpush1.msra.mxu0 0.0
        %934 = vmatprep.subr.mxu0 0.0
        %935 = vmatpush1.msra.mxu0 0.0
        %936 = vmatprep.subr.mxu0 0.0
        %937 = vmatpush1.msra.mxu0 0.0
        %938 = vmatprep.subr.mxu0 0.0
        %939 = vmatpush1.msra.mxu0 0.0
        %940 = vmatprep.subr.mxu0 0.0
        %941 = vmatpush1.msra.mxu0 0.0
        %942 = vmatprep.subr.mxu0 0.0
        %943 = vmatpush1.msra.mxu0 0.0
        %944 = vmatprep.mubr.f32.mxu0 0.0
        %945 = vmatmul.mubr.f32.gmra.mrb[0].mxu0 %v866
        %v946 = vpop.f32.mrb[0].mxu0
        %v947 = vadd.f32 0.0, %v946
        %v948 = vpop.f32.mrb[0].mxu0
        %949 = vmatprep.mubr.f32.mxu0 0.0
        %950 = vmatmul.mubr.f32.gmra.mrb[0].mxu0 %v869
        %v951 = vpop.f32.mrb[0].mxu0
        %v952 = vadd.f32 0.0, %v951
        %v953 = vpop.f32.mrb[0].mxu0
        %954 = vmatprep.mubr.f32.mxu0 0.0
        %955 = vmatmul.mubr.f32.gmra.mrb[0].mxu0 %v872
        %v956 = vpop.f32.mrb[0].mxu0
        %v957 = vadd.f32 0.0, %v956
        %v958 = vpop.f32.mrb[0].mxu0
        %959 = vmatprep.mubr.f32.mxu0 0.0
        %960 = vmatmul.mubr.f32.gmra.mrb[0].mxu0 %v875
        %v961 = vpop.f32.mrb[0].mxu0
        %v962 = vadd.f32 0.0, %v961
        %v963 = vpop.f32.mrb[0].mxu0
        %964 = vmatprep.mubr.f32.mxu0 0.0
        %965 = vmatmul.mubr.f32.gmra.mrb[0].mxu0 %v878
        %v966 = vpop.f32.mrb[0].mxu0
        %v967 = vadd.f32 0.0, %v966
        %v968 = vpop.f32.mrb[0].mxu0
        %969 = vdwg.mxu0
        %v970 = vadd.f32 %v853, %v947
        %v971 = vadd.f32 %v854, %v952
        %v972 = vadd.f32 %v855, %v957
        %v973 = vadd.f32 %v856, %v962
        %v974 = vadd.f32 %v857, %v967
        %975 = vst [vmem:[#allocation2] sm:$0xff] %v970
        %976 = vst [vmem:[#allocation2 + $0x8] sm:$0xff] %v971
        %977 = vst [vmem:[#allocation2 + $0x10] sm:$0xff] %v972
        %978 = vst [vmem:[#allocation2 + $0x18] sm:$0xff] %v973
        %979 = vst [vmem:[#allocation2 + $0x20] sm:$0xff] %v974
        %v980 = vld [vmem:[#allocation2] ss:$2 sm:$0xff]
        %s981 = scalar_lea.vmem [#allocation2], 16
        %v982 = vld [vmem:[%s981] ss:$2 sm:$0xff]
        %s983 = scalar_lea.vmem [#allocation2], 32
        %v984 = vld [vmem:[%s983] ss:$2 sm:$0xf]
        %s985 = scalar_lea.vmem [#allocation2], 1
        %v986 = vld [vmem:[%s985] ss:$2 sm:$0xff]
        %s987 = scalar_lea.vmem [#allocation2], 17
        %v988 = vld [vmem:[%s987] ss:$2 sm:$0xff]
        %s989 = scalar_lea.vmem [#allocation2], 33
        %v990 = vld [vmem:[%s989] ss:$2 sm:$0xf]
        %v991 = vmax.f32 %v980, %v986
        %v992 = vmax.f32 %v982, %v988
        %v993 = vmax.f32 %v984, %v990
        %vm994 = vcmp.gt.f32.partialorder %v991, 0.0
        %vm995 = vcmp.gt.f32.partialorder %v992, 0.0
        %vm996 = vcmp.gt.f32.partialorder %v993, 0.0
        %v997 = vmul.f32 %v991, 1.442695
        %v998 = vpow.pop %v997
        %v999 = vmul.f32 %v992, 1.442695
        %v1000 = vpow.pop %v999
        %v1001 = vmul.f32 %v993, 1.442695
        %v1002 = vpow.pop %v1001
        %v1003 = vsub.f32 %v998, 1.0
        %v1004 = vsub.f32 %v1000, 1.0
        %v1005 = vsub.f32 %v1002, 1.0
        %v1006 = vsel %vm994, %v991, %v1003
        %v1007 = vsel %vm995, %v992, %v1004
        %v1008 = vsel %vm996, %v993, %v1005
        %1009 = vst [vmem:[#allocation3] sm:$0xff] %v1006
        %1010 = vst [vmem:[#allocation3 + $0x8] sm:$0xff] %v1007
        %1011 = vst [vmem:[#allocation3 + $0x10] sm:$0xf] %v1008
        %v1012 = vld [vmem:[#allocation3] sm:$0xff]
        %v1013 = vld [vmem:[#allocation3 + $0x8] sm:$0xff]
        %v1014 = vld [vmem:[#allocation8] sm:$0xff]
        %v1015 = vld [vmem:[#allocation8 + $0x8] sm:$0xff]
        %v1016 = vld [vmem:[#allocation8 + $0x10] sm:$0xff]
        %v1017 = vld [vmem:[#allocation8 + $0x18] sm:$0xff]
        %v1018 = vld [vmem:[#allocation8 + $0x20] sm:$0xff]
        %v1019 = vld [vmem:[#allocation8 + $0x28] sm:$0xff]
        %v1020 = vld [vmem:[#allocation8 + $0x30] sm:$0xff]
        %v1021 = vld [vmem:[#allocation8 + $0x38] sm:$0xff]
        %v1022 = vld [vmem:[#allocation8 + $0x40] sm:$0xff]
        %v1023 = vld [vmem:[#allocation8 + $0x48] sm:$0xff]
        %v1024 = vld [vmem:[#allocation8 + $0x50] sm:$0xff]
        %v1025 = vld [vmem:[#allocation8 + $0x58] sm:$0xff]
        %v1026 = vld [vmem:[#allocation8 + $0x60] sm:$0xff]
        %v1027 = vld [vmem:[#allocation8 + $0x68] sm:$0xff]
        %v1028 = vld [vmem:[#allocation8 + $0x70] sm:$0xff]
        %v1029 = vld [vmem:[#allocation8 + $0x78] sm:$0xff]
        %1030 = vmatprep.subr.mxu0 0.0
        %1031 = vmatpush1.msra.mxu0 %v1014
        %1032 = vmatprep.subr.mxu0 0.0
        %1033 = vmatpush1.msra.mxu0 %v1015
        %1034 = vmatprep.subr.mxu0 0.0
        %1035 = vmatpush1.msra.mxu0 %v1016
        %1036 = vmatprep.subr.mxu0 0.0
        %1037 = vmatpush1.msra.mxu0 %v1017
        %1038 = vmatprep.subr.mxu0 0.0
        %1039 = vmatpush1.msra.mxu0 %v1018
        %1040 = vmatprep.subr.mxu0 0.0
        %1041 = vmatpush1.msra.mxu0 %v1019
        %1042 = vmatprep.subr.mxu0 0.0
        %1043 = vmatpush1.msra.mxu0 %v1020
        %1044 = vmatprep.subr.mxu0 0.0
        %1045 = vmatpush1.msra.mxu0 %v1021
        %1046 = vmatprep.subr.mxu0 0.0
        %1047 = vmatpush1.msra.mxu0 %v1022
        %1048 = vmatprep.subr.mxu0 0.0
        %1049 = vmatpush1.msra.mxu0 %v1023
        %1050 = vmatprep.subr.mxu0 0.0
        %1051 = vmatpush1.msra.mxu0 %v1024
        %1052 = vmatprep.subr.mxu0 0.0
        %1053 = vmatpush1.msra.mxu0 %v1025
        %1054 = vmatprep.subr.mxu0 0.0
        %1055 = vmatpush1.msra.mxu0 %v1026
        %1056 = vmatprep.subr.mxu0 0.0
        %1057 = vmatpush1.msra.mxu0 %v1027
        %1058 = vmatprep.subr.mxu0 0.0
        %1059 = vmatpush1.msra.mxu0 %v1028
        %1060 = vmatprep.subr.mxu0 0.0
        %1061 = vmatpush1.msra.mxu0 %v1029
        %1062 = vmatprep.subr.mxu0 0.0
        %1063 = vmatpush1.msra.mxu0 0.0
        %1064 = vmatprep.subr.mxu0 0.0
        %1065 = vmatpush1.msra.mxu0 0.0
        %1066 = vmatprep.subr.mxu0 0.0
        %1067 = vmatpush1.msra.mxu0 0.0
        %1068 = vmatprep.subr.mxu0 0.0
        %1069 = vmatpush1.msra.mxu0 0.0
        %1070 = vmatprep.subr.mxu0 0.0
        %1071 = vmatpush1.msra.mxu0 0.0
        %1072 = vmatprep.subr.mxu0 0.0
        %1073 = vmatpush1.msra.mxu0 0.0
        %1074 = vmatprep.subr.mxu0 0.0
        %1075 = vmatpush1.msra.mxu0 0.0
        %1076 = vmatprep.subr.mxu0 0.0
        %1077 = vmatpush1.msra.mxu0 0.0
        %1078 = vmatprep.subr.mxu0 0.0
        %1079 = vmatpush1.msra.mxu0 0.0
        %1080 = vmatprep.subr.mxu0 0.0
        %1081 = vmatpush1.msra.mxu0 0.0
        %1082 = vmatprep.subr.mxu0 0.0
        %1083 = vmatpush1.msra.mxu0 0.0
        %1084 = vmatprep.subr.mxu0 0.0
        %1085 = vmatpush1.msra.mxu0 0.0
        %1086 = vmatprep.subr.mxu0 0.0
        %1087 = vmatpush1.msra.mxu0 0.0
        %1088 = vmatprep.subr.mxu0 0.0
        %1089 = vmatpush1.msra.mxu0 0.0
        %1090 = vmatprep.subr.mxu0 0.0
        %1091 = vmatpush1.msra.mxu0 0.0
        %1092 = vmatprep.subr.mxu0 0.0
        %1093 = vmatpush1.msra.mxu0 0.0
        %1094 = vmatprep.mubr.f32.mxu0 0.0
        %1095 = vmatmul.mubr.f32.gmra.mrb[0].mxu0 %v1012
        %v1096 = vpop.f32.mrb[0].mxu0
        %v1097 = vadd.f32 0.0, %v1096
        %v1098 = vpop.f32.mrb[0].mxu0
        %1099 = vmatprep.mubr.f32.mxu0 0.0
        %1100 = vmatmul.mubr.f32.gmra.mrb[0].mxu0 %v1013
        %v1101 = vpop.f32.mrb[0].mxu0
        %v1102 = vadd.f32 0.0, %v1101
        %v1103 = vpop.f32.mrb[0].mxu0
        %1104 = vdwg.mxu0
        %v1106 = vlaneseq
        %v1107 = vshrl.u32 %v1106, 7
        %v1108 = vsub.s32 0, %v1107
        %v1109 = vrot.slane %v382, %v1108
        %v1111 = vadd.f32 %v1109, %v1097
        %v1112 = vadd.f32 %v1109, %v1102
        %v1113 = vld [vmem:[#allocation3 + $0x1] sm:$0xff]
        %v1114 = vld [vmem:[#allocation3 + $0x9] sm:$0xff]
        %s1115 = scalar_lea.vmem [#allocation8], 128
        %v1116 = vld [vmem:[%s1115] sm:$0xff]
        %v1117 = vld [vmem:[%s1115 + $0x8] sm:$0xff]
        %v1118 = vld [vmem:[%s1115 + $0x10] sm:$0xff]
        %v1119 = vld [vmem:[%s1115 + $0x18] sm:$0xff]
        %v1120 = vld [vmem:[%s1115 + $0x20] sm:$0xff]
        %v1121 = vld [vmem:[%s1115 + $0x28] sm:$0xff]
        %v1122 = vld [vmem:[%s1115 + $0x30] sm:$0xff]
        %v1123 = vld [vmem:[%s1115 + $0x38] sm:$0xff]
        %v1124 = vld [vmem:[%s1115 + $0x40] sm:$0xff]
        %v1125 = vld [vmem:[%s1115 + $0x48] sm:$0xff]
        %v1126 = vld [vmem:[%s1115 + $0x50] sm:$0xff]
        %v1127 = vld [vmem:[%s1115 + $0x58] sm:$0xff]
        %v1128 = vld [vmem:[%s1115 + $0x60] sm:$0xff]
        %v1129 = vld [vmem:[%s1115 + $0x68] sm:$0xff]
        %v1130 = vld [vmem:[%s1115 + $0x70] sm:$0xff]
        %v1131 = vld [vmem:[%s1115 + $0x78] sm:$0xff]
        %1132 = vmatprep.subr.mxu0 0.0
        %1133 = vmatpush1.msra.mxu0 %v1116
        %1134 = vmatprep.subr.mxu0 0.0
        %1135 = vmatpush1.msra.mxu0 %v1117
        %1136 = vmatprep.subr.mxu0 0.0
        %1137 = vmatpush1.msra.mxu0 %v1118
        %1138 = vmatprep.subr.mxu0 0.0
        %1139 = vmatpush1.msra.mxu0 %v1119
        %1140 = vmatprep.subr.mxu0 0.0
        %1141 = vmatpush1.msra.mxu0 %v1120
        %1142 = vmatprep.subr.mxu0 0.0
        %1143 = vmatpush1.msra.mxu0 %v1121
        %1144 = vmatprep.subr.mxu0 0.0
        %1145 = vmatpush1.msra.mxu0 %v1122
        %1146 = vmatprep.subr.mxu0 0.0
        %1147 = vmatpush1.msra.mxu0 %v1123
        %1148 = vmatprep.subr.mxu0 0.0
        %1149 = vmatpush1.msra.mxu0 %v1124
        %1150 = vmatprep.subr.mxu0 0.0
        %1151 = vmatpush1.msra.mxu0 %v1125
        %1152 = vmatprep.subr.mxu0 0.0
        %1153 = vmatpush1.msra.mxu0 %v1126
        %1154 = vmatprep.subr.mxu0 0.0
        %1155 = vmatpush1.msra.mxu0 %v1127
        %1156 = vmatprep.subr.mxu0 0.0
        %1157 = vmatpush1.msra.mxu0 %v1128
        %1158 = vmatprep.subr.mxu0 0.0
        %1159 = vmatpush1.msra.mxu0 %v1129
        %1160 = vmatprep.subr.mxu0 0.0
        %1161 = vmatpush1.msra.mxu0 %v1130
        %1162 = vmatprep.subr.mxu0 0.0
        %1163 = vmatpush1.msra.mxu0 %v1131
        %1164 = vmatprep.subr.mxu0 0.0
        %1165 = vmatpush1.msra.mxu0 0.0
        %1166 = vmatprep.subr.mxu0 0.0
        %1167 = vmatpush1.msra.mxu0 0.0
        %1168 = vmatprep.subr.mxu0 0.0
        %1169 = vmatpush1.msra.mxu0 0.0
        %1170 = vmatprep.subr.mxu0 0.0
        %1171 = vmatpush1.msra.mxu0 0.0
        %1172 = vmatprep.subr.mxu0 0.0
        %1173 = vmatpush1.msra.mxu0 0.0
        %1174 = vmatprep.subr.mxu0 0.0
        %1175 = vmatpush1.msra.mxu0 0.0
        %1176 = vmatprep.subr.mxu0 0.0
        %1177 = vmatpush1.msra.mxu0 0.0
        %1178 = vmatprep.subr.mxu0 0.0
        %1179 = vmatpush1.msra.mxu0 0.0
        %1180 = vmatprep.subr.mxu0 0.0
        %1181 = vmatpush1.msra.mxu0 0.0
        %1182 = vmatprep.subr.mxu0 0.0
        %1183 = vmatpush1.msra.mxu0 0.0
        %1184 = vmatprep.subr.mxu0 0.0
        %1185 = vmatpush1.msra.mxu0 0.0
        %1186 = vmatprep.subr.mxu0 0.0
        %1187 = vmatpush1.msra.mxu0 0.0
        %1188 = vmatprep.subr.mxu0 0.0
        %1189 = vmatpush1.msra.mxu0 0.0
        %1190 = vmatprep.subr.mxu0 0.0
        %1191 = vmatpush1.msra.mxu0 0.0
        %1192 = vmatprep.subr.mxu0 0.0
        %1193 = vmatpush1.msra.mxu0 0.0
        %1194 = vmatprep.subr.mxu0 0.0
        %1195 = vmatpush1.msra.mxu0 0.0
        %1196 = vmatprep.mubr.f32.mxu0 0.0
        %1197 = vmatmul.mubr.f32.gmra.mrb[0].mxu0 %v1113
        %v1198 = vpop.f32.mrb[0].mxu0
        %v1199 = vadd.f32 0.0, %v1198
        %v1200 = vpop.f32.mrb[0].mxu0
        %1201 = vmatprep.mubr.f32.mxu0 0.0
        %1202 = vmatmul.mubr.f32.gmra.mrb[0].mxu0 %v1114
        %v1203 = vpop.f32.mrb[0].mxu0
        %v1204 = vadd.f32 0.0, %v1203
        %v1205 = vpop.f32.mrb[0].mxu0
        %1206 = vdwg.mxu0
        %v1207 = vadd.f32 %v1111, %v1199
        %v1208 = vadd.f32 %v1112, %v1204
        %v1209 = vld [vmem:[#allocation3 + $0x2] sm:$0xff]
        %v1210 = vld [vmem:[#allocation3 + $0xa] sm:$0xff]
        %s1211 = scalar_lea.vmem [#allocation8], 256
        %v1212 = vld [vmem:[%s1211] sm:$0xff]
        %v1213 = vld [vmem:[%s1211 + $0x8] sm:$0xff]
        %v1214 = vld [vmem:[%s1211 + $0x10] sm:$0xff]
        %v1215 = vld [vmem:[%s1211 + $0x18] sm:$0xff]
        %v1216 = vld [vmem:[%s1211 + $0x20] sm:$0xff]
        %v1217 = vld [vmem:[%s1211 + $0x28] sm:$0xff]
        %v1218 = vld [vmem:[%s1211 + $0x30] sm:$0xff]
        %v1219 = vld [vmem:[%s1211 + $0x38] sm:$0xff]
        %v1220 = vld [vmem:[%s1211 + $0x40] sm:$0xff]
        %v1221 = vld [vmem:[%s1211 + $0x48] sm:$0xff]
        %v1222 = vld [vmem:[%s1211 + $0x50] sm:$0xff]
        %v1223 = vld [vmem:[%s1211 + $0x58] sm:$0xff]
        %v1224 = vld [vmem:[%s1211 + $0x60] sm:$0xff]
        %v1225 = vld [vmem:[%s1211 + $0x68] sm:$0xff]
        %v1226 = vld [vmem:[%s1211 + $0x70] sm:$0xff]
        %v1227 = vld [vmem:[%s1211 + $0x78] sm:$0xff]
        %1228 = vmatprep.subr.mxu0 0.0
        %1229 = vmatpush1.msra.mxu0 %v1212
        %1230 = vmatprep.subr.mxu0 0.0
        %1231 = vmatpush1.msra.mxu0 %v1213
        %1232 = vmatprep.subr.mxu0 0.0
        %1233 = vmatpush1.msra.mxu0 %v1214
        %1234 = vmatprep.subr.mxu0 0.0
        %1235 = vmatpush1.msra.mxu0 %v1215
        %1236 = vmatprep.subr.mxu0 0.0
        %1237 = vmatpush1.msra.mxu0 %v1216
        %1238 = vmatprep.subr.mxu0 0.0
        %1239 = vmatpush1.msra.mxu0 %v1217
        %1240 = vmatprep.subr.mxu0 0.0
        %1241 = vmatpush1.msra.mxu0 %v1218
        %1242 = vmatprep.subr.mxu0 0.0
        %1243 = vmatpush1.msra.mxu0 %v1219
        %1244 = vmatprep.subr.mxu0 0.0
        %1245 = vmatpush1.msra.mxu0 %v1220
        %1246 = vmatprep.subr.mxu0 0.0
        %1247 = vmatpush1.msra.mxu0 %v1221
        %1248 = vmatprep.subr.mxu0 0.0
        %1249 = vmatpush1.msra.mxu0 %v1222
        %1250 = vmatprep.subr.mxu0 0.0
        %1251 = vmatpush1.msra.mxu0 %v1223
        %1252 = vmatprep.subr.mxu0 0.0
        %1253 = vmatpush1.msra.mxu0 %v1224
        %1254 = vmatprep.subr.mxu0 0.0
        %1255 = vmatpush1.msra.mxu0 %v1225
        %1256 = vmatprep.subr.mxu0 0.0
        %1257 = vmatpush1.msra.mxu0 %v1226
        %1258 = vmatprep.subr.mxu0 0.0
        %1259 = vmatpush1.msra.mxu0 %v1227
        %1260 = vmatprep.subr.mxu0 0.0
        %1261 = vmatpush1.msra.mxu0 0.0
        %1262 = vmatprep.subr.mxu0 0.0
        %1263 = vmatpush1.msra.mxu0 0.0
        %1264 = vmatprep.subr.mxu0 0.0
        %1265 = vmatpush1.msra.mxu0 0.0
        %1266 = vmatprep.subr.mxu0 0.0
        %1267 = vmatpush1.msra.mxu0 0.0
        %1268 = vmatprep.subr.mxu0 0.0
        %1269 = vmatpush1.msra.mxu0 0.0
        %1270 = vmatprep.subr.mxu0 0.0
        %1271 = vmatpush1.msra.mxu0 0.0
        %1272 = vmatprep.subr.mxu0 0.0
        %1273 = vmatpush1.msra.mxu0 0.0
        %1274 = vmatprep.subr.mxu0 0.0
        %1275 = vmatpush1.msra.mxu0 0.0
        %1276 = vmatprep.subr.mxu0 0.0
        %1277 = vmatpush1.msra.mxu0 0.0
        %1278 = vmatprep.subr.mxu0 0.0
        %1279 = vmatpush1.msra.mxu0 0.0
        %1280 = vmatprep.subr.mxu0 0.0
        %1281 = vmatpush1.msra.mxu0 0.0
        %1282 = vmatprep.subr.mxu0 0.0
        %1283 = vmatpush1.msra.mxu0 0.0
        %1284 = vmatprep.subr.mxu0 0.0
        %1285 = vmatpush1.msra.mxu0 0.0
        %1286 = vmatprep.subr.mxu0 0.0
        %1287 = vmatpush1.msra.mxu0 0.0
        %1288 = vmatprep.subr.mxu0 0.0
        %1289 = vmatpush1.msra.mxu0 0.0
        %1290 = vmatprep.subr.mxu0 0.0
        %1291 = vmatpush1.msra.mxu0 0.0
        %1292 = vmatprep.mubr.f32.mxu0 0.0
        %1293 = vmatmul.mubr.f32.gmra.mrb[0].mxu0 %v1209
        %v1294 = vpop.f32.mrb[0].mxu0
        %v1295 = vadd.f32 0.0, %v1294
        %v1296 = vpop.f32.mrb[0].mxu0
        %1297 = vmatprep.mubr.f32.mxu0 0.0
        %1298 = vmatmul.mubr.f32.gmra.mrb[0].mxu0 %v1210
        %v1299 = vpop.f32.mrb[0].mxu0
        %v1300 = vadd.f32 0.0, %v1299
        %v1301 = vpop.f32.mrb[0].mxu0
        %1302 = vdwg.mxu0
        %v1303 = vadd.f32 %v1207, %v1295
        %v1304 = vadd.f32 %v1208, %v1300
        %v1305 = vld [vmem:[#allocation3 + $0x3] sm:$0xff]
        %v1306 = vld [vmem:[#allocation3 + $0xb] sm:$0xff]
        %s1307 = scalar_lea.vmem [#allocation8], 384
        %v1308 = vld [vmem:[%s1307] sm:$0xff]
        %v1309 = vld [vmem:[%s1307 + $0x8] sm:$0xff]
        %v1310 = vld [vmem:[%s1307 + $0x10] sm:$0xff]
        %v1311 = vld [vmem:[%s1307 + $0x18] sm:$0xff]
        %v1312 = vld [vmem:[%s1307 + $0x20] sm:$0xff]
        %v1313 = vld [vmem:[%s1307 + $0x28] sm:$0xff]
        %v1314 = vld [vmem:[%s1307 + $0x30] sm:$0xff]
        %v1315 = vld [vmem:[%s1307 + $0x38] sm:$0xff]
        %v1316 = vld [vmem:[%s1307 + $0x40] sm:$0xff]
        %v1317 = vld [vmem:[%s1307 + $0x48] sm:$0xff]
        %v1318 = vld [vmem:[%s1307 + $0x50] sm:$0xff]
        %v1319 = vld [vmem:[%s1307 + $0x58] sm:$0xff]
        %v1320 = vld [vmem:[%s1307 + $0x60] sm:$0xff]
        %v1321 = vld [vmem:[%s1307 + $0x68] sm:$0xff]
        %v1322 = vld [vmem:[%s1307 + $0x70] sm:$0xff]
        %v1323 = vld [vmem:[%s1307 + $0x78] sm:$0xff]
        %1324 = vmatprep.subr.mxu0 0.0
        %1325 = vmatpush1.msra.mxu0 %v1308
        %1326 = vmatprep.subr.mxu0 0.0
        %1327 = vmatpush1.msra.mxu0 %v1309
        %1328 = vmatprep.subr.mxu0 0.0
        %1329 = vmatpush1.msra.mxu0 %v1310
        %1330 = vmatprep.subr.mxu0 0.0
        %1331 = vmatpush1.msra.mxu0 %v1311
        %1332 = vmatprep.subr.mxu0 0.0
        %1333 = vmatpush1.msra.mxu0 %v1312
        %1334 = vmatprep.subr.mxu0 0.0
        %1335 = vmatpush1.msra.mxu0 %v1313
        %1336 = vmatprep.subr.mxu0 0.0
        %1337 = vmatpush1.msra.mxu0 %v1314
        %1338 = vmatprep.subr.mxu0 0.0
        %1339 = vmatpush1.msra.mxu0 %v1315
        %1340 = vmatprep.subr.mxu0 0.0
        %1341 = vmatpush1.msra.mxu0 %v1316
        %1342 = vmatprep.subr.mxu0 0.0
        %1343 = vmatpush1.msra.mxu0 %v1317
        %1344 = vmatprep.subr.mxu0 0.0
        %1345 = vmatpush1.msra.mxu0 %v1318
        %1346 = vmatprep.subr.mxu0 0.0
        %1347 = vmatpush1.msra.mxu0 %v1319
        %1348 = vmatprep.subr.mxu0 0.0
        %1349 = vmatpush1.msra.mxu0 %v1320
        %1350 = vmatprep.subr.mxu0 0.0
        %1351 = vmatpush1.msra.mxu0 %v1321
        %1352 = vmatprep.subr.mxu0 0.0
        %1353 = vmatpush1.msra.mxu0 %v1322
        %1354 = vmatprep.subr.mxu0 0.0
        %1355 = vmatpush1.msra.mxu0 %v1323
        %1356 = vmatprep.subr.mxu0 0.0
        %1357 = vmatpush1.msra.mxu0 0.0
        %1358 = vmatprep.subr.mxu0 0.0
        %1359 = vmatpush1.msra.mxu0 0.0
        %1360 = vmatprep.subr.mxu0 0.0
        %1361 = vmatpush1.msra.mxu0 0.0
        %1362 = vmatprep.subr.mxu0 0.0
        %1363 = vmatpush1.msra.mxu0 0.0
        %1364 = vmatprep.subr.mxu0 0.0
        %1365 = vmatpush1.msra.mxu0 0.0
        %1366 = vmatprep.subr.mxu0 0.0
        %1367 = vmatpush1.msra.mxu0 0.0
        %1368 = vmatprep.subr.mxu0 0.0
        %1369 = vmatpush1.msra.mxu0 0.0
        %1370 = vmatprep.subr.mxu0 0.0
        %1371 = vmatpush1.msra.mxu0 0.0
        %1372 = vmatprep.subr.mxu0 0.0
        %1373 = vmatpush1.msra.mxu0 0.0
        %1374 = vmatprep.subr.mxu0 0.0
        %1375 = vmatpush1.msra.mxu0 0.0
        %1376 = vmatprep.subr.mxu0 0.0
        %1377 = vmatpush1.msra.mxu0 0.0
        %1378 = vmatprep.subr.mxu0 0.0
        %1379 = vmatpush1.msra.mxu0 0.0
        %1380 = vmatprep.subr.mxu0 0.0
        %1381 = vmatpush1.msra.mxu0 0.0
        %1382 = vmatprep.subr.mxu0 0.0
        %1383 = vmatpush1.msra.mxu0 0.0
        %1384 = vmatprep.subr.mxu0 0.0
        %1385 = vmatpush1.msra.mxu0 0.0
        %1386 = vmatprep.subr.mxu0 0.0
        %1387 = vmatpush1.msra.mxu0 0.0
        %1388 = vmatprep.mubr.f32.mxu0 0.0
        %1389 = vmatmul.mubr.f32.gmra.mrb[0].mxu0 %v1305
        %v1390 = vpop.f32.mrb[0].mxu0
        %v1391 = vadd.f32 0.0, %v1390
        %v1392 = vpop.f32.mrb[0].mxu0
        %1393 = vmatprep.mubr.f32.mxu0 0.0
        %1394 = vmatmul.mubr.f32.gmra.mrb[0].mxu0 %v1306
        %v1395 = vpop.f32.mrb[0].mxu0
        %v1396 = vadd.f32 0.0, %v1395
        %v1397 = vpop.f32.mrb[0].mxu0
        %1398 = vdwg.mxu0
        %v1399 = vadd.f32 %v1303, %v1391
        %v1400 = vadd.f32 %v1304, %v1396
        %v1401 = vld [vmem:[#allocation3 + $0x4] sm:$0xff]
        %v1402 = vld [vmem:[#allocation3 + $0xc] sm:$0xff]
        %s1403 = scalar_lea.vmem [#allocation8], 512
        %v1404 = vld [vmem:[%s1403] sm:$0xff]
        %v1405 = vld [vmem:[%s1403 + $0x8] sm:$0xff]
        %v1406 = vld [vmem:[%s1403 + $0x10] sm:$0xff]
        %v1407 = vld [vmem:[%s1403 + $0x18] sm:$0xff]
        %v1408 = vld [vmem:[%s1403 + $0x20] sm:$0xff]
        %v1409 = vld [vmem:[%s1403 + $0x28] sm:$0xff]
        %v1410 = vld [vmem:[%s1403 + $0x30] sm:$0xff]
        %v1411 = vld [vmem:[%s1403 + $0x38] sm:$0xff]
        %v1412 = vld [vmem:[%s1403 + $0x40] sm:$0xff]
        %v1413 = vld [vmem:[%s1403 + $0x48] sm:$0xff]
        %v1414 = vld [vmem:[%s1403 + $0x50] sm:$0xff]
        %v1415 = vld [vmem:[%s1403 + $0x58] sm:$0xff]
        %v1416 = vld [vmem:[%s1403 + $0x60] sm:$0xff]
        %v1417 = vld [vmem:[%s1403 + $0x68] sm:$0xff]
        %v1418 = vld [vmem:[%s1403 + $0x70] sm:$0xff]
        %v1419 = vld [vmem:[%s1403 + $0x78] sm:$0xff]
        %1420 = vmatprep.subr.mxu0 0.0
        %1421 = vmatpush1.msra.mxu0 %v1404
        %1422 = vmatprep.subr.mxu0 0.0
        %1423 = vmatpush1.msra.mxu0 %v1405
        %1424 = vmatprep.subr.mxu0 0.0
        %1425 = vmatpush1.msra.mxu0 %v1406
        %1426 = vmatprep.subr.mxu0 0.0
        %1427 = vmatpush1.msra.mxu0 %v1407
        %1428 = vmatprep.subr.mxu0 0.0
        %1429 = vmatpush1.msra.mxu0 %v1408
        %1430 = vmatprep.subr.mxu0 0.0
        %1431 = vmatpush1.msra.mxu0 %v1409
        %1432 = vmatprep.subr.mxu0 0.0
        %1433 = vmatpush1.msra.mxu0 %v1410
        %1434 = vmatprep.subr.mxu0 0.0
        %1435 = vmatpush1.msra.mxu0 %v1411
        %1436 = vmatprep.subr.mxu0 0.0
        %1437 = vmatpush1.msra.mxu0 %v1412
        %1438 = vmatprep.subr.mxu0 0.0
        %1439 = vmatpush1.msra.mxu0 %v1413
        %1440 = vmatprep.subr.mxu0 0.0
        %1441 = vmatpush1.msra.mxu0 %v1414
        %1442 = vmatprep.subr.mxu0 0.0
        %1443 = vmatpush1.msra.mxu0 %v1415
        %1444 = vmatprep.subr.mxu0 0.0
        %1445 = vmatpush1.msra.mxu0 %v1416
        %1446 = vmatprep.subr.mxu0 0.0
        %1447 = vmatpush1.msra.mxu0 %v1417
        %1448 = vmatprep.subr.mxu0 0.0
        %1449 = vmatpush1.msra.mxu0 %v1418
        %1450 = vmatprep.subr.mxu0 0.0
        %1451 = vmatpush1.msra.mxu0 %v1419
        %1452 = vmatprep.subr.mxu0 0.0
        %1453 = vmatpush1.msra.mxu0 0.0
        %1454 = vmatprep.subr.mxu0 0.0
        %1455 = vmatpush1.msra.mxu0 0.0
        %1456 = vmatprep.subr.mxu0 0.0
        %1457 = vmatpush1.msra.mxu0 0.0
        %1458 = vmatprep.subr.mxu0 0.0
        %1459 = vmatpush1.msra.mxu0 0.0
        %1460 = vmatprep.subr.mxu0 0.0
        %1461 = vmatpush1.msra.mxu0 0.0
        %1462 = vmatprep.subr.mxu0 0.0
        %1463 = vmatpush1.msra.mxu0 0.0
        %1464 = vmatprep.subr.mxu0 0.0
        %1465 = vmatpush1.msra.mxu0 0.0
        %1466 = vmatprep.subr.mxu0 0.0
        %1467 = vmatpush1.msra.mxu0 0.0
        %1468 = vmatprep.subr.mxu0 0.0
        %1469 = vmatpush1.msra.mxu0 0.0
        %1470 = vmatprep.subr.mxu0 0.0
        %1471 = vmatpush1.msra.mxu0 0.0
        %1472 = vmatprep.subr.mxu0 0.0
        %1473 = vmatpush1.msra.mxu0 0.0
        %1474 = vmatprep.subr.mxu0 0.0
        %1475 = vmatpush1.msra.mxu0 0.0
        %1476 = vmatprep.subr.mxu0 0.0
        %1477 = vmatpush1.msra.mxu0 0.0
        %1478 = vmatprep.subr.mxu0 0.0
        %1479 = vmatpush1.msra.mxu0 0.0
        %1480 = vmatprep.subr.mxu0 0.0
        %1481 = vmatpush1.msra.mxu0 0.0
        %1482 = vmatprep.subr.mxu0 0.0
        %1483 = vmatpush1.msra.mxu0 0.0
        %1484 = vmatprep.mubr.f32.mxu0 0.0
        %1485 = vmatmul.mubr.f32.gmra.mrb[0].mxu0 %v1401
        %v1486 = vpop.f32.mrb[0].mxu0
        %v1487 = vadd.f32 0.0, %v1486
        %v1488 = vpop.f32.mrb[0].mxu0
        %1489 = vmatprep.mubr.f32.mxu0 0.0
        %1490 = vmatmul.mubr.f32.gmra.mrb[0].mxu0 %v1402
        %v1491 = vpop.f32.mrb[0].mxu0
        %v1492 = vadd.f32 0.0, %v1491
        %v1493 = vpop.f32.mrb[0].mxu0
        %1494 = vdwg.mxu0
        %v1495 = vadd.f32 %v1399, %v1487
        %v1496 = vadd.f32 %v1400, %v1492
        %1497 = vst [vmem:[#allocation4] sm:$0xff] %v1495
        %1498 = vst [vmem:[#allocation4 + $0x8] sm:$0xff] %v1496
        %v1499 = vld [vmem:[#allocation4] ss:$2 sm:$0xff]
        %s1500 = scalar_lea.vmem [#allocation4], 1
        %v1501 = vld [vmem:[%s1500] ss:$2 sm:$0xff]
        %v1502 = vmax.f32 %v1499, %v1501
        %vm1503 = vcmp.gt.f32.partialorder %v1502, 0.0
        %v1504 = vmul.f32 %v1502, 1.442695
        %v1505 = vpow.pop %v1504
        %v1506 = vsub.f32 %v1505, 1.0
        %v1507 = vsel %vm1503, %v1502, %v1506
        %1508 = vst [vmem:[#allocation5] sm:$0xff] %v1507
        %v1509 = vld [vmem:[#allocation5] sm:$0xf]
        %v1510 = vld [vmem:[#allocation11] sm:$0xff]
        %v1511 = vld [vmem:[#allocation11 + $0x8] sm:$0xff]
        %v1512 = vld [vmem:[#allocation11 + $0x10] sm:$0xff]
        %v1513 = vld [vmem:[#allocation11 + $0x18] sm:$0xff]
        %v1514 = vld [vmem:[#allocation11 + $0x20] sm:$0xff]
        %v1515 = vld [vmem:[#allocation11 + $0x28] sm:$0xff]
        %v1516 = vld [vmem:[#allocation11 + $0x30] sm:$0xff]
        %v1517 = vld [vmem:[#allocation11 + $0x38] sm:$0xff]
        %v1518 = vld [vmem:[#allocation11 + $0x40] sm:$0xff]
        %v1519 = vld [vmem:[#allocation11 + $0x48] sm:$0xff]
        %v1520 = vld [vmem:[#allocation11 + $0x50] sm:$0xff]
        %v1521 = vld [vmem:[#allocation11 + $0x58] sm:$0xff]
        %v1522 = vld [vmem:[#allocation11 + $0x60] sm:$0xff]
        %v1523 = vld [vmem:[#allocation11 + $0x68] sm:$0xff]
        %v1524 = vld [vmem:[#allocation11 + $0x70] sm:$0xff]
        %v1525 = vld [vmem:[#allocation11 + $0x78] sm:$0xff]
        %1526 = vmatprep.subr.mxu0 0.0
        %1527 = vmatpush1.msra.mxu0 %v1510
        %1528 = vmatprep.subr.mxu0 0.0
        %1529 = vmatpush1.msra.mxu0 %v1511
        %1530 = vmatprep.subr.mxu0 0.0
        %1531 = vmatpush1.msra.mxu0 %v1512
        %1532 = vmatprep.subr.mxu0 0.0
        %1533 = vmatpush1.msra.mxu0 %v1513
        %1534 = vmatprep.subr.mxu0 0.0
        %1535 = vmatpush1.msra.mxu0 %v1514
        %1536 = vmatprep.subr.mxu0 0.0
        %1537 = vmatpush1.msra.mxu0 %v1515
        %1538 = vmatprep.subr.mxu0 0.0
        %1539 = vmatpush1.msra.mxu0 %v1516
        %1540 = vmatprep.subr.mxu0 0.0
        %1541 = vmatpush1.msra.mxu0 %v1517
        %1542 = vmatprep.subr.mxu0 0.0
        %1543 = vmatpush1.msra.mxu0 %v1518
        %1544 = vmatprep.subr.mxu0 0.0
        %1545 = vmatpush1.msra.mxu0 %v1519
        %1546 = vmatprep.subr.mxu0 0.0
        %1547 = vmatpush1.msra.mxu0 %v1520
        %1548 = vmatprep.subr.mxu0 0.0
        %1549 = vmatpush1.msra.mxu0 %v1521
        %1550 = vmatprep.subr.mxu0 0.0
        %1551 = vmatpush1.msra.mxu0 %v1522
        %1552 = vmatprep.subr.mxu0 0.0
        %1553 = vmatpush1.msra.mxu0 %v1523
        %1554 = vmatprep.subr.mxu0 0.0
        %1555 = vmatpush1.msra.mxu0 %v1524
        %1556 = vmatprep.subr.mxu0 0.0
        %1557 = vmatpush1.msra.mxu0 %v1525
        %1558 = vmatprep.subr.mxu0 0.0
        %1559 = vmatpush1.msra.mxu0 0.0
        %1560 = vmatprep.subr.mxu0 0.0
        %1561 = vmatpush1.msra.mxu0 0.0
        %1562 = vmatprep.subr.mxu0 0.0
        %1563 = vmatpush1.msra.mxu0 0.0
        %1564 = vmatprep.subr.mxu0 0.0
        %1565 = vmatpush1.msra.mxu0 0.0
        %1566 = vmatprep.subr.mxu0 0.0
        %1567 = vmatpush1.msra.mxu0 0.0
        %1568 = vmatprep.subr.mxu0 0.0
        %1569 = vmatpush1.msra.mxu0 0.0
        %1570 = vmatprep.subr.mxu0 0.0
        %1571 = vmatpush1.msra.mxu0 0.0
        %1572 = vmatprep.subr.mxu0 0.0
        %1573 = vmatpush1.msra.mxu0 0.0
        %1574 = vmatprep.subr.mxu0 0.0
        %1575 = vmatpush1.msra.mxu0 0.0
        %1576 = vmatprep.subr.mxu0 0.0
        %1577 = vmatpush1.msra.mxu0 0.0
        %1578 = vmatprep.subr.mxu0 0.0
        %1579 = vmatpush1.msra.mxu0 0.0
        %1580 = vmatprep.subr.mxu0 0.0
        %1581 = vmatpush1.msra.mxu0 0.0
        %1582 = vmatprep.subr.mxu0 0.0
        %1583 = vmatpush1.msra.mxu0 0.0
        %1584 = vmatprep.subr.mxu0 0.0
        %1585 = vmatpush1.msra.mxu0 0.0
        %1586 = vmatprep.subr.mxu0 0.0
        %1587 = vmatpush1.msra.mxu0 0.0
        %1588 = vmatprep.subr.mxu0 0.0
        %1589 = vmatpush1.msra.mxu0 0.0
        %1590 = vmatprep.mubr.f32.mxu0 0.0
        %1591 = vmatmul.mubr.f32.gmra.mrb[0].mxu0 %v1509
        %v1592 = vpop.f32.mrb[0].mxu0
        %v1593 = vadd.f32 0.0, %v1592
        %v1594 = vpop.f32.mrb[0].mxu0
        %1595 = vdwg.mxu0
        %v1597 = vlaneseq
        %v1598 = vshrl.u32 %v1597, 7
        %v1599 = vsub.s32 0, %v1598
        %v1600 = vrot.slane %v383, %v1599
        %v1602 = vadd.f32 %v1600, %v1593
        %v1603 = vld [vmem:[#allocation5 + $0x1] sm:$0xf]
        %s1604 = scalar_lea.vmem [#allocation11], 128
        %v1605 = vld [vmem:[%s1604] sm:$0xff]
        %v1606 = vld [vmem:[%s1604 + $0x8] sm:$0xff]
        %v1607 = vld [vmem:[%s1604 + $0x10] sm:$0xff]
        %v1608 = vld [vmem:[%s1604 + $0x18] sm:$0xff]
        %v1609 = vld [vmem:[%s1604 + $0x20] sm:$0xff]
        %v1610 = vld [vmem:[%s1604 + $0x28] sm:$0xff]
        %v1611 = vld [vmem:[%s1604 + $0x30] sm:$0xff]
        %v1612 = vld [vmem:[%s1604 + $0x38] sm:$0xff]
        %v1613 = vld [vmem:[%s1604 + $0x40] sm:$0xff]
        %v1614 = vld [vmem:[%s1604 + $0x48] sm:$0xff]
        %v1615 = vld [vmem:[%s1604 + $0x50] sm:$0xff]
        %v1616 = vld [vmem:[%s1604 + $0x58] sm:$0xff]
        %v1617 = vld [vmem:[%s1604 + $0x60] sm:$0xff]
        %v1618 = vld [vmem:[%s1604 + $0x68] sm:$0xff]
        %v1619 = vld [vmem:[%s1604 + $0x70] sm:$0xff]
        %v1620 = vld [vmem:[%s1604 + $0x78] sm:$0xff]
        %1621 = vmatprep.subr.mxu0 0.0
        %1622 = vmatpush1.msra.mxu0 %v1605
        %1623 = vmatprep.subr.mxu0 0.0
        %1624 = vmatpush1.msra.mxu0 %v1606
        %1625 = vmatprep.subr.mxu0 0.0
        %1626 = vmatpush1.msra.mxu0 %v1607
        %1627 = vmatprep.subr.mxu0 0.0
        %1628 = vmatpush1.msra.mxu0 %v1608
        %1629 = vmatprep.subr.mxu0 0.0
        %1630 = vmatpush1.msra.mxu0 %v1609
        %1631 = vmatprep.subr.mxu0 0.0
        %1632 = vmatpush1.msra.mxu0 %v1610
        %1633 = vmatprep.subr.mxu0 0.0
        %1634 = vmatpush1.msra.mxu0 %v1611
        %1635 = vmatprep.subr.mxu0 0.0
        %1636 = vmatpush1.msra.mxu0 %v1612
        %1637 = vmatprep.subr.mxu0 0.0
        %1638 = vmatpush1.msra.mxu0 %v1613
        %1639 = vmatprep.subr.mxu0 0.0
        %1640 = vmatpush1.msra.mxu0 %v1614
        %1641 = vmatprep.subr.mxu0 0.0
        %1642 = vmatpush1.msra.mxu0 %v1615
        %1643 = vmatprep.subr.mxu0 0.0
        %1644 = vmatpush1.msra.mxu0 %v1616
        %1645 = vmatprep.subr.mxu0 0.0
        %1646 = vmatpush1.msra.mxu0 %v1617
        %1647 = vmatprep.subr.mxu0 0.0
        %1648 = vmatpush1.msra.mxu0 %v1618
        %1649 = vmatprep.subr.mxu0 0.0
        %1650 = vmatpush1.msra.mxu0 %v1619
        %1651 = vmatprep.subr.mxu0 0.0
        %1652 = vmatpush1.msra.mxu0 %v1620
        %1653 = vmatprep.subr.mxu0 0.0
        %1654 = vmatpush1.msra.mxu0 0.0
        %1655 = vmatprep.subr.mxu0 0.0
        %1656 = vmatpush1.msra.mxu0 0.0
        %1657 = vmatprep.subr.mxu0 0.0
        %1658 = vmatpush1.msra.mxu0 0.0
        %1659 = vmatprep.subr.mxu0 0.0
        %1660 = vmatpush1.msra.mxu0 0.0
        %1661 = vmatprep.subr.mxu0 0.0
        %1662 = vmatpush1.msra.mxu0 0.0
        %1663 = vmatprep.subr.mxu0 0.0
        %1664 = vmatpush1.msra.mxu0 0.0
        %1665 = vmatprep.subr.mxu0 0.0
        %1666 = vmatpush1.msra.mxu0 0.0
        %1667 = vmatprep.subr.mxu0 0.0
        %1668 = vmatpush1.msra.mxu0 0.0
        %1669 = vmatprep.subr.mxu0 0.0
        %1670 = vmatpush1.msra.mxu0 0.0
        %1671 = vmatprep.subr.mxu0 0.0
        %1672 = vmatpush1.msra.mxu0 0.0
        %1673 = vmatprep.subr.mxu0 0.0
        %1674 = vmatpush1.msra.mxu0 0.0
        %1675 = vmatprep.subr.mxu0 0.0
        %1676 = vmatpush1.msra.mxu0 0.0
        %1677 = vmatprep.subr.mxu0 0.0
        %1678 = vmatpush1.msra.mxu0 0.0
        %1679 = vmatprep.subr.mxu0 0.0
        %1680 = vmatpush1.msra.mxu0 0.0
        %1681 = vmatprep.subr.mxu0 0.0
        %1682 = vmatpush1.msra.mxu0 0.0
        %1683 = vmatprep.subr.mxu0 0.0
        %1684 = vmatpush1.msra.mxu0 0.0
        %1685 = vmatprep.mubr.f32.mxu0 0.0
        %1686 = vmatmul.mubr.f32.gmra.mrb[0].mxu0 %v1603
        %v1687 = vpop.f32.mrb[0].mxu0
        %v1688 = vadd.f32 0.0, %v1687
        %v1689 = vpop.f32.mrb[0].mxu0
        %1690 = vdwg.mxu0
        %v1691 = vadd.f32 %v1602, %v1688
        %v1692 = vld [vmem:[#allocation5 + $0x2] sm:$0xf]
        %s1693 = scalar_lea.vmem [#allocation11], 256
        %v1694 = vld [vmem:[%s1693] sm:$0xff]
        %v1695 = vld [vmem:[%s1693 + $0x8] sm:$0xff]
        %v1696 = vld [vmem:[%s1693 + $0x10] sm:$0xff]
        %v1697 = vld [vmem:[%s1693 + $0x18] sm:$0xff]
        %v1698 = vld [vmem:[%s1693 + $0x20] sm:$0xff]
        %v1699 = vld [vmem:[%s1693 + $0x28] sm:$0xff]
        %v1700 = vld [vmem:[%s1693 + $0x30] sm:$0xff]
        %v1701 = vld [vmem:[%s1693 + $0x38] sm:$0xff]
        %v1702 = vld [vmem:[%s1693 + $0x40] sm:$0xff]
        %v1703 = vld [vmem:[%s1693 + $0x48] sm:$0xff]
        %v1704 = vld [vmem:[%s1693 + $0x50] sm:$0xff]
        %v1705 = vld [vmem:[%s1693 + $0x58] sm:$0xff]
        %v1706 = vld [vmem:[%s1693 + $0x60] sm:$0xff]
        %v1707 = vld [vmem:[%s1693 + $0x68] sm:$0xff]
        %v1708 = vld [vmem:[%s1693 + $0x70] sm:$0xff]
        %v1709 = vld [vmem:[%s1693 + $0x78] sm:$0xff]
        %1710 = vmatprep.subr.mxu0 0.0
        %1711 = vmatpush1.msra.mxu0 %v1694
        %1712 = vmatprep.subr.mxu0 0.0
        %1713 = vmatpush1.msra.mxu0 %v1695
        %1714 = vmatprep.subr.mxu0 0.0
        %1715 = vmatpush1.msra.mxu0 %v1696
        %1716 = vmatprep.subr.mxu0 0.0
        %1717 = vmatpush1.msra.mxu0 %v1697
        %1718 = vmatprep.subr.mxu0 0.0
        %1719 = vmatpush1.msra.mxu0 %v1698
        %1720 = vmatprep.subr.mxu0 0.0
        %1721 = vmatpush1.msra.mxu0 %v1699
        %1722 = vmatprep.subr.mxu0 0.0
        %1723 = vmatpush1.msra.mxu0 %v1700
        %1724 = vmatprep.subr.mxu0 0.0
        %1725 = vmatpush1.msra.mxu0 %v1701
        %1726 = vmatprep.subr.mxu0 0.0
        %1727 = vmatpush1.msra.mxu0 %v1702
        %1728 = vmatprep.subr.mxu0 0.0
        %1729 = vmatpush1.msra.mxu0 %v1703
        %1730 = vmatprep.subr.mxu0 0.0
        %1731 = vmatpush1.msra.mxu0 %v1704
        %1732 = vmatprep.subr.mxu0 0.0
        %1733 = vmatpush1.msra.mxu0 %v1705
        %1734 = vmatprep.subr.mxu0 0.0
        %1735 = vmatpush1.msra.mxu0 %v1706
        %1736 = vmatprep.subr.mxu0 0.0
        %1737 = vmatpush1.msra.mxu0 %v1707
        %1738 = vmatprep.subr.mxu0 0.0
        %1739 = vmatpush1.msra.mxu0 %v1708
        %1740 = vmatprep.subr.mxu0 0.0
        %1741 = vmatpush1.msra.mxu0 %v1709
        %1742 = vmatprep.subr.mxu0 0.0
        %1743 = vmatpush1.msra.mxu0 0.0
        %1744 = vmatprep.subr.mxu0 0.0
        %1745 = vmatpush1.msra.mxu0 0.0
        %1746 = vmatprep.subr.mxu0 0.0
        %1747 = vmatpush1.msra.mxu0 0.0
        %1748 = vmatprep.subr.mxu0 0.0
        %1749 = vmatpush1.msra.mxu0 0.0
        %1750 = vmatprep.subr.mxu0 0.0
        %1751 = vmatpush1.msra.mxu0 0.0
        %1752 = vmatprep.subr.mxu0 0.0
        %1753 = vmatpush1.msra.mxu0 0.0
        %1754 = vmatprep.subr.mxu0 0.0
        %1755 = vmatpush1.msra.mxu0 0.0
        %1756 = vmatprep.subr.mxu0 0.0
        %1757 = vmatpush1.msra.mxu0 0.0
        %1758 = vmatprep.subr.mxu0 0.0
        %1759 = vmatpush1.msra.mxu0 0.0
        %1760 = vmatprep.subr.mxu0 0.0
        %1761 = vmatpush1.msra.mxu0 0.0
        %1762 = vmatprep.subr.mxu0 0.0
        %1763 = vmatpush1.msra.mxu0 0.0
        %1764 = vmatprep.subr.mxu0 0.0
        %1765 = vmatpush1.msra.mxu0 0.0
        %1766 = vmatprep.subr.mxu0 0.0
        %1767 = vmatpush1.msra.mxu0 0.0
        %1768 = vmatprep.subr.mxu0 0.0
        %1769 = vmatpush1.msra.mxu0 0.0
        %1770 = vmatprep.subr.mxu0 0.0
        %1771 = vmatpush1.msra.mxu0 0.0
        %1772 = vmatprep.subr.mxu0 0.0
        %1773 = vmatpush1.msra.mxu0 0.0
        %1774 = vmatprep.mubr.f32.mxu0 0.0
        %1775 = vmatmul.mubr.f32.gmra.mrb[0].mxu0 %v1692
        %v1776 = vpop.f32.mrb[0].mxu0
        %v1777 = vadd.f32 0.0, %v1776
        %v1778 = vpop.f32.mrb[0].mxu0
        %1779 = vdwg.mxu0
        %v1780 = vadd.f32 %v1691, %v1777
        %v1781 = vld [vmem:[#allocation5 + $0x3] sm:$0xf]
        %s1782 = scalar_lea.vmem [#allocation11], 384
        %v1783 = vld [vmem:[%s1782] sm:$0xff]
        %v1784 = vld [vmem:[%s1782 + $0x8] sm:$0xff]
        %v1785 = vld [vmem:[%s1782 + $0x10] sm:$0xff]
        %v1786 = vld [vmem:[%s1782 + $0x18] sm:$0xff]
        %v1787 = vld [vmem:[%s1782 + $0x20] sm:$0xff]
        %v1788 = vld [vmem:[%s1782 + $0x28] sm:$0xff]
        %v1789 = vld [vmem:[%s1782 + $0x30] sm:$0xff]
        %v1790 = vld [vmem:[%s1782 + $0x38] sm:$0xff]
        %v1791 = vld [vmem:[%s1782 + $0x40] sm:$0xff]
        %v1792 = vld [vmem:[%s1782 + $0x48] sm:$0xff]
        %v1793 = vld [vmem:[%s1782 + $0x50] sm:$0xff]
        %v1794 = vld [vmem:[%s1782 + $0x58] sm:$0xff]
        %v1795 = vld [vmem:[%s1782 + $0x60] sm:$0xff]
        %v1796 = vld [vmem:[%s1782 + $0x68] sm:$0xff]
        %v1797 = vld [vmem:[%s1782 + $0x70] sm:$0xff]
        %v1798 = vld [vmem:[%s1782 + $0x78] sm:$0xff]
        %1799 = vmatprep.subr.mxu0 0.0
        %1800 = vmatpush1.msra.mxu0 %v1783
        %1801 = vmatprep.subr.mxu0 0.0
        %1802 = vmatpush1.msra.mxu0 %v1784
        %1803 = vmatprep.subr.mxu0 0.0
        %1804 = vmatpush1.msra.mxu0 %v1785
        %1805 = vmatprep.subr.mxu0 0.0
        %1806 = vmatpush1.msra.mxu0 %v1786
        %1807 = vmatprep.subr.mxu0 0.0
        %1808 = vmatpush1.msra.mxu0 %v1787
        %1809 = vmatprep.subr.mxu0 0.0
        %1810 = vmatpush1.msra.mxu0 %v1788
        %1811 = vmatprep.subr.mxu0 0.0
        %1812 = vmatpush1.msra.mxu0 %v1789
        %1813 = vmatprep.subr.mxu0 0.0
        %1814 = vmatpush1.msra.mxu0 %v1790
        %1815 = vmatprep.subr.mxu0 0.0
        %1816 = vmatpush1.msra.mxu0 %v1791
        %1817 = vmatprep.subr.mxu0 0.0
        %1818 = vmatpush1.msra.mxu0 %v1792
        %1819 = vmatprep.subr.mxu0 0.0
        %1820 = vmatpush1.msra.mxu0 %v1793
        %1821 = vmatprep.subr.mxu0 0.0
        %1822 = vmatpush1.msra.mxu0 %v1794
        %1823 = vmatprep.subr.mxu0 0.0
        %1824 = vmatpush1.msra.mxu0 %v1795
        %1825 = vmatprep.subr.mxu0 0.0
        %1826 = vmatpush1.msra.mxu0 %v1796
        %1827 = vmatprep.subr.mxu0 0.0
        %1828 = vmatpush1.msra.mxu0 %v1797
        %1829 = vmatprep.subr.mxu0 0.0
        %1830 = vmatpush1.msra.mxu0 %v1798
        %1831 = vmatprep.subr.mxu0 0.0
        %1832 = vmatpush1.msra.mxu0 0.0
        %1833 = vmatprep.subr.mxu0 0.0
        %1834 = vmatpush1.msra.mxu0 0.0
        %1835 = vmatprep.subr.mxu0 0.0
        %1836 = vmatpush1.msra.mxu0 0.0
        %1837 = vmatprep.subr.mxu0 0.0
        %1838 = vmatpush1.msra.mxu0 0.0
        %1839 = vmatprep.subr.mxu0 0.0
        %1840 = vmatpush1.msra.mxu0 0.0
        %1841 = vmatprep.subr.mxu0 0.0
        %1842 = vmatpush1.msra.mxu0 0.0
        %1843 = vmatprep.subr.mxu0 0.0
        %1844 = vmatpush1.msra.mxu0 0.0
        %1845 = vmatprep.subr.mxu0 0.0
        %1846 = vmatpush1.msra.mxu0 0.0
        %1847 = vmatprep.subr.mxu0 0.0
        %1848 = vmatpush1.msra.mxu0 0.0
        %1849 = vmatprep.subr.mxu0 0.0
        %1850 = vmatpush1.msra.mxu0 0.0
        %1851 = vmatprep.subr.mxu0 0.0
        %1852 = vmatpush1.msra.mxu0 0.0
        %1853 = vmatprep.subr.mxu0 0.0
        %1854 = vmatpush1.msra.mxu0 0.0
        %1855 = vmatprep.subr.mxu0 0.0
        %1856 = vmatpush1.msra.mxu0 0.0
        %1857 = vmatprep.subr.mxu0 0.0
        %1858 = vmatpush1.msra.mxu0 0.0
        %1859 = vmatprep.subr.mxu0 0.0
        %1860 = vmatpush1.msra.mxu0 0.0
        %1861 = vmatprep.subr.mxu0 0.0
        %1862 = vmatpush1.msra.mxu0 0.0
        %1863 = vmatprep.mubr.f32.mxu0 0.0
        %1864 = vmatmul.mubr.f32.gmra.mrb[0].mxu0 %v1781
        %v1865 = vpop.f32.mrb[0].mxu0
        %v1866 = vadd.f32 0.0, %v1865
        %v1867 = vpop.f32.mrb[0].mxu0
        %1868 = vdwg.mxu0
        %v1869 = vadd.f32 %v1780, %v1866
        %v1870 = vld [vmem:[#allocation5 + $0x4] sm:$0xf]
        %s1871 = scalar_lea.vmem [#allocation11], 512
        %v1872 = vld [vmem:[%s1871] sm:$0xff]
        %v1873 = vld [vmem:[%s1871 + $0x8] sm:$0xff]
        %v1874 = vld [vmem:[%s1871 + $0x10] sm:$0xff]
        %v1875 = vld [vmem:[%s1871 + $0x18] sm:$0xff]
        %v1876 = vld [vmem:[%s1871 + $0x20] sm:$0xff]
        %v1877 = vld [vmem:[%s1871 + $0x28] sm:$0xff]
        %v1878 = vld [vmem:[%s1871 + $0x30] sm:$0xff]
        %v1879 = vld [vmem:[%s1871 + $0x38] sm:$0xff]
        %v1880 = vld [vmem:[%s1871 + $0x40] sm:$0xff]
        %v1881 = vld [vmem:[%s1871 + $0x48] sm:$0xff]
        %v1882 = vld [vmem:[%s1871 + $0x50] sm:$0xff]
        %v1883 = vld [vmem:[%s1871 + $0x58] sm:$0xff]
        %v1884 = vld [vmem:[%s1871 + $0x60] sm:$0xff]
        %v1885 = vld [vmem:[%s1871 + $0x68] sm:$0xff]
        %v1886 = vld [vmem:[%s1871 + $0x70] sm:$0xff]
        %v1887 = vld [vmem:[%s1871 + $0x78] sm:$0xff]
        %1888 = vmatprep.subr.mxu0 0.0
        %1889 = vmatpush1.msra.mxu0 %v1872
        %1890 = vmatprep.subr.mxu0 0.0
        %1891 = vmatpush1.msra.mxu0 %v1873
        %1892 = vmatprep.subr.mxu0 0.0
        %1893 = vmatpush1.msra.mxu0 %v1874
        %1894 = vmatprep.subr.mxu0 0.0
        %1895 = vmatpush1.msra.mxu0 %v1875
        %1896 = vmatprep.subr.mxu0 0.0
        %1897 = vmatpush1.msra.mxu0 %v1876
        %1898 = vmatprep.subr.mxu0 0.0
        %1899 = vmatpush1.msra.mxu0 %v1877
        %1900 = vmatprep.subr.mxu0 0.0
        %1901 = vmatpush1.msra.mxu0 %v1878
        %1902 = vmatprep.subr.mxu0 0.0
        %1903 = vmatpush1.msra.mxu0 %v1879
        %1904 = vmatprep.subr.mxu0 0.0
        %1905 = vmatpush1.msra.mxu0 %v1880
        %1906 = vmatprep.subr.mxu0 0.0
        %1907 = vmatpush1.msra.mxu0 %v1881
        %1908 = vmatprep.subr.mxu0 0.0
        %1909 = vmatpush1.msra.mxu0 %v1882
        %1910 = vmatprep.subr.mxu0 0.0
        %1911 = vmatpush1.msra.mxu0 %v1883
        %1912 = vmatprep.subr.mxu0 0.0
        %1913 = vmatpush1.msra.mxu0 %v1884
        %1914 = vmatprep.subr.mxu0 0.0
        %1915 = vmatpush1.msra.mxu0 %v1885
        %1916 = vmatprep.subr.mxu0 0.0
        %1917 = vmatpush1.msra.mxu0 %v1886
        %1918 = vmatprep.subr.mxu0 0.0
        %1919 = vmatpush1.msra.mxu0 %v1887
        %1920 = vmatprep.subr.mxu0 0.0
        %1921 = vmatpush1.msra.mxu0 0.0
        %1922 = vmatprep.subr.mxu0 0.0
        %1923 = vmatpush1.msra.mxu0 0.0
        %1924 = vmatprep.subr.mxu0 0.0
        %1925 = vmatpush1.msra.mxu0 0.0
        %1926 = vmatprep.subr.mxu0 0.0
        %1927 = vmatpush1.msra.mxu0 0.0
        %1928 = vmatprep.subr.mxu0 0.0
        %1929 = vmatpush1.msra.mxu0 0.0
        %1930 = vmatprep.subr.mxu0 0.0
        %1931 = vmatpush1.msra.mxu0 0.0
        %1932 = vmatprep.subr.mxu0 0.0
        %1933 = vmatpush1.msra.mxu0 0.0
        %1934 = vmatprep.subr.mxu0 0.0
        %1935 = vmatpush1.msra.mxu0 0.0
        %1936 = vmatprep.subr.mxu0 0.0
        %1937 = vmatpush1.msra.mxu0 0.0
        %1938 = vmatprep.subr.mxu0 0.0
        %1939 = vmatpush1.msra.mxu0 0.0
        %1940 = vmatprep.subr.mxu0 0.0
        %1941 = vmatpush1.msra.mxu0 0.0
        %1942 = vmatprep.subr.mxu0 0.0
        %1943 = vmatpush1.msra.mxu0 0.0
        %1944 = vmatprep.subr.mxu0 0.0
        %1945 = vmatpush1.msra.mxu0 0.0
        %1946 = vmatprep.subr.mxu0 0.0
        %1947 = vmatpush1.msra.mxu0 0.0
        %1948 = vmatprep.subr.mxu0 0.0
        %1949 = vmatpush1.msra.mxu0 0.0
        %1950 = vmatprep.subr.mxu0 0.0
        %1951 = vmatpush1.msra.mxu0 0.0
        %1952 = vmatprep.mubr.f32.mxu0 0.0
        %1953 = vmatmul.mubr.f32.gmra.mrb[0].mxu0 %v1870
        %v1954 = vpop.f32.mrb[0].mxu0
        %v1955 = vadd.f32 0.0, %v1954
        %v1956 = vpop.f32.mrb[0].mxu0
        %1957 = vdwg.mxu0
        %v1958 = vadd.f32 %v1869, %v1955
        %1959 = vst [vmem:[#allocation6] sm:$0xf] %v1958
        %v1960 = vld [vmem:[#allocation6] ss:$2 sm:$0x3]
        %s1961 = scalar_lea.vmem [#allocation6], 1
        %v1962 = vld [vmem:[%s1961] ss:$2 sm:$0x3]
        %v1963 = vmax.f32 %v1960, %v1962
        %vm1964 = vcmp.gt.f32.partialorder %v1963, 0.0
        %v1965 = vmul.f32 %v1963, 1.442695
        %v1966 = vpow.pop %v1965
        %v1967 = vsub.f32 %v1966, 1.0
        %v1968 = vsel %vm1964, %v1963, %v1967
        %1969 = vst [vmem:[#allocation7] sm:$0x1] %v1968
        %v1972 = vunpack.c.l.s4 1983009808
        %v1973 = vunpack.c.0.s8 %v1972
        %v1974 = vlaneseq
        %v1975 = vshrl.u32 %v1974, 7
        %v1976 = vsub.s32 %v1973, %v1975
        %v1977 = vrot.slane %v1968, %v1976
        %v1978 = vrot.slane %v1977, 7
        %v1979 = vrot.slane %v1978, 2
        %1981 = vst [vmem:[#allocation7 + $0x2] sm:$0x1] %v1979
        %s1982 = scalar_lea.vmem %s378, 48
        %v1983 = vld [vmem:[%s1982] sm:$0xff]
        %v1984 = vld [vmem:[%s1982 + $0x8] sm:$0xff]
        %v1985 = vld [vmem:[%s1982 + $0x10] sm:$0xff]
        %v1986 = vld [vmem:[%s1982 + $0x18] sm:$0xff]
        %v1987 = vld [vmem:[%s1982 + $0x20] sm:$0xff]
        %v1988 = vld [vmem:[%s1] sm:$0xff]
        %v1990 = vsel %vm390, %v1983, 0
        %v1993 = vsel %vm390, %v1984, 0
        %v1996 = vsel %vm390, %v1985, 0
        %v1999 = vsel %vm390, %v1986, 0
        %v2002 = vsel %vm390, %v1987, 0
        %2004 = vmatprep.subr.mxu0 0.0
        %2005 = vmatpush1.msra.mxu0 %v1988
        %2006 = vmatprep.subr.mxu0 0.0
        %2007 = vmatpush1.msra.mxu0 0.0
        %2008 = vmatprep.subr.mxu0 0.0
        %2009 = vmatpush1.msra.mxu0 0.0
        %2010 = vmatprep.subr.mxu0 0.0
        %2011 = vmatpush1.msra.mxu0 0.0
        %2012 = vmatprep.subr.mxu0 0.0
        %2013 = vmatpush1.msra.mxu0 0.0
        %2014 = vmatprep.subr.mxu0 0.0
        %2015 = vmatpush1.msra.mxu0 0.0
        %2016 = vmatprep.subr.mxu0 0.0
        %2017 = vmatpush1.msra.mxu0 0.0
        %2018 = vmatprep.subr.mxu0 0.0
        %2019 = vmatpush1.msra.mxu0 0.0
        %2020 = vmatprep.subr.mxu0 0.0
        %2021 = vmatpush1.msra.mxu0 0.0
        %2022 = vmatprep.subr.mxu0 0.0
        %2023 = vmatpush1.msra.mxu0 0.0
        %2024 = vmatprep.subr.mxu0 0.0
        %2025 = vmatpush1.msra.mxu0 0.0
        %2026 = vmatprep.subr.mxu0 0.0
        %2027 = vmatpush1.msra.mxu0 0.0
        %2028 = vmatprep.subr.mxu0 0.0
        %2029 = vmatpush1.msra.mxu0 0.0
        %2030 = vmatprep.subr.mxu0 0.0
        %2031 = vmatpush1.msra.mxu0 0.0
        %2032 = vmatprep.subr.mxu0 0.0
        %2033 = vmatpush1.msra.mxu0 0.0
        %2034 = vmatprep.subr.mxu0 0.0
        %2035 = vmatpush1.msra.mxu0 0.0
        %2036 = vmatprep.subr.mxu0 0.0
        %2037 = vmatpush1.msra.mxu0 0.0
        %2038 = vmatprep.subr.mxu0 0.0
        %2039 = vmatpush1.msra.mxu0 0.0
        %2040 = vmatprep.subr.mxu0 0.0
        %2041 = vmatpush1.msra.mxu0 0.0
        %2042 = vmatprep.subr.mxu0 0.0
        %2043 = vmatpush1.msra.mxu0 0.0
        %2044 = vmatprep.subr.mxu0 0.0
        %2045 = vmatpush1.msra.mxu0 0.0
        %2046 = vmatprep.subr.mxu0 0.0
        %2047 = vmatpush1.msra.mxu0 0.0
        %2048 = vmatprep.subr.mxu0 0.0
        %2049 = vmatpush1.msra.mxu0 0.0
        %2050 = vmatprep.subr.mxu0 0.0
        %2051 = vmatpush1.msra.mxu0 0.0
        %2052 = vmatprep.subr.mxu0 0.0
        %2053 = vmatpush1.msra.mxu0 0.0
        %2054 = vmatprep.subr.mxu0 0.0
        %2055 = vmatpush1.msra.mxu0 0.0
        %2056 = vmatprep.subr.mxu0 0.0
        %2057 = vmatpush1.msra.mxu0 0.0
        %2058 = vmatprep.subr.mxu0 0.0
        %2059 = vmatpush1.msra.mxu0 0.0
        %2060 = vmatprep.subr.mxu0 0.0
        %2061 = vmatpush1.msra.mxu0 0.0
        %2062 = vmatprep.subr.mxu0 0.0
        %2063 = vmatpush1.msra.mxu0 0.0
        %2064 = vmatprep.subr.mxu0 0.0
        %2065 = vmatpush1.msra.mxu0 0.0
        %2066 = vmatprep.subr.mxu0 0.0
        %2067 = vmatpush1.msra.mxu0 0.0
        %2068 = vmatprep.mubr.f32.mxu0 0.0
        %2069 = vmatmul.mubr.f32.gmra.mrb[0].mxu0 %v1990
        %v2070 = vpop.f32.mrb[0].mxu0
        %v2071 = vadd.f32 0.0, %v2070
        %v2072 = vpop.f32.mrb[0].mxu0
        %2073 = vmatprep.mubr.f32.mxu0 0.0
        %2074 = vmatmul.mubr.f32.gmra.mrb[0].mxu0 %v1993
        %v2075 = vpop.f32.mrb[0].mxu0
        %v2076 = vadd.f32 0.0, %v2075
        %v2077 = vpop.f32.mrb[0].mxu0
        %2078 = vmatprep.mubr.f32.mxu0 0.0
        %2079 = vmatmul.mubr.f32.gmra.mrb[0].mxu0 %v1996
        %v2080 = vpop.f32.mrb[0].mxu0
        %v2081 = vadd.f32 0.0, %v2080
        %v2082 = vpop.f32.mrb[0].mxu0
        %2083 = vmatprep.mubr.f32.mxu0 0.0
        %2084 = vmatmul.mubr.f32.gmra.mrb[0].mxu0 %v1999
        %v2085 = vpop.f32.mrb[0].mxu0
        %v2086 = vadd.f32 0.0, %v2085
        %v2087 = vpop.f32.mrb[0].mxu0
        %2088 = vmatprep.mubr.f32.mxu0 0.0
        %2089 = vmatmul.mubr.f32.gmra.mrb[0].mxu0 %v2002
        %v2090 = vpop.f32.mrb[0].mxu0
        %v2091 = vadd.f32 0.0, %v2090
        %v2092 = vpop.f32.mrb[0].mxu0
        %2093 = vdwg.mxu0
        %v2094 = vadd.f32 %v500, %v2071
        %v2095 = vadd.f32 %v500, %v2076
        %v2096 = vadd.f32 %v500, %v2081
        %v2097 = vadd.f32 %v500, %v2086
        %v2098 = vadd.f32 %v500, %v2091
        %v2099 = vld [vmem:[%s1982 + $0x1] sm:$0xff]
        %v2100 = vld [vmem:[%s1982 + $0x9] sm:$0xff]
        %v2101 = vld [vmem:[%s1982 + $0x11] sm:$0xff]
        %v2102 = vld [vmem:[%s1982 + $0x19] sm:$0xff]
        %v2103 = vld [vmem:[%s1982 + $0x21] sm:$0xff]
        %v2104 = vld [vmem:[%s512] sm:$0xff]
        %v2106 = vsel %vm390, %v2099, 0
        %v2109 = vsel %vm390, %v2100, 0
        %v2112 = vsel %vm390, %v2101, 0
        %v2115 = vsel %vm390, %v2102, 0
        %v2118 = vsel %vm390, %v2103, 0
        %2120 = vmatprep.subr.mxu0 0.0
        %2121 = vmatpush1.msra.mxu0 %v2104
        %2122 = vmatprep.subr.mxu0 0.0
        %2123 = vmatpush1.msra.mxu0 0.0
        %2124 = vmatprep.subr.mxu0 0.0
        %2125 = vmatpush1.msra.mxu0 0.0
        %2126 = vmatprep.subr.mxu0 0.0
        %2127 = vmatpush1.msra.mxu0 0.0
        %2128 = vmatprep.subr.mxu0 0.0
        %2129 = vmatpush1.msra.mxu0 0.0
        %2130 = vmatprep.subr.mxu0 0.0
        %2131 = vmatpush1.msra.mxu0 0.0
        %2132 = vmatprep.subr.mxu0 0.0
        %2133 = vmatpush1.msra.mxu0 0.0
        %2134 = vmatprep.subr.mxu0 0.0
        %2135 = vmatpush1.msra.mxu0 0.0
        %2136 = vmatprep.subr.mxu0 0.0
        %2137 = vmatpush1.msra.mxu0 0.0
        %2138 = vmatprep.subr.mxu0 0.0
        %2139 = vmatpush1.msra.mxu0 0.0
        %2140 = vmatprep.subr.mxu0 0.0
        %2141 = vmatpush1.msra.mxu0 0.0
        %2142 = vmatprep.subr.mxu0 0.0
        %2143 = vmatpush1.msra.mxu0 0.0
        %2144 = vmatprep.subr.mxu0 0.0
        %2145 = vmatpush1.msra.mxu0 0.0
        %2146 = vmatprep.subr.mxu0 0.0
        %2147 = vmatpush1.msra.mxu0 0.0
        %2148 = vmatprep.subr.mxu0 0.0
        %2149 = vmatpush1.msra.mxu0 0.0
        %2150 = vmatprep.subr.mxu0 0.0
        %2151 = vmatpush1.msra.mxu0 0.0
        %2152 = vmatprep.subr.mxu0 0.0
        %2153 = vmatpush1.msra.mxu0 0.0
        %2154 = vmatprep.subr.mxu0 0.0
        %2155 = vmatpush1.msra.mxu0 0.0
        %2156 = vmatprep.subr.mxu0 0.0
        %2157 = vmatpush1.msra.mxu0 0.0
        %2158 = vmatprep.subr.mxu0 0.0
        %2159 = vmatpush1.msra.mxu0 0.0
        %2160 = vmatprep.subr.mxu0 0.0
        %2161 = vmatpush1.msra.mxu0 0.0
        %2162 = vmatprep.subr.mxu0 0.0
        %2163 = vmatpush1.msra.mxu0 0.0
        %2164 = vmatprep.subr.mxu0 0.0
        %2165 = vmatpush1.msra.mxu0 0.0
        %2166 = vmatprep.subr.mxu0 0.0
        %2167 = vmatpush1.msra.mxu0 0.0
        %2168 = vmatprep.subr.mxu0 0.0
        %2169 = vmatpush1.msra.mxu0 0.0
        %2170 = vmatprep.subr.mxu0 0.0
        %2171 = vmatpush1.msra.mxu0 0.0
        %2172 = vmatprep.subr.mxu0 0.0
        %2173 = vmatpush1.msra.mxu0 0.0
        %2174 = vmatprep.subr.mxu0 0.0
        %2175 = vmatpush1.msra.mxu0 0.0
        %2176 = vmatprep.subr.mxu0 0.0
        %2177 = vmatpush1.msra.mxu0 0.0
        %2178 = vmatprep.subr.mxu0 0.0
        %2179 = vmatpush1.msra.mxu0 0.0
        %2180 = vmatprep.subr.mxu0 0.0
        %2181 = vmatpush1.msra.mxu0 0.0
        %2182 = vmatprep.subr.mxu0 0.0
        %2183 = vmatpush1.msra.mxu0 0.0
        %2184 = vmatprep.mubr.f32.mxu0 0.0
        %2185 = vmatmul.mubr.f32.gmra.mrb[0].mxu0 %v2106
        %v2186 = vpop.f32.mrb[0].mxu0
        %v2187 = vadd.f32 0.0, %v2186
        %v2188 = vpop.f32.mrb[0].mxu0
        %2189 = vmatprep.mubr.f32.mxu0 0.0
        %2190 = vmatmul.mubr.f32.gmra.mrb[0].mxu0 %v2109
        %v2191 = vpop.f32.mrb[0].mxu0
        %v2192 = vadd.f32 0.0, %v2191
        %v2193 = vpop.f32.mrb[0].mxu0
        %2194 = vmatprep.mubr.f32.mxu0 0.0
        %2195 = vmatmul.mubr.f32.gmra.mrb[0].mxu0 %v2112
        %v2196 = vpop.f32.mrb[0].mxu0
        %v2197 = vadd.f32 0.0, %v2196
        %v2198 = vpop.f32.mrb[0].mxu0
        %2199 = vmatprep.mubr.f32.mxu0 0.0
        %2200 = vmatmul.mubr.f32.gmra.mrb[0].mxu0 %v2115
        %v2201 = vpop.f32.mrb[0].mxu0
        %v2202 = vadd.f32 0.0, %v2201
        %v2203 = vpop.f32.mrb[0].mxu0
        %2204 = vmatprep.mubr.f32.mxu0 0.0
        %2205 = vmatmul.mubr.f32.gmra.mrb[0].mxu0 %v2118
        %v2206 = vpop.f32.mrb[0].mxu0
        %v2207 = vadd.f32 0.0, %v2206
        %v2208 = vpop.f32.mrb[0].mxu0
        %2209 = vdwg.mxu0
        %v2210 = vadd.f32 %v2094, %v2187
        %v2211 = vadd.f32 %v2095, %v2192
        %v2212 = vadd.f32 %v2096, %v2197
        %v2213 = vadd.f32 %v2097, %v2202
        %v2214 = vadd.f32 %v2098, %v2207
        %v2215 = vld [vmem:[%s1982 + $0x2] sm:$0xff]
        %v2216 = vld [vmem:[%s1982 + $0xa] sm:$0xff]
        %v2217 = vld [vmem:[%s1982 + $0x12] sm:$0xff]
        %v2218 = vld [vmem:[%s1982 + $0x1a] sm:$0xff]
        %v2219 = vld [vmem:[%s1982 + $0x22] sm:$0xff]
        %v2220 = vld [vmem:[%s629] sm:$0xff]
        %v2222 = vsel %vm390, %v2215, 0
        %v2225 = vsel %vm390, %v2216, 0
        %v2228 = vsel %vm390, %v2217, 0
        %v2231 = vsel %vm390, %v2218, 0
        %v2234 = vsel %vm390, %v2219, 0
        %2236 = vmatprep.subr.mxu0 0.0
        %2237 = vmatpush1.msra.mxu0 %v2220
        %2238 = vmatprep.subr.mxu0 0.0
        %2239 = vmatpush1.msra.mxu0 0.0
        %2240 = vmatprep.subr.mxu0 0.0
        %2241 = vmatpush1.msra.mxu0 0.0
        %2242 = vmatprep.subr.mxu0 0.0
        %2243 = vmatpush1.msra.mxu0 0.0
        %2244 = vmatprep.subr.mxu0 0.0
        %2245 = vmatpush1.msra.mxu0 0.0
        %2246 = vmatprep.subr.mxu0 0.0
        %2247 = vmatpush1.msra.mxu0 0.0
        %2248 = vmatprep.subr.mxu0 0.0
        %2249 = vmatpush1.msra.mxu0 0.0
        %2250 = vmatprep.subr.mxu0 0.0
        %2251 = vmatpush1.msra.mxu0 0.0
        %2252 = vmatprep.subr.mxu0 0.0
        %2253 = vmatpush1.msra.mxu0 0.0
        %2254 = vmatprep.subr.mxu0 0.0
        %2255 = vmatpush1.msra.mxu0 0.0
        %2256 = vmatprep.subr.mxu0 0.0
        %2257 = vmatpush1.msra.mxu0 0.0
        %2258 = vmatprep.subr.mxu0 0.0
        %2259 = vmatpush1.msra.mxu0 0.0
        %2260 = vmatprep.subr.mxu0 0.0
        %2261 = vmatpush1.msra.mxu0 0.0
        %2262 = vmatprep.subr.mxu0 0.0
        %2263 = vmatpush1.msra.mxu0 0.0
        %2264 = vmatprep.subr.mxu0 0.0
        %2265 = vmatpush1.msra.mxu0 0.0
        %2266 = vmatprep.subr.mxu0 0.0
        %2267 = vmatpush1.msra.mxu0 0.0
        %2268 = vmatprep.subr.mxu0 0.0
        %2269 = vmatpush1.msra.mxu0 0.0
        %2270 = vmatprep.subr.mxu0 0.0
        %2271 = vmatpush1.msra.mxu0 0.0
        %2272 = vmatprep.subr.mxu0 0.0
        %2273 = vmatpush1.msra.mxu0 0.0
        %2274 = vmatprep.subr.mxu0 0.0
        %2275 = vmatpush1.msra.mxu0 0.0
        %2276 = vmatprep.subr.mxu0 0.0
        %2277 = vmatpush1.msra.mxu0 0.0
        %2278 = vmatprep.subr.mxu0 0.0
        %2279 = vmatpush1.msra.mxu0 0.0
        %2280 = vmatprep.subr.mxu0 0.0
        %2281 = vmatpush1.msra.mxu0 0.0
        %2282 = vmatprep.subr.mxu0 0.0
        %2283 = vmatpush1.msra.mxu0 0.0
        %2284 = vmatprep.subr.mxu0 0.0
        %2285 = vmatpush1.msra.mxu0 0.0
        %2286 = vmatprep.subr.mxu0 0.0
        %2287 = vmatpush1.msra.mxu0 0.0
        %2288 = vmatprep.subr.mxu0 0.0
        %2289 = vmatpush1.msra.mxu0 0.0
        %2290 = vmatprep.subr.mxu0 0.0
        %2291 = vmatpush1.msra.mxu0 0.0
        %2292 = vmatprep.subr.mxu0 0.0
        %2293 = vmatpush1.msra.mxu0 0.0
        %2294 = vmatprep.subr.mxu0 0.0
        %2295 = vmatpush1.msra.mxu0 0.0
        %2296 = vmatprep.subr.mxu0 0.0
        %2297 = vmatpush1.msra.mxu0 0.0
        %2298 = vmatprep.subr.mxu0 0.0
        %2299 = vmatpush1.msra.mxu0 0.0
        %2300 = vmatprep.mubr.f32.mxu0 0.0
        %2301 = vmatmul.mubr.f32.gmra.mrb[0].mxu0 %v2222
        %v2302 = vpop.f32.mrb[0].mxu0
        %v2303 = vadd.f32 0.0, %v2302
        %v2304 = vpop.f32.mrb[0].mxu0
        %2305 = vmatprep.mubr.f32.mxu0 0.0
        %2306 = vmatmul.mubr.f32.gmra.mrb[0].mxu0 %v2225
        %v2307 = vpop.f32.mrb[0].mxu0
        %v2308 = vadd.f32 0.0, %v2307
        %v2309 = vpop.f32.mrb[0].mxu0
        %2310 = vmatprep.mubr.f32.mxu0 0.0
        %2311 = vmatmul.mubr.f32.gmra.mrb[0].mxu0 %v2228
        %v2312 = vpop.f32.mrb[0].mxu0
        %v2313 = vadd.f32 0.0, %v2312
        %v2314 = vpop.f32.mrb[0].mxu0
        %2315 = vmatprep.mubr.f32.mxu0 0.0
        %2316 = vmatmul.mubr.f32.gmra.mrb[0].mxu0 %v2231
        %v2317 = vpop.f32.mrb[0].mxu0
        %v2318 = vadd.f32 0.0, %v2317
        %v2319 = vpop.f32.mrb[0].mxu0
        %2320 = vmatprep.mubr.f32.mxu0 0.0
        %2321 = vmatmul.mubr.f32.gmra.mrb[0].mxu0 %v2234
        %v2322 = vpop.f32.mrb[0].mxu0
        %v2323 = vadd.f32 0.0, %v2322
        %v2324 = vpop.f32.mrb[0].mxu0
        %2325 = vdwg.mxu0
        %v2326 = vadd.f32 %v2210, %v2303
        %v2327 = vadd.f32 %v2211, %v2308
        %v2328 = vadd.f32 %v2212, %v2313
        %v2329 = vadd.f32 %v2213, %v2318
        %v2330 = vadd.f32 %v2214, %v2323
        %v2331 = vld [vmem:[%s1982 + $0x3] sm:$0xff]
        %v2332 = vld [vmem:[%s1982 + $0xb] sm:$0xff]
        %v2333 = vld [vmem:[%s1982 + $0x13] sm:$0xff]
        %v2334 = vld [vmem:[%s1982 + $0x1b] sm:$0xff]
        %v2335 = vld [vmem:[%s1982 + $0x23] sm:$0xff]
        %v2336 = vld [vmem:[%s746] sm:$0xff]
        %v2338 = vsel %vm390, %v2331, 0
        %v2341 = vsel %vm390, %v2332, 0
        %v2344 = vsel %vm390, %v2333, 0
        %v2347 = vsel %vm390, %v2334, 0
        %v2350 = vsel %vm390, %v2335, 0
        %2352 = vmatprep.subr.mxu0 0.0
        %2353 = vmatpush1.msra.mxu0 %v2336
        %2354 = vmatprep.subr.mxu0 0.0
        %2355 = vmatpush1.msra.mxu0 0.0
        %2356 = vmatprep.subr.mxu0 0.0
        %2357 = vmatpush1.msra.mxu0 0.0
        %2358 = vmatprep.subr.mxu0 0.0
        %2359 = vmatpush1.msra.mxu0 0.0
        %2360 = vmatprep.subr.mxu0 0.0
        %2361 = vmatpush1.msra.mxu0 0.0
        %2362 = vmatprep.subr.mxu0 0.0
        %2363 = vmatpush1.msra.mxu0 0.0
        %2364 = vmatprep.subr.mxu0 0.0
        %2365 = vmatpush1.msra.mxu0 0.0
        %2366 = vmatprep.subr.mxu0 0.0
        %2367 = vmatpush1.msra.mxu0 0.0
        %2368 = vmatprep.subr.mxu0 0.0
        %2369 = vmatpush1.msra.mxu0 0.0
        %2370 = vmatprep.subr.mxu0 0.0
        %2371 = vmatpush1.msra.mxu0 0.0
        %2372 = vmatprep.subr.mxu0 0.0
        %2373 = vmatpush1.msra.mxu0 0.0
        %2374 = vmatprep.subr.mxu0 0.0
        %2375 = vmatpush1.msra.mxu0 0.0
        %2376 = vmatprep.subr.mxu0 0.0
        %2377 = vmatpush1.msra.mxu0 0.0
        %2378 = vmatprep.subr.mxu0 0.0
        %2379 = vmatpush1.msra.mxu0 0.0
        %2380 = vmatprep.subr.mxu0 0.0
        %2381 = vmatpush1.msra.mxu0 0.0
        %2382 = vmatprep.subr.mxu0 0.0
        %2383 = vmatpush1.msra.mxu0 0.0
        %2384 = vmatprep.subr.mxu0 0.0
        %2385 = vmatpush1.msra.mxu0 0.0
        %2386 = vmatprep.subr.mxu0 0.0
        %2387 = vmatpush1.msra.mxu0 0.0
        %2388 = vmatprep.subr.mxu0 0.0
        %2389 = vmatpush1.msra.mxu0 0.0
        %2390 = vmatprep.subr.mxu0 0.0
        %2391 = vmatpush1.msra.mxu0 0.0
        %2392 = vmatprep.subr.mxu0 0.0
        %2393 = vmatpush1.msra.mxu0 0.0
        %2394 = vmatprep.subr.mxu0 0.0
        %2395 = vmatpush1.msra.mxu0 0.0
        %2396 = vmatprep.subr.mxu0 0.0
        %2397 = vmatpush1.msra.mxu0 0.0
        %2398 = vmatprep.subr.mxu0 0.0
        %2399 = vmatpush1.msra.mxu0 0.0
        %2400 = vmatprep.subr.mxu0 0.0
        %2401 = vmatpush1.msra.mxu0 0.0
        %2402 = vmatprep.subr.mxu0 0.0
        %2403 = vmatpush1.msra.mxu0 0.0
        %2404 = vmatprep.subr.mxu0 0.0
        %2405 = vmatpush1.msra.mxu0 0.0
        %2406 = vmatprep.subr.mxu0 0.0
        %2407 = vmatpush1.msra.mxu0 0.0
        %2408 = vmatprep.subr.mxu0 0.0
        %2409 = vmatpush1.msra.mxu0 0.0
        %2410 = vmatprep.subr.mxu0 0.0
        %2411 = vmatpush1.msra.mxu0 0.0
        %2412 = vmatprep.subr.mxu0 0.0
        %2413 = vmatpush1.msra.mxu0 0.0
        %2414 = vmatprep.subr.mxu0 0.0
        %2415 = vmatpush1.msra.mxu0 0.0
        %2416 = vmatprep.mubr.f32.mxu0 0.0
        %2417 = vmatmul.mubr.f32.gmra.mrb[0].mxu0 %v2338
        %v2418 = vpop.f32.mrb[0].mxu0
        %v2419 = vadd.f32 0.0, %v2418
        %v2420 = vpop.f32.mrb[0].mxu0
        %2421 = vmatprep.mubr.f32.mxu0 0.0
        %2422 = vmatmul.mubr.f32.gmra.mrb[0].mxu0 %v2341
        %v2423 = vpop.f32.mrb[0].mxu0
        %v2424 = vadd.f32 0.0, %v2423
        %v2425 = vpop.f32.mrb[0].mxu0
        %2426 = vmatprep.mubr.f32.mxu0 0.0
        %2427 = vmatmul.mubr.f32.gmra.mrb[0].mxu0 %v2344
        %v2428 = vpop.f32.mrb[0].mxu0
        %v2429 = vadd.f32 0.0, %v2428
        %v2430 = vpop.f32.mrb[0].mxu0
        %2431 = vmatprep.mubr.f32.mxu0 0.0
        %2432 = vmatmul.mubr.f32.gmra.mrb[0].mxu0 %v2347
        %v2433 = vpop.f32.mrb[0].mxu0
        %v2434 = vadd.f32 0.0, %v2433
        %v2435 = vpop.f32.mrb[0].mxu0
        %2436 = vmatprep.mubr.f32.mxu0 0.0
        %2437 = vmatmul.mubr.f32.gmra.mrb[0].mxu0 %v2350
        %v2438 = vpop.f32.mrb[0].mxu0
        %v2439 = vadd.f32 0.0, %v2438
        %v2440 = vpop.f32.mrb[0].mxu0
        %2441 = vdwg.mxu0
        %v2442 = vadd.f32 %v2326, %v2419
        %v2443 = vadd.f32 %v2327, %v2424
        %v2444 = vadd.f32 %v2328, %v2429
        %v2445 = vadd.f32 %v2329, %v2434
        %v2446 = vadd.f32 %v2330, %v2439
        %v2447 = vld [vmem:[%s1982 + $0x4] sm:$0xff]
        %v2448 = vld [vmem:[%s1982 + $0xc] sm:$0xff]
        %v2449 = vld [vmem:[%s1982 + $0x14] sm:$0xff]
        %v2450 = vld [vmem:[%s1982 + $0x1c] sm:$0xff]
        %v2451 = vld [vmem:[%s1982 + $0x24] sm:$0xff]
        %v2452 = vld [vmem:[%s863] sm:$0xff]
        %v2454 = vsel %vm390, %v2447, 0
        %v2457 = vsel %vm390, %v2448, 0
        %v2460 = vsel %vm390, %v2449, 0
        %v2463 = vsel %vm390, %v2450, 0
        %v2466 = vsel %vm390, %v2451, 0
        %2468 = vmatprep.subr.mxu0 0.0
        %2469 = vmatpush1.msra.mxu0 %v2452
        %2470 = vmatprep.subr.mxu0 0.0
        %2471 = vmatpush1.msra.mxu0 0.0
        %2472 = vmatprep.subr.mxu0 0.0
        %2473 = vmatpush1.msra.mxu0 0.0
        %2474 = vmatprep.subr.mxu0 0.0
        %2475 = vmatpush1.msra.mxu0 0.0
        %2476 = vmatprep.subr.mxu0 0.0
        %2477 = vmatpush1.msra.mxu0 0.0
        %2478 = vmatprep.subr.mxu0 0.0
        %2479 = vmatpush1.msra.mxu0 0.0
        %2480 = vmatprep.subr.mxu0 0.0
        %2481 = vmatpush1.msra.mxu0 0.0
        %2482 = vmatprep.subr.mxu0 0.0
        %2483 = vmatpush1.msra.mxu0 0.0
        %2484 = vmatprep.subr.mxu0 0.0
        %2485 = vmatpush1.msra.mxu0 0.0
        %2486 = vmatprep.subr.mxu0 0.0
        %2487 = vmatpush1.msra.mxu0 0.0
        %2488 = vmatprep.subr.mxu0 0.0
        %2489 = vmatpush1.msra.mxu0 0.0
        %2490 = vmatprep.subr.mxu0 0.0
        %2491 = vmatpush1.msra.mxu0 0.0
        %2492 = vmatprep.subr.mxu0 0.0
        %2493 = vmatpush1.msra.mxu0 0.0
        %2494 = vmatprep.subr.mxu0 0.0
        %2495 = vmatpush1.msra.mxu0 0.0
        %2496 = vmatprep.subr.mxu0 0.0
        %2497 = vmatpush1.msra.mxu0 0.0
        %2498 = vmatprep.subr.mxu0 0.0
        %2499 = vmatpush1.msra.mxu0 0.0
        %2500 = vmatprep.subr.mxu0 0.0
        %2501 = vmatpush1.msra.mxu0 0.0
        %2502 = vmatprep.subr.mxu0 0.0
        %2503 = vmatpush1.msra.mxu0 0.0
        %2504 = vmatprep.subr.mxu0 0.0
        %2505 = vmatpush1.msra.mxu0 0.0
        %2506 = vmatprep.subr.mxu0 0.0
        %2507 = vmatpush1.msra.mxu0 0.0
        %2508 = vmatprep.subr.mxu0 0.0
        %2509 = vmatpush1.msra.mxu0 0.0
        %2510 = vmatprep.subr.mxu0 0.0
        %2511 = vmatpush1.msra.mxu0 0.0
        %2512 = vmatprep.subr.mxu0 0.0
        %2513 = vmatpush1.msra.mxu0 0.0
        %2514 = vmatprep.subr.mxu0 0.0
        %2515 = vmatpush1.msra.mxu0 0.0
        %2516 = vmatprep.subr.mxu0 0.0
        %2517 = vmatpush1.msra.mxu0 0.0
        %2518 = vmatprep.subr.mxu0 0.0
        %2519 = vmatpush1.msra.mxu0 0.0
        %2520 = vmatprep.subr.mxu0 0.0
        %2521 = vmatpush1.msra.mxu0 0.0
        %2522 = vmatprep.subr.mxu0 0.0
        %2523 = vmatpush1.msra.mxu0 0.0
        %2524 = vmatprep.subr.mxu0 0.0
        %2525 = vmatpush1.msra.mxu0 0.0
        %2526 = vmatprep.subr.mxu0 0.0
        %2527 = vmatpush1.msra.mxu0 0.0
        %2528 = vmatprep.subr.mxu0 0.0
        %2529 = vmatpush1.msra.mxu0 0.0
        %2530 = vmatprep.subr.mxu0 0.0
        %2531 = vmatpush1.msra.mxu0 0.0
        %2532 = vmatprep.mubr.f32.mxu0 0.0
        %2533 = vmatmul.mubr.f32.gmra.mrb[0].mxu0 %v2454
        %v2534 = vpop.f32.mrb[0].mxu0
        %v2535 = vadd.f32 0.0, %v2534
        %v2536 = vpop.f32.mrb[0].mxu0
        %2537 = vmatprep.mubr.f32.mxu0 0.0
        %2538 = vmatmul.mubr.f32.gmra.mrb[0].mxu0 %v2457
        %v2539 = vpop.f32.mrb[0].mxu0
        %v2540 = vadd.f32 0.0, %v2539
        %v2541 = vpop.f32.mrb[0].mxu0
        %2542 = vmatprep.mubr.f32.mxu0 0.0
        %2543 = vmatmul.mubr.f32.gmra.mrb[0].mxu0 %v2460
        %v2544 = vpop.f32.mrb[0].mxu0
        %v2545 = vadd.f32 0.0, %v2544
        %v2546 = vpop.f32.mrb[0].mxu0
        %2547 = vmatprep.mubr.f32.mxu0 0.0
        %2548 = vmatmul.mubr.f32.gmra.mrb[0].mxu0 %v2463
        %v2549 = vpop.f32.mrb[0].mxu0
        %v2550 = vadd.f32 0.0, %v2549
        %v2551 = vpop.f32.mrb[0].mxu0
        %2552 = vmatprep.mubr.f32.mxu0 0.0
        %2553 = vmatmul.mubr.f32.gmra.mrb[0].mxu0 %v2466
        %v2554 = vpop.f32.mrb[0].mxu0
        %v2555 = vadd.f32 0.0, %v2554
        %v2556 = vpop.f32.mrb[0].mxu0
        %2557 = vdwg.mxu0
        %v2558 = vadd.f32 %v2442, %v2535
        %v2559 = vadd.f32 %v2443, %v2540
        %v2560 = vadd.f32 %v2444, %v2545
        %v2561 = vadd.f32 %v2445, %v2550
        %v2562 = vadd.f32 %v2446, %v2555
        %2563 = vst [vmem:[#allocation2] sm:$0xff] %v2558
        %2564 = vst [vmem:[#allocation2 + $0x8] sm:$0xff] %v2559
        %2565 = vst [vmem:[#allocation2 + $0x10] sm:$0xff] %v2560
        %2566 = vst [vmem:[#allocation2 + $0x18] sm:$0xff] %v2561
        %2567 = vst [vmem:[#allocation2 + $0x20] sm:$0xff] %v2562
        %v2568 = vld [vmem:[#allocation2] ss:$2 sm:$0xff]
        %v2569 = vld [vmem:[%s981] ss:$2 sm:$0xff]
        %v2570 = vld [vmem:[%s983] ss:$2 sm:$0xf]
        %v2571 = vld [vmem:[%s985] ss:$2 sm:$0xff]
        %v2572 = vld [vmem:[%s987] ss:$2 sm:$0xff]
        %v2573 = vld [vmem:[%s989] ss:$2 sm:$0xf]
        %v2574 = vmax.f32 %v2568, %v2571
        %v2575 = vmax.f32 %v2569, %v2572
        %v2576 = vmax.f32 %v2570, %v2573
        %vm2577 = vcmp.gt.f32.partialorder %v2574, 0.0
        %vm2578 = vcmp.gt.f32.partialorder %v2575, 0.0
        %vm2579 = vcmp.gt.f32.partialorder %v2576, 0.0
        %v2580 = vmul.f32 %v2574, 1.442695
        %v2581 = vpow.pop %v2580
        %v2582 = vmul.f32 %v2575, 1.442695
        %v2583 = vpow.pop %v2582
        %v2584 = vmul.f32 %v2576, 1.442695
        %v2585 = vpow.pop %v2584
        %v2586 = vsub.f32 %v2581, 1.0
        %v2587 = vsub.f32 %v2583, 1.0
        %v2588 = vsub.f32 %v2585, 1.0
        %v2589 = vsel %vm2577, %v2574, %v2586
        %v2590 = vsel %vm2578, %v2575, %v2587
        %v2591 = vsel %vm2579, %v2576, %v2588
        %2592 = vst [vmem:[#allocation3] sm:$0xff] %v2589
        %2593 = vst [vmem:[#allocation3 + $0x8] sm:$0xff] %v2590
        %2594 = vst [vmem:[#allocation3 + $0x10] sm:$0xf] %v2591
        %v2595 = vld [vmem:[#allocation3] sm:$0xff]
        %v2596 = vld [vmem:[#allocation3 + $0x8] sm:$0xff]
        %v2597 = vld [vmem:[#allocation8] sm:$0xff]
        %v2598 = vld [vmem:[#allocation8 + $0x8] sm:$0xff]
        %v2599 = vld [vmem:[#allocation8 + $0x10] sm:$0xff]
        %v2600 = vld [vmem:[#allocation8 + $0x18] sm:$0xff]
        %v2601 = vld [vmem:[#allocation8 + $0x20] sm:$0xff]
        %v2602 = vld [vmem:[#allocation8 + $0x28] sm:$0xff]
        %v2603 = vld [vmem:[#allocation8 + $0x30] sm:$0xff]
        %v2604 = vld [vmem:[#allocation8 + $0x38] sm:$0xff]
        %v2605 = vld [vmem:[#allocation8 + $0x40] sm:$0xff]
        %v2606 = vld [vmem:[#allocation8 + $0x48] sm:$0xff]
        %v2607 = vld [vmem:[#allocation8 + $0x50] sm:$0xff]
        %v2608 = vld [vmem:[#allocation8 + $0x58] sm:$0xff]
        %v2609 = vld [vmem:[#allocation8 + $0x60] sm:$0xff]
        %v2610 = vld [vmem:[#allocation8 + $0x68] sm:$0xff]
        %v2611 = vld [vmem:[#allocation8 + $0x70] sm:$0xff]
        %v2612 = vld [vmem:[#allocation8 + $0x78] sm:$0xff]
        %2613 = vmatprep.subr.mxu0 0.0
        %2614 = vmatpush1.msra.mxu0 %v2597
        %2615 = vmatprep.subr.mxu0 0.0
        %2616 = vmatpush1.msra.mxu0 %v2598
        %2617 = vmatprep.subr.mxu0 0.0
        %2618 = vmatpush1.msra.mxu0 %v2599
        %2619 = vmatprep.subr.mxu0 0.0
        %2620 = vmatpush1.msra.mxu0 %v2600
        %2621 = vmatprep.subr.mxu0 0.0
        %2622 = vmatpush1.msra.mxu0 %v2601
        %2623 = vmatprep.subr.mxu0 0.0
        %2624 = vmatpush1.msra.mxu0 %v2602
        %2625 = vmatprep.subr.mxu0 0.0
        %2626 = vmatpush1.msra.mxu0 %v2603
        %2627 = vmatprep.subr.mxu0 0.0
        %2628 = vmatpush1.msra.mxu0 %v2604
        %2629 = vmatprep.subr.mxu0 0.0
        %2630 = vmatpush1.msra.mxu0 %v2605
        %2631 = vmatprep.subr.mxu0 0.0
        %2632 = vmatpush1.msra.mxu0 %v2606
        %2633 = vmatprep.subr.mxu0 0.0
        %2634 = vmatpush1.msra.mxu0 %v2607
        %2635 = vmatprep.subr.mxu0 0.0
        %2636 = vmatpush1.msra.mxu0 %v2608
        %2637 = vmatprep.subr.mxu0 0.0
        %2638 = vmatpush1.msra.mxu0 %v2609
        %2639 = vmatprep.subr.mxu0 0.0
        %2640 = vmatpush1.msra.mxu0 %v2610
        %2641 = vmatprep.subr.mxu0 0.0
        %2642 = vmatpush1.msra.mxu0 %v2611
        %2643 = vmatprep.subr.mxu0 0.0
        %2644 = vmatpush1.msra.mxu0 %v2612
        %2645 = vmatprep.subr.mxu0 0.0
        %2646 = vmatpush1.msra.mxu0 0.0
        %2647 = vmatprep.subr.mxu0 0.0
        %2648 = vmatpush1.msra.mxu0 0.0
        %2649 = vmatprep.subr.mxu0 0.0
        %2650 = vmatpush1.msra.mxu0 0.0
        %2651 = vmatprep.subr.mxu0 0.0
        %2652 = vmatpush1.msra.mxu0 0.0
        %2653 = vmatprep.subr.mxu0 0.0
        %2654 = vmatpush1.msra.mxu0 0.0
        %2655 = vmatprep.subr.mxu0 0.0
        %2656 = vmatpush1.msra.mxu0 0.0
        %2657 = vmatprep.subr.mxu0 0.0
        %2658 = vmatpush1.msra.mxu0 0.0
        %2659 = vmatprep.subr.mxu0 0.0
        %2660 = vmatpush1.msra.mxu0 0.0
        %2661 = vmatprep.subr.mxu0 0.0
        %2662 = vmatpush1.msra.mxu0 0.0
        %2663 = vmatprep.subr.mxu0 0.0
        %2664 = vmatpush1.msra.mxu0 0.0
        %2665 = vmatprep.subr.mxu0 0.0
        %2666 = vmatpush1.msra.mxu0 0.0
        %2667 = vmatprep.subr.mxu0 0.0
        %2668 = vmatpush1.msra.mxu0 0.0
        %2669 = vmatprep.subr.mxu0 0.0
        %2670 = vmatpush1.msra.mxu0 0.0
        %2671 = vmatprep.subr.mxu0 0.0
        %2672 = vmatpush1.msra.mxu0 0.0
        %2673 = vmatprep.subr.mxu0 0.0
        %2674 = vmatpush1.msra.mxu0 0.0
        %2675 = vmatprep.subr.mxu0 0.0
        %2676 = vmatpush1.msra.mxu0 0.0
        %2677 = vmatprep.mubr.f32.mxu0 0.0
        %2678 = vmatmul.mubr.f32.gmra.mrb[0].mxu0 %v2595
        %v2679 = vpop.f32.mrb[0].mxu0
        %v2680 = vadd.f32 0.0, %v2679
        %v2681 = vpop.f32.mrb[0].mxu0
        %2682 = vmatprep.mubr.f32.mxu0 0.0
        %2683 = vmatmul.mubr.f32.gmra.mrb[0].mxu0 %v2596
        %v2684 = vpop.f32.mrb[0].mxu0
        %v2685 = vadd.f32 0.0, %v2684
        %v2686 = vpop.f32.mrb[0].mxu0
        %2687 = vdwg.mxu0
        %v2688 = vadd.f32 %v1109, %v2680
        %v2689 = vadd.f32 %v1109, %v2685
        %v2690 = vld [vmem:[#allocation3 + $0x1] sm:$0xff]
        %v2691 = vld [vmem:[#allocation3 + $0x9] sm:$0xff]
        %v2692 = vld [vmem:[%s1115] sm:$0xff]
        %v2693 = vld [vmem:[%s1115 + $0x8] sm:$0xff]
        %v2694 = vld [vmem:[%s1115 + $0x10] sm:$0xff]
        %v2695 = vld [vmem:[%s1115 + $0x18] sm:$0xff]
        %v2696 = vld [vmem:[%s1115 + $0x20] sm:$0xff]
        %v2697 = vld [vmem:[%s1115 + $0x28] sm:$0xff]
        %v2698 = vld [vmem:[%s1115 + $0x30] sm:$0xff]
        %v2699 = vld [vmem:[%s1115 + $0x38] sm:$0xff]
        %v2700 = vld [vmem:[%s1115 + $0x40] sm:$0xff]
        %v2701 = vld [vmem:[%s1115 + $0x48] sm:$0xff]
        %v2702 = vld [vmem:[%s1115 + $0x50] sm:$0xff]
        %v2703 = vld [vmem:[%s1115 + $0x58] sm:$0xff]
        %v2704 = vld [vmem:[%s1115 + $0x60] sm:$0xff]
        %v2705 = vld [vmem:[%s1115 + $0x68] sm:$0xff]
        %v2706 = vld [vmem:[%s1115 + $0x70] sm:$0xff]
        %v2707 = vld [vmem:[%s1115 + $0x78] sm:$0xff]
        %2708 = vmatprep.subr.mxu0 0.0
        %2709 = vmatpush1.msra.mxu0 %v2692
        %2710 = vmatprep.subr.mxu0 0.0
        %2711 = vmatpush1.msra.mxu0 %v2693
        %2712 = vmatprep.subr.mxu0 0.0
        %2713 = vmatpush1.msra.mxu0 %v2694
        %2714 = vmatprep.subr.mxu0 0.0
        %2715 = vmatpush1.msra.mxu0 %v2695
        %2716 = vmatprep.subr.mxu0 0.0
        %2717 = vmatpush1.msra.mxu0 %v2696
        %2718 = vmatprep.subr.mxu0 0.0
        %2719 = vmatpush1.msra.mxu0 %v2697
        %2720 = vmatprep.subr.mxu0 0.0
        %2721 = vmatpush1.msra.mxu0 %v2698
        %2722 = vmatprep.subr.mxu0 0.0
        %2723 = vmatpush1.msra.mxu0 %v2699
        %2724 = vmatprep.subr.mxu0 0.0
        %2725 = vmatpush1.msra.mxu0 %v2700
        %2726 = vmatprep.subr.mxu0 0.0
        %2727 = vmatpush1.msra.mxu0 %v2701
        %2728 = vmatprep.subr.mxu0 0.0
        %2729 = vmatpush1.msra.mxu0 %v2702
        %2730 = vmatprep.subr.mxu0 0.0
        %2731 = vmatpush1.msra.mxu0 %v2703
        %2732 = vmatprep.subr.mxu0 0.0
        %2733 = vmatpush1.msra.mxu0 %v2704
        %2734 = vmatprep.subr.mxu0 0.0
        %2735 = vmatpush1.msra.mxu0 %v2705
        %2736 = vmatprep.subr.mxu0 0.0
        %2737 = vmatpush1.msra.mxu0 %v2706
        %2738 = vmatprep.subr.mxu0 0.0
        %2739 = vmatpush1.msra.mxu0 %v2707
        %2740 = vmatprep.subr.mxu0 0.0
        %2741 = vmatpush1.msra.mxu0 0.0
        %2742 = vmatprep.subr.mxu0 0.0
        %2743 = vmatpush1.msra.mxu0 0.0
        %2744 = vmatprep.subr.mxu0 0.0
        %2745 = vmatpush1.msra.mxu0 0.0
        %2746 = vmatprep.subr.mxu0 0.0
        %2747 = vmatpush1.msra.mxu0 0.0
        %2748 = vmatprep.subr.mxu0 0.0
        %2749 = vmatpush1.msra.mxu0 0.0
        %2750 = vmatprep.subr.mxu0 0.0
        %2751 = vmatpush1.msra.mxu0 0.0
        %2752 = vmatprep.subr.mxu0 0.0
        %2753 = vmatpush1.msra.mxu0 0.0
        %2754 = vmatprep.subr.mxu0 0.0
        %2755 = vmatpush1.msra.mxu0 0.0
        %2756 = vmatprep.subr.mxu0 0.0
        %2757 = vmatpush1.msra.mxu0 0.0
        %2758 = vmatprep.subr.mxu0 0.0
        %2759 = vmatpush1.msra.mxu0 0.0
        %2760 = vmatprep.subr.mxu0 0.0
        %2761 = vmatpush1.msra.mxu0 0.0
        %2762 = vmatprep.subr.mxu0 0.0
        %2763 = vmatpush1.msra.mxu0 0.0
        %2764 = vmatprep.subr.mxu0 0.0
        %2765 = vmatpush1.msra.mxu0 0.0
        %2766 = vmatprep.subr.mxu0 0.0
        %2767 = vmatpush1.msra.mxu0 0.0
        %2768 = vmatprep.subr.mxu0 0.0
        %2769 = vmatpush1.msra.mxu0 0.0
        %2770 = vmatprep.subr.mxu0 0.0
        %2771 = vmatpush1.msra.mxu0 0.0
        %2772 = vmatprep.mubr.f32.mxu0 0.0
        %2773 = vmatmul.mubr.f32.gmra.mrb[0].mxu0 %v2690
        %v2774 = vpop.f32.mrb[0].mxu0
        %v2775 = vadd.f32 0.0, %v2774
        %v2776 = vpop.f32.mrb[0].mxu0
        %2777 = vmatprep.mubr.f32.mxu0 0.0
        %2778 = vmatmul.mubr.f32.gmra.mrb[0].mxu0 %v2691
        %v2779 = vpop.f32.mrb[0].mxu0
        %v2780 = vadd.f32 0.0, %v2779
        %v2781 = vpop.f32.mrb[0].mxu0
        %2782 = vdwg.mxu0
        %v2783 = vadd.f32 %v2688, %v2775
        %v2784 = vadd.f32 %v2689, %v2780
        %v2785 = vld [vmem:[#allocation3 + $0x2] sm:$0xff]
        %v2786 = vld [vmem:[#allocation3 + $0xa] sm:$0xff]
        %v2787 = vld [vmem:[%s1211] sm:$0xff]
        %v2788 = vld [vmem:[%s1211 + $0x8] sm:$0xff]
        %v2789 = vld [vmem:[%s1211 + $0x10] sm:$0xff]
        %v2790 = vld [vmem:[%s1211 + $0x18] sm:$0xff]
        %v2791 = vld [vmem:[%s1211 + $0x20] sm:$0xff]
        %v2792 = vld [vmem:[%s1211 + $0x28] sm:$0xff]
        %v2793 = vld [vmem:[%s1211 + $0x30] sm:$0xff]
        %v2794 = vld [vmem:[%s1211 + $0x38] sm:$0xff]
        %v2795 = vld [vmem:[%s1211 + $0x40] sm:$0xff]
        %v2796 = vld [vmem:[%s1211 + $0x48] sm:$0xff]
        %v2797 = vld [vmem:[%s1211 + $0x50] sm:$0xff]
        %v2798 = vld [vmem:[%s1211 + $0x58] sm:$0xff]
        %v2799 = vld [vmem:[%s1211 + $0x60] sm:$0xff]
        %v2800 = vld [vmem:[%s1211 + $0x68] sm:$0xff]
        %v2801 = vld [vmem:[%s1211 + $0x70] sm:$0xff]
        %v2802 = vld [vmem:[%s1211 + $0x78] sm:$0xff]
        %2803 = vmatprep.subr.mxu0 0.0
        %2804 = vmatpush1.msra.mxu0 %v2787
        %2805 = vmatprep.subr.mxu0 0.0
        %2806 = vmatpush1.msra.mxu0 %v2788
        %2807 = vmatprep.subr.mxu0 0.0
        %2808 = vmatpush1.msra.mxu0 %v2789
        %2809 = vmatprep.subr.mxu0 0.0
        %2810 = vmatpush1.msra.mxu0 %v2790
        %2811 = vmatprep.subr.mxu0 0.0
        %2812 = vmatpush1.msra.mxu0 %v2791
        %2813 = vmatprep.subr.mxu0 0.0
        %2814 = vmatpush1.msra.mxu0 %v2792
        %2815 = vmatprep.subr.mxu0 0.0
        %2816 = vmatpush1.msra.mxu0 %v2793
        %2817 = vmatprep.subr.mxu0 0.0
        %2818 = vmatpush1.msra.mxu0 %v2794
        %2819 = vmatprep.subr.mxu0 0.0
        %2820 = vmatpush1.msra.mxu0 %v2795
        %2821 = vmatprep.subr.mxu0 0.0
        %2822 = vmatpush1.msra.mxu0 %v2796
        %2823 = vmatprep.subr.mxu0 0.0
        %2824 = vmatpush1.msra.mxu0 %v2797
        %2825 = vmatprep.subr.mxu0 0.0
        %2826 = vmatpush1.msra.mxu0 %v2798
        %2827 = vmatprep.subr.mxu0 0.0
        %2828 = vmatpush1.msra.mxu0 %v2799
        %2829 = vmatprep.subr.mxu0 0.0
        %2830 = vmatpush1.msra.mxu0 %v2800
        %2831 = vmatprep.subr.mxu0 0.0
        %2832 = vmatpush1.msra.mxu0 %v2801
        %2833 = vmatprep.subr.mxu0 0.0
        %2834 = vmatpush1.msra.mxu0 %v2802
        %2835 = vmatprep.subr.mxu0 0.0
        %2836 = vmatpush1.msra.mxu0 0.0
        %2837 = vmatprep.subr.mxu0 0.0
        %2838 = vmatpush1.msra.mxu0 0.0
        %2839 = vmatprep.subr.mxu0 0.0
        %2840 = vmatpush1.msra.mxu0 0.0
        %2841 = vmatprep.subr.mxu0 0.0
        %2842 = vmatpush1.msra.mxu0 0.0
        %2843 = vmatprep.subr.mxu0 0.0
        %2844 = vmatpush1.msra.mxu0 0.0
        %2845 = vmatprep.subr.mxu0 0.0
        %2846 = vmatpush1.msra.mxu0 0.0
        %2847 = vmatprep.subr.mxu0 0.0
        %2848 = vmatpush1.msra.mxu0 0.0
        %2849 = vmatprep.subr.mxu0 0.0
        %2850 = vmatpush1.msra.mxu0 0.0
        %2851 = vmatprep.subr.mxu0 0.0
        %2852 = vmatpush1.msra.mxu0 0.0
        %2853 = vmatprep.subr.mxu0 0.0
        %2854 = vmatpush1.msra.mxu0 0.0
        %2855 = vmatprep.subr.mxu0 0.0
        %2856 = vmatpush1.msra.mxu0 0.0
        %2857 = vmatprep.subr.mxu0 0.0
        %2858 = vmatpush1.msra.mxu0 0.0
        %2859 = vmatprep.subr.mxu0 0.0
        %2860 = vmatpush1.msra.mxu0 0.0
        %2861 = vmatprep.subr.mxu0 0.0
        %2862 = vmatpush1.msra.mxu0 0.0
        %2863 = vmatprep.subr.mxu0 0.0
        %2864 = vmatpush1.msra.mxu0 0.0
        %2865 = vmatprep.subr.mxu0 0.0
        %2866 = vmatpush1.msra.mxu0 0.0
        %2867 = vmatprep.mubr.f32.mxu0 0.0
        %2868 = vmatmul.mubr.f32.gmra.mrb[0].mxu0 %v2785
        %v2869 = vpop.f32.mrb[0].mxu0
        %v2870 = vadd.f32 0.0, %v2869
        %v2871 = vpop.f32.mrb[0].mxu0
        %2872 = vmatprep.mubr.f32.mxu0 0.0
        %2873 = vmatmul.mubr.f32.gmra.mrb[0].mxu0 %v2786
        %v2874 = vpop.f32.mrb[0].mxu0
        %v2875 = vadd.f32 0.0, %v2874
        %v2876 = vpop.f32.mrb[0].mxu0
        %2877 = vdwg.mxu0
        %v2878 = vadd.f32 %v2783, %v2870
        %v2879 = vadd.f32 %v2784, %v2875
        %v2880 = vld [vmem:[#allocation3 + $0x3] sm:$0xff]
        %v2881 = vld [vmem:[#allocation3 + $0xb] sm:$0xff]
        %v2882 = vld [vmem:[%s1307] sm:$0xff]
        %v2883 = vld [vmem:[%s1307 + $0x8] sm:$0xff]
        %v2884 = vld [vmem:[%s1307 + $0x10] sm:$0xff]
        %v2885 = vld [vmem:[%s1307 + $0x18] sm:$0xff]
        %v2886 = vld [vmem:[%s1307 + $0x20] sm:$0xff]
        %v2887 = vld [vmem:[%s1307 + $0x28] sm:$0xff]
        %v2888 = vld [vmem:[%s1307 + $0x30] sm:$0xff]
        %v2889 = vld [vmem:[%s1307 + $0x38] sm:$0xff]
        %v2890 = vld [vmem:[%s1307 + $0x40] sm:$0xff]
        %v2891 = vld [vmem:[%s1307 + $0x48] sm:$0xff]
        %v2892 = vld [vmem:[%s1307 + $0x50] sm:$0xff]
        %v2893 = vld [vmem:[%s1307 + $0x58] sm:$0xff]
        %v2894 = vld [vmem:[%s1307 + $0x60] sm:$0xff]
        %v2895 = vld [vmem:[%s1307 + $0x68] sm:$0xff]
        %v2896 = vld [vmem:[%s1307 + $0x70] sm:$0xff]
        %v2897 = vld [vmem:[%s1307 + $0x78] sm:$0xff]
        %2898 = vmatprep.subr.mxu0 0.0
        %2899 = vmatpush1.msra.mxu0 %v2882
        %2900 = vmatprep.subr.mxu0 0.0
        %2901 = vmatpush1.msra.mxu0 %v2883
        %2902 = vmatprep.subr.mxu0 0.0
        %2903 = vmatpush1.msra.mxu0 %v2884
        %2904 = vmatprep.subr.mxu0 0.0
        %2905 = vmatpush1.msra.mxu0 %v2885
        %2906 = vmatprep.subr.mxu0 0.0
        %2907 = vmatpush1.msra.mxu0 %v2886
        %2908 = vmatprep.subr.mxu0 0.0
        %2909 = vmatpush1.msra.mxu0 %v2887
        %2910 = vmatprep.subr.mxu0 0.0
        %2911 = vmatpush1.msra.mxu0 %v2888
        %2912 = vmatprep.subr.mxu0 0.0
        %2913 = vmatpush1.msra.mxu0 %v2889
        %2914 = vmatprep.subr.mxu0 0.0
        %2915 = vmatpush1.msra.mxu0 %v2890
        %2916 = vmatprep.subr.mxu0 0.0
        %2917 = vmatpush1.msra.mxu0 %v2891
        %2918 = vmatprep.subr.mxu0 0.0
        %2919 = vmatpush1.msra.mxu0 %v2892
        %2920 = vmatprep.subr.mxu0 0.0
        %2921 = vmatpush1.msra.mxu0 %v2893
        %2922 = vmatprep.subr.mxu0 0.0
        %2923 = vmatpush1.msra.mxu0 %v2894
        %2924 = vmatprep.subr.mxu0 0.0
        %2925 = vmatpush1.msra.mxu0 %v2895
        %2926 = vmatprep.subr.mxu0 0.0
        %2927 = vmatpush1.msra.mxu0 %v2896
        %2928 = vmatprep.subr.mxu0 0.0
        %2929 = vmatpush1.msra.mxu0 %v2897
        %2930 = vmatprep.subr.mxu0 0.0
        %2931 = vmatpush1.msra.mxu0 0.0
        %2932 = vmatprep.subr.mxu0 0.0
        %2933 = vmatpush1.msra.mxu0 0.0
        %2934 = vmatprep.subr.mxu0 0.0
        %2935 = vmatpush1.msra.mxu0 0.0
        %2936 = vmatprep.subr.mxu0 0.0
        %2937 = vmatpush1.msra.mxu0 0.0
        %2938 = vmatprep.subr.mxu0 0.0
        %2939 = vmatpush1.msra.mxu0 0.0
        %2940 = vmatprep.subr.mxu0 0.0
        %2941 = vmatpush1.msra.mxu0 0.0
        %2942 = vmatprep.subr.mxu0 0.0
        %2943 = vmatpush1.msra.mxu0 0.0
        %2944 = vmatprep.subr.mxu0 0.0
        %2945 = vmatpush1.msra.mxu0 0.0
        %2946 = vmatprep.subr.mxu0 0.0
        %2947 = vmatpush1.msra.mxu0 0.0
        %2948 = vmatprep.subr.mxu0 0.0
        %2949 = vmatpush1.msra.mxu0 0.0
        %2950 = vmatprep.subr.mxu0 0.0
        %2951 = vmatpush1.msra.mxu0 0.0
        %2952 = vmatprep.subr.mxu0 0.0
        %2953 = vmatpush1.msra.mxu0 0.0
        %2954 = vmatprep.subr.mxu0 0.0
        %2955 = vmatpush1.msra.mxu0 0.0
        %2956 = vmatprep.subr.mxu0 0.0
        %2957 = vmatpush1.msra.mxu0 0.0
        %2958 = vmatprep.subr.mxu0 0.0
        %2959 = vmatpush1.msra.mxu0 0.0
        %2960 = vmatprep.subr.mxu0 0.0
        %2961 = vmatpush1.msra.mxu0 0.0
        %2962 = vmatprep.mubr.f32.mxu0 0.0
        %2963 = vmatmul.mubr.f32.gmra.mrb[0].mxu0 %v2880
        %v2964 = vpop.f32.mrb[0].mxu0
        %v2965 = vadd.f32 0.0, %v2964
        %v2966 = vpop.f32.mrb[0].mxu0
        %2967 = vmatprep.mubr.f32.mxu0 0.0
        %2968 = vmatmul.mubr.f32.gmra.mrb[0].mxu0 %v2881
        %v2969 = vpop.f32.mrb[0].mxu0
        %v2970 = vadd.f32 0.0, %v2969
        %v2971 = vpop.f32.mrb[0].mxu0
        %2972 = vdwg.mxu0
        %v2973 = vadd.f32 %v2878, %v2965
        %v2974 = vadd.f32 %v2879, %v2970
        %v2975 = vld [vmem:[#allocation3 + $0x4] sm:$0xff]
        %v2976 = vld [vmem:[#allocation3 + $0xc] sm:$0xff]
        %v2977 = vld [vmem:[%s1403] sm:$0xff]
        %v2978 = vld [vmem:[%s1403 + $0x8] sm:$0xff]
        %v2979 = vld [vmem:[%s1403 + $0x10] sm:$0xff]
        %v2980 = vld [vmem:[%s1403 + $0x18] sm:$0xff]
        %v2981 = vld [vmem:[%s1403 + $0x20] sm:$0xff]
        %v2982 = vld [vmem:[%s1403 + $0x28] sm:$0xff]
        %v2983 = vld [vmem:[%s1403 + $0x30] sm:$0xff]
        %v2984 = vld [vmem:[%s1403 + $0x38] sm:$0xff]
        %v2985 = vld [vmem:[%s1403 + $0x40] sm:$0xff]
        %v2986 = vld [vmem:[%s1403 + $0x48] sm:$0xff]
        %v2987 = vld [vmem:[%s1403 + $0x50] sm:$0xff]
        %v2988 = vld [vmem:[%s1403 + $0x58] sm:$0xff]
        %v2989 = vld [vmem:[%s1403 + $0x60] sm:$0xff]
        %v2990 = vld [vmem:[%s1403 + $0x68] sm:$0xff]
        %v2991 = vld [vmem:[%s1403 + $0x70] sm:$0xff]
        %v2992 = vld [vmem:[%s1403 + $0x78] sm:$0xff]
        %2993 = vmatprep.subr.mxu0 0.0
        %2994 = vmatpush1.msra.mxu0 %v2977
        %2995 = vmatprep.subr.mxu0 0.0
        %2996 = vmatpush1.msra.mxu0 %v2978
        %2997 = vmatprep.subr.mxu0 0.0
        %2998 = vmatpush1.msra.mxu0 %v2979
        %2999 = vmatprep.subr.mxu0 0.0
        %3000 = vmatpush1.msra.mxu0 %v2980
        %3001 = vmatprep.subr.mxu0 0.0
        %3002 = vmatpush1.msra.mxu0 %v2981
        %3003 = vmatprep.subr.mxu0 0.0
        %3004 = vmatpush1.msra.mxu0 %v2982
        %3005 = vmatprep.subr.mxu0 0.0
        %3006 = vmatpush1.msra.mxu0 %v2983
        %3007 = vmatprep.subr.mxu0 0.0
        %3008 = vmatpush1.msra.mxu0 %v2984
        %3009 = vmatprep.subr.mxu0 0.0
        %3010 = vmatpush1.msra.mxu0 %v2985
        %3011 = vmatprep.subr.mxu0 0.0
        %3012 = vmatpush1.msra.mxu0 %v2986
        %3013 = vmatprep.subr.mxu0 0.0
        %3014 = vmatpush1.msra.mxu0 %v2987
        %3015 = vmatprep.subr.mxu0 0.0
        %3016 = vmatpush1.msra.mxu0 %v2988
        %3017 = vmatprep.subr.mxu0 0.0
        %3018 = vmatpush1.msra.mxu0 %v2989
        %3019 = vmatprep.subr.mxu0 0.0
        %3020 = vmatpush1.msra.mxu0 %v2990
        %3021 = vmatprep.subr.mxu0 0.0
        %3022 = vmatpush1.msra.mxu0 %v2991
        %3023 = vmatprep.subr.mxu0 0.0
        %3024 = vmatpush1.msra.mxu0 %v2992
        %3025 = vmatprep.subr.mxu0 0.0
        %3026 = vmatpush1.msra.mxu0 0.0
        %3027 = vmatprep.subr.mxu0 0.0
        %3028 = vmatpush1.msra.mxu0 0.0
        %3029 = vmatprep.subr.mxu0 0.0
        %3030 = vmatpush1.msra.mxu0 0.0
        %3031 = vmatprep.subr.mxu0 0.0
        %3032 = vmatpush1.msra.mxu0 0.0
        %3033 = vmatprep.subr.mxu0 0.0
        %3034 = vmatpush1.msra.mxu0 0.0
        %3035 = vmatprep.subr.mxu0 0.0
        %3036 = vmatpush1.msra.mxu0 0.0
        %3037 = vmatprep.subr.mxu0 0.0
        %3038 = vmatpush1.msra.mxu0 0.0
        %3039 = vmatprep.subr.mxu0 0.0
        %3040 = vmatpush1.msra.mxu0 0.0
        %3041 = vmatprep.subr.mxu0 0.0
        %3042 = vmatpush1.msra.mxu0 0.0
        %3043 = vmatprep.subr.mxu0 0.0
        %3044 = vmatpush1.msra.mxu0 0.0
        %3045 = vmatprep.subr.mxu0 0.0
        %3046 = vmatpush1.msra.mxu0 0.0
        %3047 = vmatprep.subr.mxu0 0.0
        %3048 = vmatpush1.msra.mxu0 0.0
        %3049 = vmatprep.subr.mxu0 0.0
        %3050 = vmatpush1.msra.mxu0 0.0
        %3051 = vmatprep.subr.mxu0 0.0
        %3052 = vmatpush1.msra.mxu0 0.0
        %3053 = vmatprep.subr.mxu0 0.0
        %3054 = vmatpush1.msra.mxu0 0.0
        %3055 = vmatprep.subr.mxu0 0.0
        %3056 = vmatpush1.msra.mxu0 0.0
        %3057 = vmatprep.mubr.f32.mxu0 0.0
        %3058 = vmatmul.mubr.f32.gmra.mrb[0].mxu0 %v2975
        %v3059 = vpop.f32.mrb[0].mxu0
        %v3060 = vadd.f32 0.0, %v3059
        %v3061 = vpop.f32.mrb[0].mxu0
        %3062 = vmatprep.mubr.f32.mxu0 0.0
        %3063 = vmatmul.mubr.f32.gmra.mrb[0].mxu0 %v2976
        %v3064 = vpop.f32.mrb[0].mxu0
        %v3065 = vadd.f32 0.0, %v3064
        %v3066 = vpop.f32.mrb[0].mxu0
        %3067 = vdwg.mxu0
        %v3068 = vadd.f32 %v2973, %v3060
        %v3069 = vadd.f32 %v2974, %v3065
        %3070 = vst [vmem:[#allocation4] sm:$0xff] %v3068
        %3071 = vst [vmem:[#allocation4 + $0x8] sm:$0xff] %v3069
        %v3072 = vld [vmem:[#allocation4] ss:$2 sm:$0xff]
        %v3073 = vld [vmem:[%s1500] ss:$2 sm:$0xff]
        %v3074 = vmax.f32 %v3072, %v3073
        %vm3075 = vcmp.gt.f32.partialorder %v3074, 0.0
        %v3076 = vmul.f32 %v3074, 1.442695
        %v3077 = vpow.pop %v3076
        %v3078 = vsub.f32 %v3077, 1.0
        %v3079 = vsel %vm3075, %v3074, %v3078
        %3080 = vst [vmem:[#allocation5] sm:$0xff] %v3079
        %v3081 = vld [vmem:[#allocation5] sm:$0xf]
        %v3082 = vld [vmem:[#allocation11] sm:$0xff]
        %v3083 = vld [vmem:[#allocation11 + $0x8] sm:$0xff]
        %v3084 = vld [vmem:[#allocation11 + $0x10] sm:$0xff]
        %v3085 = vld [vmem:[#allocation11 + $0x18] sm:$0xff]
        %v3086 = vld [vmem:[#allocation11 + $0x20] sm:$0xff]
        %v3087 = vld [vmem:[#allocation11 + $0x28] sm:$0xff]
        %v3088 = vld [vmem:[#allocation11 + $0x30] sm:$0xff]
        %v3089 = vld [vmem:[#allocation11 + $0x38] sm:$0xff]
        %v3090 = vld [vmem:[#allocation11 + $0x40] sm:$0xff]
        %v3091 = vld [vmem:[#allocation11 + $0x48] sm:$0xff]
        %v3092 = vld [vmem:[#allocation11 + $0x50] sm:$0xff]
        %v3093 = vld [vmem:[#allocation11 + $0x58] sm:$0xff]
        %v3094 = vld [vmem:[#allocation11 + $0x60] sm:$0xff]
        %v3095 = vld [vmem:[#allocation11 + $0x68] sm:$0xff]
        %v3096 = vld [vmem:[#allocation11 + $0x70] sm:$0xff]
        %v3097 = vld [vmem:[#allocation11 + $0x78] sm:$0xff]
        %3098 = vmatprep.subr.mxu0 0.0
        %3099 = vmatpush1.msra.mxu0 %v3082
        %3100 = vmatprep.subr.mxu0 0.0
        %3101 = vmatpush1.msra.mxu0 %v3083
        %3102 = vmatprep.subr.mxu0 0.0
        %3103 = vmatpush1.msra.mxu0 %v3084
        %3104 = vmatprep.subr.mxu0 0.0
        %3105 = vmatpush1.msra.mxu0 %v3085
        %3106 = vmatprep.subr.mxu0 0.0
        %3107 = vmatpush1.msra.mxu0 %v3086
        %3108 = vmatprep.subr.mxu0 0.0
        %3109 = vmatpush1.msra.mxu0 %v3087
        %3110 = vmatprep.subr.mxu0 0.0
        %3111 = vmatpush1.msra.mxu0 %v3088
        %3112 = vmatprep.subr.mxu0 0.0
        %3113 = vmatpush1.msra.mxu0 %v3089
        %3114 = vmatprep.subr.mxu0 0.0
        %3115 = vmatpush1.msra.mxu0 %v3090
        %3116 = vmatprep.subr.mxu0 0.0
        %3117 = vmatpush1.msra.mxu0 %v3091
        %3118 = vmatprep.subr.mxu0 0.0
        %3119 = vmatpush1.msra.mxu0 %v3092
        %3120 = vmatprep.subr.mxu0 0.0
        %3121 = vmatpush1.msra.mxu0 %v3093
        %3122 = vmatprep.subr.mxu0 0.0
        %3123 = vmatpush1.msra.mxu0 %v3094
        %3124 = vmatprep.subr.mxu0 0.0
        %3125 = vmatpush1.msra.mxu0 %v3095
        %3126 = vmatprep.subr.mxu0 0.0
        %3127 = vmatpush1.msra.mxu0 %v3096
        %3128 = vmatprep.subr.mxu0 0.0
        %3129 = vmatpush1.msra.mxu0 %v3097
        %3130 = vmatprep.subr.mxu0 0.0
        %3131 = vmatpush1.msra.mxu0 0.0
        %3132 = vmatprep.subr.mxu0 0.0
        %3133 = vmatpush1.msra.mxu0 0.0
        %3134 = vmatprep.subr.mxu0 0.0
        %3135 = vmatpush1.msra.mxu0 0.0
        %3136 = vmatprep.subr.mxu0 0.0
        %3137 = vmatpush1.msra.mxu0 0.0
        %3138 = vmatprep.subr.mxu0 0.0
        %3139 = vmatpush1.msra.mxu0 0.0
        %3140 = vmatprep.subr.mxu0 0.0
        %3141 = vmatpush1.msra.mxu0 0.0
        %3142 = vmatprep.subr.mxu0 0.0
        %3143 = vmatpush1.msra.mxu0 0.0
        %3144 = vmatprep.subr.mxu0 0.0
        %3145 = vmatpush1.msra.mxu0 0.0
        %3146 = vmatprep.subr.mxu0 0.0
        %3147 = vmatpush1.msra.mxu0 0.0
        %3148 = vmatprep.subr.mxu0 0.0
        %3149 = vmatpush1.msra.mxu0 0.0
        %3150 = vmatprep.subr.mxu0 0.0
        %3151 = vmatpush1.msra.mxu0 0.0
        %3152 = vmatprep.subr.mxu0 0.0
        %3153 = vmatpush1.msra.mxu0 0.0
        %3154 = vmatprep.subr.mxu0 0.0
        %3155 = vmatpush1.msra.mxu0 0.0
        %3156 = vmatprep.subr.mxu0 0.0
        %3157 = vmatpush1.msra.mxu0 0.0
        %3158 = vmatprep.subr.mxu0 0.0
        %3159 = vmatpush1.msra.mxu0 0.0
        %3160 = vmatprep.subr.mxu0 0.0
        %3161 = vmatpush1.msra.mxu0 0.0
        %3162 = vmatprep.mubr.f32.mxu0 0.0
        %3163 = vmatmul.mubr.f32.gmra.mrb[0].mxu0 %v3081
        %v3164 = vpop.f32.mrb[0].mxu0
        %v3165 = vadd.f32 0.0, %v3164
        %v3166 = vpop.f32.mrb[0].mxu0
        %3167 = vdwg.mxu0
        %v3168 = vadd.f32 %v1600, %v3165
        %v3169 = vld [vmem:[#allocation5 + $0x1] sm:$0xf]
        %v3170 = vld [vmem:[%s1604] sm:$0xff]
        %v3171 = vld [vmem:[%s1604 + $0x8] sm:$0xff]
        %v3172 = vld [vmem:[%s1604 + $0x10] sm:$0xff]
        %v3173 = vld [vmem:[%s1604 + $0x18] sm:$0xff]
        %v3174 = vld [vmem:[%s1604 + $0x20] sm:$0xff]
        %v3175 = vld [vmem:[%s1604 + $0x28] sm:$0xff]
        %v3176 = vld [vmem:[%s1604 + $0x30] sm:$0xff]
        %v3177 = vld [vmem:[%s1604 + $0x38] sm:$0xff]
        %v3178 = vld [vmem:[%s1604 + $0x40] sm:$0xff]
        %v3179 = vld [vmem:[%s1604 + $0x48] sm:$0xff]
        %v3180 = vld [vmem:[%s1604 + $0x50] sm:$0xff]
        %v3181 = vld [vmem:[%s1604 + $0x58] sm:$0xff]
        %v3182 = vld [vmem:[%s1604 + $0x60] sm:$0xff]
        %v3183 = vld [vmem:[%s1604 + $0x68] sm:$0xff]
        %v3184 = vld [vmem:[%s1604 + $0x70] sm:$0xff]
        %v3185 = vld [vmem:[%s1604 + $0x78] sm:$0xff]
        %3186 = vmatprep.subr.mxu0 0.0
        %3187 = vmatpush1.msra.mxu0 %v3170
        %3188 = vmatprep.subr.mxu0 0.0
        %3189 = vmatpush1.msra.mxu0 %v3171
        %3190 = vmatprep.subr.mxu0 0.0
        %3191 = vmatpush1.msra.mxu0 %v3172
        %3192 = vmatprep.subr.mxu0 0.0
        %3193 = vmatpush1.msra.mxu0 %v3173
        %3194 = vmatprep.subr.mxu0 0.0
        %3195 = vmatpush1.msra.mxu0 %v3174
        %3196 = vmatprep.subr.mxu0 0.0
        %3197 = vmatpush1.msra.mxu0 %v3175
        %3198 = vmatprep.subr.mxu0 0.0
        %3199 = vmatpush1.msra.mxu0 %v3176
        %3200 = vmatprep.subr.mxu0 0.0
        %3201 = vmatpush1.msra.mxu0 %v3177
        %3202 = vmatprep.subr.mxu0 0.0
        %3203 = vmatpush1.msra.mxu0 %v3178
        %3204 = vmatprep.subr.mxu0 0.0
        %3205 = vmatpush1.msra.mxu0 %v3179
        %3206 = vmatprep.subr.mxu0 0.0
        %3207 = vmatpush1.msra.mxu0 %v3180
        %3208 = vmatprep.subr.mxu0 0.0
        %3209 = vmatpush1.msra.mxu0 %v3181
        %3210 = vmatprep.subr.mxu0 0.0
        %3211 = vmatpush1.msra.mxu0 %v3182
        %3212 = vmatprep.subr.mxu0 0.0
        %3213 = vmatpush1.msra.mxu0 %v3183
        %3214 = vmatprep.subr.mxu0 0.0
        %3215 = vmatpush1.msra.mxu0 %v3184
        %3216 = vmatprep.subr.mxu0 0.0
        %3217 = vmatpush1.msra.mxu0 %v3185
        %3218 = vmatprep.subr.mxu0 0.0
        %3219 = vmatpush1.msra.mxu0 0.0
        %3220 = vmatprep.subr.mxu0 0.0
        %3221 = vmatpush1.msra.mxu0 0.0
        %3222 = vmatprep.subr.mxu0 0.0
        %3223 = vmatpush1.msra.mxu0 0.0
        %3224 = vmatprep.subr.mxu0 0.0
        %3225 = vmatpush1.msra.mxu0 0.0
        %3226 = vmatprep.subr.mxu0 0.0
        %3227 = vmatpush1.msra.mxu0 0.0
        %3228 = vmatprep.subr.mxu0 0.0
        %3229 = vmatpush1.msra.mxu0 0.0
        %3230 = vmatprep.subr.mxu0 0.0
        %3231 = vmatpush1.msra.mxu0 0.0
        %3232 = vmatprep.subr.mxu0 0.0
        %3233 = vmatpush1.msra.mxu0 0.0
        %3234 = vmatprep.subr.mxu0 0.0
        %3235 = vmatpush1.msra.mxu0 0.0
        %3236 = vmatprep.subr.mxu0 0.0
        %3237 = vmatpush1.msra.mxu0 0.0
        %3238 = vmatprep.subr.mxu0 0.0
        %3239 = vmatpush1.msra.mxu0 0.0
        %3240 = vmatprep.subr.mxu0 0.0
        %3241 = vmatpush1.msra.mxu0 0.0
        %3242 = vmatprep.subr.mxu0 0.0
        %3243 = vmatpush1.msra.mxu0 0.0
        %3244 = vmatprep.subr.mxu0 0.0
        %3245 = vmatpush1.msra.mxu0 0.0
        %3246 = vmatprep.subr.mxu0 0.0
        %3247 = vmatpush1.msra.mxu0 0.0
        %3248 = vmatprep.subr.mxu0 0.0
        %3249 = vmatpush1.msra.mxu0 0.0
        %3250 = vmatprep.mubr.f32.mxu0 0.0
        %3251 = vmatmul.mubr.f32.gmra.mrb[0].mxu0 %v3169
        %v3252 = vpop.f32.mrb[0].mxu0
        %v3253 = vadd.f32 0.0, %v3252
        %v3254 = vpop.f32.mrb[0].mxu0
        %3255 = vdwg.mxu0
        %v3256 = vadd.f32 %v3168, %v3253
        %v3257 = vld [vmem:[#allocation5 + $0x2] sm:$0xf]
        %v3258 = vld [vmem:[%s1693] sm:$0xff]
        %v3259 = vld [vmem:[%s1693 + $0x8] sm:$0xff]
        %v3260 = vld [vmem:[%s1693 + $0x10] sm:$0xff]
        %v3261 = vld [vmem:[%s1693 + $0x18] sm:$0xff]
        %v3262 = vld [vmem:[%s1693 + $0x20] sm:$0xff]
        %v3263 = vld [vmem:[%s1693 + $0x28] sm:$0xff]
        %v3264 = vld [vmem:[%s1693 + $0x30] sm:$0xff]
        %v3265 = vld [vmem:[%s1693 + $0x38] sm:$0xff]
        %v3266 = vld [vmem:[%s1693 + $0x40] sm:$0xff]
        %v3267 = vld [vmem:[%s1693 + $0x48] sm:$0xff]
        %v3268 = vld [vmem:[%s1693 + $0x50] sm:$0xff]
        %v3269 = vld [vmem:[%s1693 + $0x58] sm:$0xff]
        %v3270 = vld [vmem:[%s1693 + $0x60] sm:$0xff]
        %v3271 = vld [vmem:[%s1693 + $0x68] sm:$0xff]
        %v3272 = vld [vmem:[%s1693 + $0x70] sm:$0xff]
        %v3273 = vld [vmem:[%s1693 + $0x78] sm:$0xff]
        %3274 = vmatprep.subr.mxu0 0.0
        %3275 = vmatpush1.msra.mxu0 %v3258
        %3276 = vmatprep.subr.mxu0 0.0
        %3277 = vmatpush1.msra.mxu0 %v3259
        %3278 = vmatprep.subr.mxu0 0.0
        %3279 = vmatpush1.msra.mxu0 %v3260
        %3280 = vmatprep.subr.mxu0 0.0
        %3281 = vmatpush1.msra.mxu0 %v3261
        %3282 = vmatprep.subr.mxu0 0.0
        %3283 = vmatpush1.msra.mxu0 %v3262
        %3284 = vmatprep.subr.mxu0 0.0
        %3285 = vmatpush1.msra.mxu0 %v3263
        %3286 = vmatprep.subr.mxu0 0.0
        %3287 = vmatpush1.msra.mxu0 %v3264
        %3288 = vmatprep.subr.mxu0 0.0
        %3289 = vmatpush1.msra.mxu0 %v3265
        %3290 = vmatprep.subr.mxu0 0.0
        %3291 = vmatpush1.msra.mxu0 %v3266
        %3292 = vmatprep.subr.mxu0 0.0
        %3293 = vmatpush1.msra.mxu0 %v3267
        %3294 = vmatprep.subr.mxu0 0.0
        %3295 = vmatpush1.msra.mxu0 %v3268
        %3296 = vmatprep.subr.mxu0 0.0
        %3297 = vmatpush1.msra.mxu0 %v3269
        %3298 = vmatprep.subr.mxu0 0.0
        %3299 = vmatpush1.msra.mxu0 %v3270
        %3300 = vmatprep.subr.mxu0 0.0
        %3301 = vmatpush1.msra.mxu0 %v3271
        %3302 = vmatprep.subr.mxu0 0.0
        %3303 = vmatpush1.msra.mxu0 %v3272
        %3304 = vmatprep.subr.mxu0 0.0
        %3305 = vmatpush1.msra.mxu0 %v3273
        %3306 = vmatprep.subr.mxu0 0.0
        %3307 = vmatpush1.msra.mxu0 0.0
        %3308 = vmatprep.subr.mxu0 0.0
        %3309 = vmatpush1.msra.mxu0 0.0
        %3310 = vmatprep.subr.mxu0 0.0
        %3311 = vmatpush1.msra.mxu0 0.0
        %3312 = vmatprep.subr.mxu0 0.0
        %3313 = vmatpush1.msra.mxu0 0.0
        %3314 = vmatprep.subr.mxu0 0.0
        %3315 = vmatpush1.msra.mxu0 0.0
        %3316 = vmatprep.subr.mxu0 0.0
        %3317 = vmatpush1.msra.mxu0 0.0
        %3318 = vmatprep.subr.mxu0 0.0
        %3319 = vmatpush1.msra.mxu0 0.0
        %3320 = vmatprep.subr.mxu0 0.0
        %3321 = vmatpush1.msra.mxu0 0.0
        %3322 = vmatprep.subr.mxu0 0.0
        %3323 = vmatpush1.msra.mxu0 0.0
        %3324 = vmatprep.subr.mxu0 0.0
        %3325 = vmatpush1.msra.mxu0 0.0
        %3326 = vmatprep.subr.mxu0 0.0
        %3327 = vmatpush1.msra.mxu0 0.0
        %3328 = vmatprep.subr.mxu0 0.0
        %3329 = vmatpush1.msra.mxu0 0.0
        %3330 = vmatprep.subr.mxu0 0.0
        %3331 = vmatpush1.msra.mxu0 0.0
        %3332 = vmatprep.subr.mxu0 0.0
        %3333 = vmatpush1.msra.mxu0 0.0
        %3334 = vmatprep.subr.mxu0 0.0
        %3335 = vmatpush1.msra.mxu0 0.0
        %3336 = vmatprep.subr.mxu0 0.0
        %3337 = vmatpush1.msra.mxu0 0.0
        %3338 = vmatprep.mubr.f32.mxu0 0.0
        %3339 = vmatmul.mubr.f32.gmra.mrb[0].mxu0 %v3257
        %v3340 = vpop.f32.mrb[0].mxu0
        %v3341 = vadd.f32 0.0, %v3340
        %v3342 = vpop.f32.mrb[0].mxu0
        %3343 = vdwg.mxu0
        %v3344 = vadd.f32 %v3256, %v3341
        %v3345 = vld [vmem:[#allocation5 + $0x3] sm:$0xf]
        %v3346 = vld [vmem:[%s1782] sm:$0xff]
        %v3347 = vld [vmem:[%s1782 + $0x8] sm:$0xff]
        %v3348 = vld [vmem:[%s1782 + $0x10] sm:$0xff]
        %v3349 = vld [vmem:[%s1782 + $0x18] sm:$0xff]
        %v3350 = vld [vmem:[%s1782 + $0x20] sm:$0xff]
        %v3351 = vld [vmem:[%s1782 + $0x28] sm:$0xff]
        %v3352 = vld [vmem:[%s1782 + $0x30] sm:$0xff]
        %v3353 = vld [vmem:[%s1782 + $0x38] sm:$0xff]
        %v3354 = vld [vmem:[%s1782 + $0x40] sm:$0xff]
        %v3355 = vld [vmem:[%s1782 + $0x48] sm:$0xff]
        %v3356 = vld [vmem:[%s1782 + $0x50] sm:$0xff]
        %v3357 = vld [vmem:[%s1782 + $0x58] sm:$0xff]
        %v3358 = vld [vmem:[%s1782 + $0x60] sm:$0xff]
        %v3359 = vld [vmem:[%s1782 + $0x68] sm:$0xff]
        %v3360 = vld [vmem:[%s1782 + $0x70] sm:$0xff]
        %v3361 = vld [vmem:[%s1782 + $0x78] sm:$0xff]
        %3362 = vmatprep.subr.mxu0 0.0
        %3363 = vmatpush1.msra.mxu0 %v3346
        %3364 = vmatprep.subr.mxu0 0.0
        %3365 = vmatpush1.msra.mxu0 %v3347
        %3366 = vmatprep.subr.mxu0 0.0
        %3367 = vmatpush1.msra.mxu0 %v3348
        %3368 = vmatprep.subr.mxu0 0.0
        %3369 = vmatpush1.msra.mxu0 %v3349
        %3370 = vmatprep.subr.mxu0 0.0
        %3371 = vmatpush1.msra.mxu0 %v3350
        %3372 = vmatprep.subr.mxu0 0.0
        %3373 = vmatpush1.msra.mxu0 %v3351
        %3374 = vmatprep.subr.mxu0 0.0
        %3375 = vmatpush1.msra.mxu0 %v3352
        %3376 = vmatprep.subr.mxu0 0.0
        %3377 = vmatpush1.msra.mxu0 %v3353
        %3378 = vmatprep.subr.mxu0 0.0
        %3379 = vmatpush1.msra.mxu0 %v3354
        %3380 = vmatprep.subr.mxu0 0.0
        %3381 = vmatpush1.msra.mxu0 %v3355
        %3382 = vmatprep.subr.mxu0 0.0
        %3383 = vmatpush1.msra.mxu0 %v3356
        %3384 = vmatprep.subr.mxu0 0.0
        %3385 = vmatpush1.msra.mxu0 %v3357
        %3386 = vmatprep.subr.mxu0 0.0
        %3387 = vmatpush1.msra.mxu0 %v3358
        %3388 = vmatprep.subr.mxu0 0.0
        %3389 = vmatpush1.msra.mxu0 %v3359
        %3390 = vmatprep.subr.mxu0 0.0
        %3391 = vmatpush1.msra.mxu0 %v3360
        %3392 = vmatprep.subr.mxu0 0.0
        %3393 = vmatpush1.msra.mxu0 %v3361
        %3394 = vmatprep.subr.mxu0 0.0
        %3395 = vmatpush1.msra.mxu0 0.0
        %3396 = vmatprep.subr.mxu0 0.0
        %3397 = vmatpush1.msra.mxu0 0.0
        %3398 = vmatprep.subr.mxu0 0.0
        %3399 = vmatpush1.msra.mxu0 0.0
        %3400 = vmatprep.subr.mxu0 0.0
        %3401 = vmatpush1.msra.mxu0 0.0
        %3402 = vmatprep.subr.mxu0 0.0
        %3403 = vmatpush1.msra.mxu0 0.0
        %3404 = vmatprep.subr.mxu0 0.0
        %3405 = vmatpush1.msra.mxu0 0.0
        %3406 = vmatprep.subr.mxu0 0.0
        %3407 = vmatpush1.msra.mxu0 0.0
        %3408 = vmatprep.subr.mxu0 0.0
        %3409 = vmatpush1.msra.mxu0 0.0
        %3410 = vmatprep.subr.mxu0 0.0
        %3411 = vmatpush1.msra.mxu0 0.0
        %3412 = vmatprep.subr.mxu0 0.0
        %3413 = vmatpush1.msra.mxu0 0.0
        %3414 = vmatprep.subr.mxu0 0.0
        %3415 = vmatpush1.msra.mxu0 0.0
        %3416 = vmatprep.subr.mxu0 0.0
        %3417 = vmatpush1.msra.mxu0 0.0
        %3418 = vmatprep.subr.mxu0 0.0
        %3419 = vmatpush1.msra.mxu0 0.0
        %3420 = vmatprep.subr.mxu0 0.0
        %3421 = vmatpush1.msra.mxu0 0.0
        %3422 = vmatprep.subr.mxu0 0.0
        %3423 = vmatpush1.msra.mxu0 0.0
        %3424 = vmatprep.subr.mxu0 0.0
        %3425 = vmatpush1.msra.mxu0 0.0
        %3426 = vmatprep.mubr.f32.mxu0 0.0
        %3427 = vmatmul.mubr.f32.gmra.mrb[0].mxu0 %v3345
        %v3428 = vpop.f32.mrb[0].mxu0
        %v3429 = vadd.f32 0.0, %v3428
        %v3430 = vpop.f32.mrb[0].mxu0
        %3431 = vdwg.mxu0
        %v3432 = vadd.f32 %v3344, %v3429
        %v3433 = vld [vmem:[#allocation5 + $0x4] sm:$0xf]
        %v3434 = vld [vmem:[%s1871] sm:$0xff]
        %v3435 = vld [vmem:[%s1871 + $0x8] sm:$0xff]
        %v3436 = vld [vmem:[%s1871 + $0x10] sm:$0xff]
        %v3437 = vld [vmem:[%s1871 + $0x18] sm:$0xff]
        %v3438 = vld [vmem:[%s1871 + $0x20] sm:$0xff]
        %v3439 = vld [vmem:[%s1871 + $0x28] sm:$0xff]
        %v3440 = vld [vmem:[%s1871 + $0x30] sm:$0xff]
        %v3441 = vld [vmem:[%s1871 + $0x38] sm:$0xff]
        %v3442 = vld [vmem:[%s1871 + $0x40] sm:$0xff]
        %v3443 = vld [vmem:[%s1871 + $0x48] sm:$0xff]
        %v3444 = vld [vmem:[%s1871 + $0x50] sm:$0xff]
        %v3445 = vld [vmem:[%s1871 + $0x58] sm:$0xff]
        %v3446 = vld [vmem:[%s1871 + $0x60] sm:$0xff]
        %v3447 = vld [vmem:[%s1871 + $0x68] sm:$0xff]
        %v3448 = vld [vmem:[%s1871 + $0x70] sm:$0xff]
        %v3449 = vld [vmem:[%s1871 + $0x78] sm:$0xff]
        %3450 = vmatprep.subr.mxu0 0.0
        %3451 = vmatpush1.msra.mxu0 %v3434
        %3452 = vmatprep.subr.mxu0 0.0
        %3453 = vmatpush1.msra.mxu0 %v3435
        %3454 = vmatprep.subr.mxu0 0.0
        %3455 = vmatpush1.msra.mxu0 %v3436
        %3456 = vmatprep.subr.mxu0 0.0
        %3457 = vmatpush1.msra.mxu0 %v3437
        %3458 = vmatprep.subr.mxu0 0.0
        %3459 = vmatpush1.msra.mxu0 %v3438
        %3460 = vmatprep.subr.mxu0 0.0
        %3461 = vmatpush1.msra.mxu0 %v3439
        %3462 = vmatprep.subr.mxu0 0.0
        %3463 = vmatpush1.msra.mxu0 %v3440
        %3464 = vmatprep.subr.mxu0 0.0
        %3465 = vmatpush1.msra.mxu0 %v3441
        %3466 = vmatprep.subr.mxu0 0.0
        %3467 = vmatpush1.msra.mxu0 %v3442
        %3468 = vmatprep.subr.mxu0 0.0
        %3469 = vmatpush1.msra.mxu0 %v3443
        %3470 = vmatprep.subr.mxu0 0.0
        %3471 = vmatpush1.msra.mxu0 %v3444
        %3472 = vmatprep.subr.mxu0 0.0
        %3473 = vmatpush1.msra.mxu0 %v3445
        %3474 = vmatprep.subr.mxu0 0.0
        %3475 = vmatpush1.msra.mxu0 %v3446
        %3476 = vmatprep.subr.mxu0 0.0
        %3477 = vmatpush1.msra.mxu0 %v3447
        %3478 = vmatprep.subr.mxu0 0.0
        %3479 = vmatpush1.msra.mxu0 %v3448
        %3480 = vmatprep.subr.mxu0 0.0
        %3481 = vmatpush1.msra.mxu0 %v3449
        %3482 = vmatprep.subr.mxu0 0.0
        %3483 = vmatpush1.msra.mxu0 0.0
        %3484 = vmatprep.subr.mxu0 0.0
        %3485 = vmatpush1.msra.mxu0 0.0
        %3486 = vmatprep.subr.mxu0 0.0
        %3487 = vmatpush1.msra.mxu0 0.0
        %3488 = vmatprep.subr.mxu0 0.0
        %3489 = vmatpush1.msra.mxu0 0.0
        %3490 = vmatprep.subr.mxu0 0.0
        %3491 = vmatpush1.msra.mxu0 0.0
        %3492 = vmatprep.subr.mxu0 0.0
        %3493 = vmatpush1.msra.mxu0 0.0
        %3494 = vmatprep.subr.mxu0 0.0
        %3495 = vmatpush1.msra.mxu0 0.0
        %3496 = vmatprep.subr.mxu0 0.0
        %3497 = vmatpush1.msra.mxu0 0.0
        %3498 = vmatprep.subr.mxu0 0.0
        %3499 = vmatpush1.msra.mxu0 0.0
        %3500 = vmatprep.subr.mxu0 0.0
        %3501 = vmatpush1.msra.mxu0 0.0
        %3502 = vmatprep.subr.mxu0 0.0
        %3503 = vmatpush1.msra.mxu0 0.0
        %3504 = vmatprep.subr.mxu0 0.0
        %3505 = vmatpush1.msra.mxu0 0.0
        %3506 = vmatprep.subr.mxu0 0.0
        %3507 = vmatpush1.msra.mxu0 0.0
        %3508 = vmatprep.subr.mxu0 0.0
        %3509 = vmatpush1.msra.mxu0 0.0
        %3510 = vmatprep.subr.mxu0 0.0
        %3511 = vmatpush1.msra.mxu0 0.0
        %3512 = vmatprep.subr.mxu0 0.0
        %3513 = vmatpush1.msra.mxu0 0.0
        %3514 = vmatprep.mubr.f32.mxu0 0.0
        %3515 = vmatmul.mubr.f32.gmra.mrb[0].mxu0 %v3433
        %v3516 = vpop.f32.mrb[0].mxu0
        %v3517 = vadd.f32 0.0, %v3516
        %v3518 = vpop.f32.mrb[0].mxu0
        %3519 = vdwg.mxu0
        %v3520 = vadd.f32 %v3432, %v3517
        %3521 = vst [vmem:[#allocation6] sm:$0xf] %v3520
        %v3522 = vld [vmem:[#allocation6] ss:$2 sm:$0x3]
        %v3523 = vld [vmem:[%s1961] ss:$2 sm:$0x3]
        %v3524 = vmax.f32 %v3522, %v3523
        %vm3525 = vcmp.gt.f32.partialorder %v3524, 0.0
        %v3526 = vmul.f32 %v3524, 1.442695
        %v3527 = vpow.pop %v3526
        %v3528 = vsub.f32 %v3527, 1.0
        %v3529 = vsel %vm3525, %v3524, %v3528
        %3530 = vst [vmem:[#allocation7 + $0x1] sm:$0x1] %v3529
        %v3533 = vunpack.c.l.s4 1983009808
        %v3534 = vunpack.c.0.s8 %v3533
        %v3535 = vlaneseq
        %v3536 = vshrl.u32 %v3535, 7
        %v3537 = vsub.s32 %v3534, %v3536
        %v3538 = vrot.slane %v3529, %v3537
        %v3539 = vrot.slane %v3538, 7
        %v3540 = vrot.slane %v3539, 2
        %3542 = vst [vmem:[#allocation7 + $0x3] sm:$0x1] %v3540
        %v3543 = vld [vmem:[#allocation7] sm:$0xf]
        %v3544 = vld [vmem:[#allocation13] sm:$0xff]
        %v3545 = vld [vmem:[#allocation13 + $0x8] sm:$0xff]
        %v3546 = vld [vmem:[#allocation13 + $0x10] sm:$0xff]
        %v3547 = vld [vmem:[#allocation13 + $0x18] sm:$0xff]
        %v3548 = vld [vmem:[#allocation13 + $0x20] sm:$0xff]
        %v3549 = vld [vmem:[#allocation13 + $0x28] sm:$0xff]
        %v3550 = vld [vmem:[#allocation13 + $0x30] sm:$0xff]
        %v3551 = vld [vmem:[#allocation13 + $0x38] sm:$0xff]
        %v3552 = vld [vmem:[#allocation13 + $0x40] sm:$0xff]
        %v3553 = vld [vmem:[#allocation13 + $0x48] sm:$0xff]
        %v3554 = vld [vmem:[#allocation13 + $0x50] sm:$0xff]
        %v3555 = vld [vmem:[#allocation13 + $0x58] sm:$0xff]
        %v3556 = vld [vmem:[#allocation13 + $0x60] sm:$0xff]
        %v3557 = vld [vmem:[#allocation13 + $0x68] sm:$0xff]
        %v3558 = vld [vmem:[#allocation13 + $0x70] sm:$0xff]
        %v3559 = vld [vmem:[#allocation13 + $0x78] sm:$0xff]
        %v3560 = vld [vmem:[#allocation13 + $0x80] sm:$0xff]
        %v3561 = vld [vmem:[#allocation13 + $0x88] sm:$0xff]
        %v3562 = vld [vmem:[#allocation13 + $0x90] sm:$0xff]
        %v3563 = vld [vmem:[#allocation13 + $0x98] sm:$0xff]
        %v3564 = vld [vmem:[#allocation13 + $0xa0] sm:$0xff]
        %v3565 = vld [vmem:[#allocation13 + $0xa8] sm:$0xff]
        %v3566 = vld [vmem:[#allocation13 + $0xb0] sm:$0xff]
        %v3567 = vld [vmem:[#allocation13 + $0xb8] sm:$0xff]
        %v3568 = vld [vmem:[#allocation13 + $0xc0] sm:$0xff]
        %v3569 = vld [vmem:[#allocation13 + $0xc8] sm:$0xff]
        %v3570 = vld [vmem:[#allocation13 + $0xd0] sm:$0xff]
        %v3571 = vld [vmem:[#allocation13 + $0xd8] sm:$0xff]
        %v3572 = vld [vmem:[#allocation13 + $0xe0] sm:$0xff]
        %v3573 = vld [vmem:[#allocation13 + $0xe8] sm:$0xff]
        %v3574 = vld [vmem:[#allocation13 + $0xf0] sm:$0xff]
        %v3575 = vld [vmem:[#allocation13 + $0xf8] sm:$0xff]
        %v3576 = vld [vmem:[%s8] sm:$0x1]
        %v3578 = vlaneseq
        %v3579 = vshrl.u32 %v3578, 7
        %v3580 = vsub.s32 0, %v3579
        %v3581 = vrot.slane %v3576, %v3580
        %v3585 = vunpack.c.l.s4 1983009808
        %v3586 = vunpack.c.0.s8 %v3585
        %v3587 = vlaneseq
        %v3588 = vshrl.u32 %v3587, 7
        %v3589 = vsub.s32 %v3586, %v3588
        %v3590 = vrot.slane %v3543, %v3589
        %v3591 = vcombine.high %v3590, %v3590
        %3594 = vmatprep.subr.mxu0 0.0
        %3595 = vmatpush1.msra.mxu0 %v3544
        %3596 = vmatprep.subr.mxu0 0.0
        %3597 = vmatpush1.msra.mxu0 %v3545
        %3598 = vmatprep.subr.mxu0 0.0
        %3599 = vmatpush1.msra.mxu0 %v3546
        %3600 = vmatprep.subr.mxu0 0.0
        %3601 = vmatpush1.msra.mxu0 %v3547
        %3602 = vmatprep.subr.mxu0 0.0
        %3603 = vmatpush1.msra.mxu0 %v3548
        %3604 = vmatprep.subr.mxu0 0.0
        %3605 = vmatpush1.msra.mxu0 %v3549
        %3606 = vmatprep.subr.mxu0 0.0
        %3607 = vmatpush1.msra.mxu0 %v3550
        %3608 = vmatprep.subr.mxu0 0.0
        %3609 = vmatpush1.msra.mxu0 %v3551
        %3610 = vmatprep.subr.mxu0 0.0
        %3611 = vmatpush1.msra.mxu0 %v3552
        %3612 = vmatprep.subr.mxu0 0.0
        %3613 = vmatpush1.msra.mxu0 %v3553
        %3614 = vmatprep.subr.mxu0 0.0
        %3615 = vmatpush1.msra.mxu0 %v3554
        %3616 = vmatprep.subr.mxu0 0.0
        %3617 = vmatpush1.msra.mxu0 %v3555
        %3618 = vmatprep.subr.mxu0 0.0
        %3619 = vmatpush1.msra.mxu0 %v3556
        %3620 = vmatprep.subr.mxu0 0.0
        %3621 = vmatpush1.msra.mxu0 %v3557
        %3622 = vmatprep.subr.mxu0 0.0
        %3623 = vmatpush1.msra.mxu0 %v3558
        %3624 = vmatprep.subr.mxu0 0.0
        %3625 = vmatpush1.msra.mxu0 %v3559
        %3626 = vmatprep.subr.mxu0 0.0
        %3627 = vmatpush1.msra.mxu0 %v3560
        %3628 = vmatprep.subr.mxu0 0.0
        %3629 = vmatpush1.msra.mxu0 %v3561
        %3630 = vmatprep.subr.mxu0 0.0
        %3631 = vmatpush1.msra.mxu0 %v3562
        %3632 = vmatprep.subr.mxu0 0.0
        %3633 = vmatpush1.msra.mxu0 %v3563
        %3634 = vmatprep.subr.mxu0 0.0
        %3635 = vmatpush1.msra.mxu0 %v3564
        %3636 = vmatprep.subr.mxu0 0.0
        %3637 = vmatpush1.msra.mxu0 %v3565
        %3638 = vmatprep.subr.mxu0 0.0
        %3639 = vmatpush1.msra.mxu0 %v3566
        %3640 = vmatprep.subr.mxu0 0.0
        %3641 = vmatpush1.msra.mxu0 %v3567
        %3642 = vmatprep.subr.mxu0 0.0
        %3643 = vmatpush1.msra.mxu0 %v3568
        %3644 = vmatprep.subr.mxu0 0.0
        %3645 = vmatpush1.msra.mxu0 %v3569
        %3646 = vmatprep.subr.mxu0 0.0
        %3647 = vmatpush1.msra.mxu0 %v3570
        %3648 = vmatprep.subr.mxu0 0.0
        %3649 = vmatpush1.msra.mxu0 %v3571
        %3650 = vmatprep.subr.mxu0 0.0
        %3651 = vmatpush1.msra.mxu0 %v3572
        %3652 = vmatprep.subr.mxu0 0.0
        %3653 = vmatpush1.msra.mxu0 %v3573
        %3654 = vmatprep.subr.mxu0 0.0
        %3655 = vmatpush1.msra.mxu0 %v3574
        %3656 = vmatprep.subr.mxu0 0.0
        %3657 = vmatpush1.msra.mxu0 %v3575
        %3658 = vmatprep.mubr.f32.mxu0 %v3591
        %3659 = vmatmul.mubr.f32.gmra.mrb[0].mxu0 %v3590
        %v3660 = vpop.f32.mrb[0].mxu0
        %v3661 = vadd.f32 %v3581, %v3660
        %v3662 = vpop.f32.mrb[0].mxu0
        %3663 = vdwg.mxu0
        %v3666 = vunpack.c.l.s4 1966171168
        %v3667 = vunpack.c.0.s8 %v3666
        %v3668 = vlaneseq
        %v3669 = vshrl.u32 %v3668, 7
        %v3670 = vsub.s32 %v3667, %v3669
        %v3671 = vrot.slane %v3661, %v3670
        %v3672 = vcombine.high %v3671, %v3671
        %v3674 = vunpack.c.l.s4 1966171168
        %v3675 = vunpack.c.0.s8 %v3674
        %v3676 = vlaneseq
        %v3677 = vshrl.u32 %v3676, 7
        %v3678 = vsub.s32 %v3675, %v3677
        %v3679 = vrot.slane %v3671, %v3678
        %v3681 = vunpack.c.l.s4 1966171168
        %v3682 = vunpack.c.0.s8 %v3681
        %v3683 = vlaneseq
        %v3684 = vshrl.u32 %v3683, 7
        %v3685 = vsub.s32 %v3682, %v3684
        %v3686 = vrot.slane %v3672, %v3685
        %3689 = vst [vmem:[%s372] sm:$0x1] %v3679
        %3690 = vst [vmem:[%s372 + $0x1] sm:$0x1] %v3686
        %s3691 = sand.u32 %s227, 1
        %s3692 = scalar_lea.sflag [#allocation10], %s3691
        %s3693 = sand.u32 %s227, 1
        %s3694 = smul.addr %s3693, 2
        %s3695 = scalar_lea.vmem [#allocation14], %s3694
        // Predicated region
        $region69: #{tpu_custom_call.1} parent=55 // pred_check
          %p3696 = pneg %p237
        $region70: #{tpu_custom_call.1} parent=55 // pred_check_branch
          %3698 = sbr.rel (%p3696) target = $region72
        $region71: #{tpu_custom_call.1} parent=55 // pred_region
          %s3699 = smul.u32 2, %s25
          %s3701 = ssub.s32 32, 32
          %3702 = vsyncadd %s3692, %s3701
          %s3703 = smul.addr %s3699, 16
          %s3704 = scalar_lea.hbm %s9, %s3703
          %s3705 = sshll.u32 %s3695, 4
          %s3706 = int_to_ptr.vmem [resolvable:$true] %s3705
          %3711 = dma.vmem_to_hbm [thread:$0]  %s3706, 32, %s3704, %s3692, 16, 16, 1
        $region72: #{tpu_custom_call.1} parent=55 // pred_fallthru
          _
      $region56: #{tpu_custom_call.1} parent=5 // pred_fallthru
        _
      %p3712 = scmp.le.s32.totalorder 2, %s20
      // Predicated region
      $region73: #{tpu_custom_call.1} parent=5 // pred_check
        %p3713 = pneg %p3712
      $region74: #{tpu_custom_call.1} parent=5 // pred_check_branch
        %3715 = sbr.rel (%p3713) target = $region76
      $region75: #{tpu_custom_call.1} parent=5 // pred_region
        %s3716 = ssub.s32 %s20, 2
        // Predicated region
        $region77: #{tpu_custom_call.1} parent=75 // pred_check
          %p3717 = pneg %p243
        $region78: #{tpu_custom_call.1} parent=75 // pred_check_branch
          %3719 = sbr.rel (%p3717) target = $region80
        $region79: #{tpu_custom_call.1} parent=75 // pred_region
          %s3720 = sand.u32 %s228, 1
          %s3721 = scalar_lea.sflag [#allocation10], %s3720
          %s3722 = sand.u32 %s228, 1
          %s3723 = smul.addr %s3722, 2
          %s3724 = scalar_lea.vmem [#allocation14], %s3723
          %3725 = dma.done %s3721, 32
        $region80: #{tpu_custom_call.1} parent=75 // pred_fallthru
          _
      $region76: #{tpu_custom_call.1} parent=5 // pred_fallthru
        _
    $region6: #{tpu_custom_call.1} parent=1 // loop_footer
      %s24 = sadd.s32 1, %s20
    $region7: #{tpu_custom_call.1} parent=1 // loop_footer_branch
      %19 = sbr.rel target = $region3
    $region8: #{tpu_custom_call.1} parent=1 // loop_exit
      _
    %3726 = vsyncpa [#allocation9], 1
    %s3727 = scalar_lea.sflag [#allocation9], 1
    %3728 = vsyncpa %s3727, 1
    %3729 = vsyncpa [#allocation12], 1
    %3730 = vsyncpa [#allocation10], 1
    %s3731 = scalar_lea.sflag [#allocation10], 1
    %3732 = vsyncpa %s3731, 1

</llo_original>
